<compile_context>
chip_gen: v6e
topology: v6e:2x2x1
jax: 0.10.0
libtpu: 0.0.40
codegen_flags: <defaults>
</compile_context>

<pallas_src>
import functools
import math

import jax
import jax.numpy as jnp
from jax.experimental import pallas as pl
from jax.experimental.pallas import tpu as pltpu


# -----------------------------------------------------------------------------
# Pallas kernel: fused bidirectional LSTM over a short sequence (unrolled).
# -----------------------------------------------------------------------------
def _bilstm_kernel(x_ref, len_ref, wih_ref, whh_ref, b_ref, out_ref,
                   *, T, B, H, downsample):
    """Fused fwd+bwd LSTM with length masking (pack/pad semantics).

    x_ref:   [T*B, D]   time-major input, row index = t*B + b (VMEM)
    len_ref: [B, 1]     int32 valid lengths
    wih_ref: [D, 8H]    input->gate weights, columns = [i f g o]_fwd | [i f g o]_bwd
    whh_ref: [2H, 8H]   block-diagonal hidden->gate weights (fwd | bwd blocks)
    b_ref:   [1, 8H]    combined biases (b_ih + b_hh), fwd | bwd
    out_ref: [T//2, B, 4H] if downsample else [T, B, 2H]
    """
    G = 4 * H
    lens = len_ref[...]                                   # [B, 1] int32

    # ---- hoisted input projection: one MXU matmul for the whole sequence ----
    proj = jnp.dot(x_ref[...], wih_ref[...],
                   preferred_element_type=jnp.float32) + b_ref[...]   # [T*B, 8H]
    whh = whh_ref[...]                                    # [2H, 8H]

    h_f = jnp.zeros((B, H), jnp.float32)
    c_f = jnp.zeros((B, H), jnp.float32)
    h_b = jnp.zeros((B, H), jnp.float32)
    c_b = jnp.zeros((B, H), jnp.float32)
    zero = jnp.zeros((B, H), jnp.float32)

    y_f = [None] * T
    y_b = [None] * T

    # Fully unrolled: fwd processes t, bwd processes T-1-t in the same step.
    for i in range(T):
        t_f = i
        t_b = T - 1 - i

        # Single N=8H recurrent matmul for both directions (block-diag W_hh).
        h_cat = jnp.concatenate([h_f, h_b], axis=-1)                      # [B, 2H]
        gh = jnp.dot(h_cat, whh, preferred_element_type=jnp.float32)      # [B, 8H]

        gf = proj[t_f * B:(t_f + 1) * B, 0:G] + gh[:, 0:G]                # [B, 4H]
        gb = proj[t_b * B:(t_b + 1) * B, G:2 * G] + gh[:, G:2 * G]        # [B, 4H]

        sf = jax.nn.sigmoid(gf)
        sb = jax.nn.sigmoid(gb)
        gf_t = jnp.tanh(gf[:, 2 * H:3 * H])
        gb_t = jnp.tanh(gb[:, 2 * H:3 * H])

        c_f_new = sf[:, H:2 * H] * c_f + sf[:, 0:H] * gf_t
        h_f_new = sf[:, 3 * H:4 * H] * jnp.tanh(c_f_new)
        c_b_new = sb[:, H:2 * H] * c_b + sb[:, 0:H] * gb_t
        h_b_new = sb[:, 3 * H:4 * H] * jnp.tanh(c_b_new)

        # pack_padded_sequence semantics: freeze state / zero output past len.
        v_f = t_f < lens
        v_b = t_b < lens
        c_f = jnp.where(v_f, c_f_new, c_f)
        h_f = jnp.where(v_f, h_f_new, h_f)
        c_b = jnp.where(v_b, c_b_new, c_b)
        h_b = jnp.where(v_b, h_b_new, h_b)
        y_f[t_f] = jnp.where(v_f, h_f_new, zero)
        y_b[t_b] = jnp.where(v_b, h_b_new, zero)

    if downsample:
        # Fused pBLSTM downsample: fold 2 frames into one lane-dense 4H row.
        Td = T // 2
        rows = [
            jnp.concatenate(
                [y_f[2 * tau], y_b[2 * tau], y_f[2 * tau + 1], y_b[2 * tau + 1]],
                axis=-1)
            for tau in range(Td)
        ]
        out_ref[...] = jnp.stack(rows, axis=0)            # [Td, B, 4H]
    else:
        rows = [jnp.concatenate([y_f[t], y_b[t]], axis=-1) for t in range(T)]
        out_ref[...] = jnp.stack(rows, axis=0)            # [T, B, 2H]


def bilstm_layer(x_tm, lengths, params, *, downsample):
    """x_tm: [T, B, D] time-major f32; lengths: per-sample valid lengths.

    Returns [T//2, B, 4H] (downsample=True) or [T, B, 2H]."""
    T, B, D = x_tm.shape
    wih, whh, bias = params
    H = whh.shape[0] // 2
    lens = jnp.asarray(lengths, jnp.int32).reshape(B, 1)
    x_flat = x_tm.reshape(T * B, D)
    if downsample:
        out_shape = jax.ShapeDtypeStruct((T // 2, B, 4 * H), jnp.float32)
    else:
        out_shape = jax.ShapeDtypeStruct((T, B, 2 * H), jnp.float32)
    kernel = functools.partial(_bilstm_kernel, T=T, B=B, H=H,
                               downsample=downsample)
    return pl.pallas_call(
        kernel,
        out_shape=out_shape,
        in_specs=[pl.BlockSpec(memory_space=pltpu.MemorySpace.VMEM)] * 5,
        out_specs=pl.BlockSpec(memory_space=pltpu.MemorySpace.VMEM),
    )(x_flat, lens, wih, whh, bias)


# -----------------------------------------------------------------------------
# Listener forward (layers chain time-major; downsample fused in the kernel).
# -----------------------------------------------------------------------------
def listener_forward(x, state_len, params):
    """x: [B, S, F] batch-first; state_len: python list of valid lengths."""
    x_tm = jnp.transpose(x, (1, 0, 2))            # -> time-major [S, B, F]
    for name in ("blstm_1", "blstm_2", "blstm_3"):
        max_len = max(state_len)
        x_tm = x_tm[:max_len]                     # pad_packed_sequence trim (static)
        x_tm = bilstm_layer(x_tm, state_len, params[name], downsample=True)
        state_len = [int(s / 2) for s in state_len]

    # blstm_4 quirk: nn.LSTM(batch_first=False) applied to a batch-first tensor
    # in the original code, i.e. the original batch axis is treated as time.
    x4 = jnp.transpose(x_tm, (1, 0, 2))           # [B, S/8, 4H]
    t4, b4, _ = x4.shape
    out = bilstm_layer(x4, [t4] * b4, params["blstm_4"], downsample=False)
    return out, state_len


# -----------------------------------------------------------------------------
# Deterministic parameter init (PyTorch nn.LSTM shapes, gate order i,f,g,o),
# repacked into the fused kernel layout.
# -----------------------------------------------------------------------------
def init_bilstm_params(key, in_dim, hidden):
    k = 1.0 / math.sqrt(hidden)
    keys = jax.random.split(key, 8)

    def u(kk, shape):
        return jax.random.uniform(kk, shape, jnp.float32, minval=-k, maxval=k)

    per_dir = []
    for off in (0, 4):                            # fwd, bwd
        w_ih = u(keys[off + 0], (4 * hidden, in_dim))   # PyTorch weight_ih_l0[_reverse]
        w_hh = u(keys[off + 1], (4 * hidden, hidden))   # PyTorch weight_hh_l0[_reverse]
        b_ih = u(keys[off + 2], (4 * hidden,))
        b_hh = u(keys[off + 3], (4 * hidden,))
        per_dir.append((w_ih.T, w_hh.T, b_ih + b_hh))   # [D,4H], [H,4H], [4H]

    (wih_f, whh_f, b_f), (wih_b, whh_b, b_b) = per_dir
    G = 4 * hidden
    wih = jnp.concatenate([wih_f, wih_b], axis=1)       # [D, 8H]
    whh = jnp.zeros((2 * hidden, 2 * G), jnp.float32)   # block-diag [2H, 8H]
    whh = whh.at[:hidden, :G].set(whh_f)
    whh = whh.at[hidden:, G:].set(whh_b)
    bias = jnp.concatenate([b_f, b_b]).reshape(1, 2 * G)  # [1, 8H]
    return (wih, whh, bias)


if __name__ == "__main__":
    state_size = 32
    feature_dim = 32
    batch, seq = 2, 16

    key = jax.random.PRNGKey(0)
    kx, k1, k2, k3, k4 = jax.random.split(key, 5)
    x = jax.random.normal(kx, (batch, seq, feature_dim), dtype=jnp.float32)
    state_len = [16, 12]  # sorted descending (pack_padded_sequence requirement)

    params = {
        "blstm_1": init_bilstm_params(k1, feature_dim, state_size),
        "blstm_2": init_bilstm_params(k2, 4 * state_size, state_size),
        "blstm_3": init_bilstm_params(k3, 4 * state_size, state_size),
        "blstm_4": init_bilstm_params(k4, 4 * state_size, state_size),
    }

    out, out_len = listener_forward(x, state_len, params)
    out = jax.block_until_ready(out)

    assert out.shape == (batch, seq // 8, 2 * state_size), out.shape
    assert out_len == [2, 1], out_len
    assert bool(jnp.all(jnp.isfinite(out)))
    print("KERNEL_OK")
</pallas_src>

<mosaic_0001>
module attributes {stable_mosaic.version = 11 : i64} {
  func.func @_bilstm_kernel(%arg0: memref<32x32xf32, #tpu.memory_space<vmem>>, %arg1: memref<2x1xi32, #tpu.memory_space<vmem>>, %arg2: memref<32x256xf32, #tpu.memory_space<vmem>>, %arg3: memref<64x256xf32, #tpu.memory_space<vmem>>, %arg4: memref<1x256xf32, #tpu.memory_space<vmem>>, %arg5: memref<8x2x128xf32, #tpu.memory_space<vmem>>) attributes {dimension_semantics = [], scalar_prefetch = 0 : i64, scratch_operands = 0 : i64, tpu.core_type = #tpu.core_type<tc>} {
    %c0 = arith.constant 0 : index
    %c0_0 = arith.constant 0 : index
    %0 = vector.load %arg1[%c0, %c0_0] : memref<2x1xi32, #tpu.memory_space<vmem>>, vector<2x1xi32>
    %c0_1 = arith.constant 0 : index
    %c0_2 = arith.constant 0 : index
    %1 = vector.load %arg0[%c0_1, %c0_2] : memref<32x32xf32, #tpu.memory_space<vmem>>, vector<32x32xf32>
    %c0_3 = arith.constant 0 : index
    %c0_4 = arith.constant 0 : index
    %2 = vector.load %arg2[%c0_3, %c0_4] : memref<32x256xf32, #tpu.memory_space<vmem>>, vector<32x256xf32>
    %cst = arith.constant dense<0.000000e+00> : vector<32x256xf32>
    %3 = tpu.matmul %1, %2, %cst {dimension_numbers = #tpu.dot_dimension_numbers<[1], [0], [0], [1], [0, 0, 1, 1], [], []>} : vector<32x32xf32>, vector<32x256xf32>, vector<32x256xf32> -> vector<32x256xf32>
    %c0_5 = arith.constant 0 : index
    %c0_6 = arith.constant 0 : index
    %4 = vector.load %arg4[%c0_5, %c0_6] : memref<1x256xf32, #tpu.memory_space<vmem>>, vector<1x256xf32>
    %5 = vector.broadcast %4 : vector<1x256xf32> to vector<32x256xf32>
    %6 = arith.addf %3, %5 : vector<32x256xf32>
    %c0_7 = arith.constant 0 : index
    %c0_8 = arith.constant 0 : index
    %7 = vector.load %arg3[%c0_7, %c0_8] : memref<64x256xf32, #tpu.memory_space<vmem>>, vector<64x256xf32>
    %cst_9 = arith.constant 0.000000e+00 : f32
    %8 = vector.broadcast %cst_9 : f32 to vector<2x32xf32>
    %cst_10 = arith.constant 0.000000e+00 : f32
    %9 = vector.broadcast %cst_10 : f32 to vector<2x32xf32>
    %cst_11 = arith.constant 0.000000e+00 : f32
    %10 = vector.broadcast %cst_11 : f32 to vector<2x32xf32>
    %cst_12 = arith.constant 0.000000e+00 : f32
    %11 = vector.broadcast %cst_12 : f32 to vector<2x32xf32>
    %cst_13 = arith.constant 0.000000e+00 : f32
    %12 = vector.broadcast %cst_13 : f32 to vector<2x32xf32>
    %13 = tpu.concatenate %8, %10 in 1 : vector<2x32xf32>, vector<2x32xf32> -> vector<2x64xf32>
    %cst_14 = arith.constant dense<0.000000e+00> : vector<2x256xf32>
    %14 = tpu.matmul %13, %7, %cst_14 {dimension_numbers = #tpu.dot_dimension_numbers<[1], [0], [0], [1], [0, 0, 1, 1], [], []>} : vector<2x64xf32>, vector<64x256xf32>, vector<2x256xf32> -> vector<2x256xf32>
    %15 = vector.extract_strided_slice %6 {offsets = [0, 0], sizes = [2, 128], strides = [1, 1]} : vector<32x256xf32> to vector<2x128xf32>
    %16 = vector.extract_strided_slice %14 {offsets = [0, 0], sizes = [2, 128], strides = [1, 1]} : vector<2x256xf32> to vector<2x128xf32>
    %17 = arith.addf %15, %16 : vector<2x128xf32>
    %18 = vector.extract_strided_slice %6 {offsets = [30, 128], sizes = [2, 128], strides = [1, 1]} : vector<32x256xf32> to vector<2x128xf32>
    %19 = vector.extract_strided_slice %14 {offsets = [0, 128], sizes = [2, 128], strides = [1, 1]} : vector<2x256xf32> to vector<2x128xf32>
    %20 = arith.addf %18, %19 : vector<2x128xf32>
    %21 = arith.negf %17 : vector<2x128xf32>
    %22 = math.exp %21 : vector<2x128xf32>
    %cst_15 = arith.constant 1.000000e+00 : f32
    %23 = vector.broadcast %cst_15 : f32 to vector<2x128xf32>
    %24 = arith.addf %23, %22 : vector<2x128xf32>
    %25 = arith.divf %23, %24 : vector<2x128xf32>
    %26 = arith.negf %20 : vector<2x128xf32>
    %27 = math.exp %26 : vector<2x128xf32>
    %cst_16 = arith.constant 1.000000e+00 : f32
    %28 = vector.broadcast %cst_16 : f32 to vector<2x128xf32>
    %29 = arith.addf %28, %27 : vector<2x128xf32>
    %30 = arith.divf %28, %29 : vector<2x128xf32>
    %31 = vector.extract_strided_slice %17 {offsets = [0, 64], sizes = [2, 32], strides = [1, 1]} : vector<2x128xf32> to vector<2x32xf32>
    %32 = math.tanh %31 : vector<2x32xf32>
    %33 = vector.extract_strided_slice %20 {offsets = [0, 64], sizes = [2, 32], strides = [1, 1]} : vector<2x128xf32> to vector<2x32xf32>
    %34 = math.tanh %33 : vector<2x32xf32>
    %35 = vector.extract_strided_slice %25 {offsets = [0, 32], sizes = [2, 32], strides = [1, 1]} : vector<2x128xf32> to vector<2x32xf32>
    %36 = arith.mulf %35, %9 : vector<2x32xf32>
    %37 = vector.extract_strided_slice %25 {offsets = [0, 0], sizes = [2, 32], strides = [1, 1]} : vector<2x128xf32> to vector<2x32xf32>
    %38 = arith.mulf %37, %32 : vector<2x32xf32>
    %39 = arith.addf %36, %38 : vector<2x32xf32>
    %40 = vector.extract_strided_slice %25 {offsets = [0, 96], sizes = [2, 32], strides = [1, 1]} : vector<2x128xf32> to vector<2x32xf32>
    %41 = math.tanh %39 : vector<2x32xf32>
    %42 = arith.mulf %40, %41 : vector<2x32xf32>
    %43 = vector.extract_strided_slice %30 {offsets = [0, 32], sizes = [2, 32], strides = [1, 1]} : vector<2x128xf32> to vector<2x32xf32>
    %44 = arith.mulf %43, %11 : vector<2x32xf32>
    %45 = vector.extract_strided_slice %30 {offsets = [0, 0], sizes = [2, 32], strides = [1, 1]} : vector<2x128xf32> to vector<2x32xf32>
    %46 = arith.mulf %45, %34 : vector<2x32xf32>
    %47 = arith.addf %44, %46 : vector<2x32xf32>
    %48 = vector.extract_strided_slice %30 {offsets = [0, 96], sizes = [2, 32], strides = [1, 1]} : vector<2x128xf32> to vector<2x32xf32>
    %49 = math.tanh %47 : vector<2x32xf32>
    %50 = arith.mulf %48, %49 : vector<2x32xf32>
    %c0_i32 = arith.constant 0 : i32
    %51 = vector.broadcast %c0_i32 : i32 to vector<2x1xi32>
    %52 = arith.cmpi sgt, %0, %51 : vector<2x1xi32>
    %c15_i32 = arith.constant 15 : i32
    %53 = vector.broadcast %c15_i32 : i32 to vector<2x1xi32>
    %54 = arith.cmpi sgt, %0, %53 : vector<2x1xi32>
    %55 = vector.shape_cast %52 : vector<2x1xi1> to vector<2x1xi1>
    %56 = vector.broadcast %55 : vector<2x1xi1> to vector<2x32xi1>
    %57 = arith.select %56, %39, %9 : vector<2x32xi1>, vector<2x32xf32>
    %58 = vector.shape_cast %52 : vector<2x1xi1> to vector<2x1xi1>
    %59 = vector.broadcast %58 : vector<2x1xi1> to vector<2x32xi1>
    %60 = arith.select %59, %42, %8 : vector<2x32xi1>, vector<2x32xf32>
    %61 = vector.shape_cast %54 : vector<2x1xi1> to vector<2x1xi1>
    %62 = vector.broadcast %61 : vector<2x1xi1> to vector<2x32xi1>
    %63 = arith.select %62, %47, %11 : vector<2x32xi1>, vector<2x32xf32>
    %64 = vector.shape_cast %54 : vector<2x1xi1> to vector<2x1xi1>
    %65 = vector.broadcast %64 : vector<2x1xi1> to vector<2x32xi1>
    %66 = arith.select %65, %50, %10 : vector<2x32xi1>, vector<2x32xf32>
    %67 = vector.shape_cast %52 : vector<2x1xi1> to vector<2x1xi1>
    %68 = vector.broadcast %67 : vector<2x1xi1> to vector<2x32xi1>
    %69 = arith.select %68, %42, %12 : vector<2x32xi1>, vector<2x32xf32>
    %70 = vector.shape_cast %54 : vector<2x1xi1> to vector<2x1xi1>
    %71 = vector.broadcast %70 : vector<2x1xi1> to vector<2x32xi1>
    %72 = arith.select %71, %50, %12 : vector<2x32xi1>, vector<2x32xf32>
    %73 = tpu.concatenate %60, %66 in 1 : vector<2x32xf32>, vector<2x32xf32> -> vector<2x64xf32>
    %cst_17 = arith.constant dense<0.000000e+00> : vector<2x256xf32>
    %74 = tpu.matmul %73, %7, %cst_17 {dimension_numbers = #tpu.dot_dimension_numbers<[1], [0], [0], [1], [0, 0, 1, 1], [], []>} : vector<2x64xf32>, vector<64x256xf32>, vector<2x256xf32> -> vector<2x256xf32>
    %75 = vector.extract_strided_slice %6 {offsets = [2, 0], sizes = [2, 128], strides = [1, 1]} : vector<32x256xf32> to vector<2x128xf32>
    %76 = vector.extract_strided_slice %74 {offsets = [0, 0], sizes = [2, 128], strides = [1, 1]} : vector<2x256xf32> to vector<2x128xf32>
    %77 = arith.addf %75, %76 : vector<2x128xf32>
    %78 = vector.extract_strided_slice %6 {offsets = [28, 128], sizes = [2, 128], strides = [1, 1]} : vector<32x256xf32> to vector<2x128xf32>
    %79 = vector.extract_strided_slice %74 {offsets = [0, 128], sizes = [2, 128], strides = [1, 1]} : vector<2x256xf32> to vector<2x128xf32>
    %80 = arith.addf %78, %79 : vector<2x128xf32>
    %81 = arith.negf %77 : vector<2x128xf32>
    %82 = math.exp %81 : vector<2x128xf32>
    %cst_18 = arith.constant 1.000000e+00 : f32
    %83 = vector.broadcast %cst_18 : f32 to vector<2x128xf32>
    %84 = arith.addf %83, %82 : vector<2x128xf32>
    %85 = arith.divf %83, %84 : vector<2x128xf32>
    %86 = arith.negf %80 : vector<2x128xf32>
    %87 = math.exp %86 : vector<2x128xf32>
    %cst_19 = arith.constant 1.000000e+00 : f32
    %88 = vector.broadcast %cst_19 : f32 to vector<2x128xf32>
    %89 = arith.addf %88, %87 : vector<2x128xf32>
    %90 = arith.divf %88, %89 : vector<2x128xf32>
    %91 = vector.extract_strided_slice %77 {offsets = [0, 64], sizes = [2, 32], strides = [1, 1]} : vector<2x128xf32> to vector<2x32xf32>
    %92 = math.tanh %91 : vector<2x32xf32>
    %93 = vector.extract_strided_slice %80 {offsets = [0, 64], sizes = [2, 32], strides = [1, 1]} : vector<2x128xf32> to vector<2x32xf32>
    %94 = math.tanh %93 : vector<2x32xf32>
    %95 = vector.extract_strided_slice %85 {offsets = [0, 32], sizes = [2, 32], strides = [1, 1]} : vector<2x128xf32> to vector<2x32xf32>
    %96 = arith.mulf %95, %57 : vector<2x32xf32>
    %97 = vector.extract_strided_slice %85 {offsets = [0, 0], sizes = [2, 32], strides = [1, 1]} : vector<2x128xf32> to vector<2x32xf32>
    %98 = arith.mulf %97, %92 : vector<2x32xf32>
    %99 = arith.addf %96, %98 : vector<2x32xf32>
    %100 = vector.extract_strided_slice %85 {offsets = [0, 96], sizes = [2, 32], strides = [1, 1]} : vector<2x128xf32> to vector<2x32xf32>
    %101 = math.tanh %99 : vector<2x32xf32>
    %102 = arith.mulf %100, %101 : vector<2x32xf32>
    %103 = vector.extract_strided_slice %90 {offsets = [0, 32], sizes = [2, 32], strides = [1, 1]} : vector<2x128xf32> to vector<2x32xf32>
    %104 = arith.mulf %103, %63 : vector<2x32xf32>
    %105 = vector.extract_strided_slice %90 {offsets = [0, 0], sizes = [2, 32], strides = [1, 1]} : vector<2x128xf32> to vector<2x32xf32>
    %106 = arith.mulf %105, %94 : vector<2x32xf32>
    %107 = arith.addf %104, %106 : vector<2x32xf32>
    %108 = vector.extract_strided_slice %90 {offsets = [0, 96], sizes = [2, 32], strides = [1, 1]} : vector<2x128xf32> to vector<2x32xf32>
    %109 = math.tanh %107 : vector<2x32xf32>
    %110 = arith.mulf %108, %109 : vector<2x32xf32>
    %c1_i32 = arith.constant 1 : i32
    %111 = vector.broadcast %c1_i32 : i32 to vector<2x1xi32>
    %112 = arith.cmpi sgt, %0, %111 : vector<2x1xi32>
    %c14_i32 = arith.constant 14 : i32
    %113 = vector.broadcast %c14_i32 : i32 to vector<2x1xi32>
    %114 = arith.cmpi sgt, %0, %113 : vector<2x1xi32>
    %115 = vector.shape_cast %112 : vector<2x1xi1> to vector<2x1xi1>
    %116 = vector.broadcast %115 : vector<2x1xi1> to vector<2x32xi1>
    %117 = arith.select %116, %99, %57 : vector<2x32xi1>, vector<2x32xf32>
    %118 = vector.shape_cast %112 : vector<2x1xi1> to vector<2x1xi1>
    %119 = vector.broadcast %118 : vector<2x1xi1> to vector<2x32xi1>
    %120 = arith.select %119, %102, %60 : vector<2x32xi1>, vector<2x32xf32>
    %121 = vector.shape_cast %114 : vector<2x1xi1> to vector<2x1xi1>
    %122 = vector.broadcast %121 : vector<2x1xi1> to vector<2x32xi1>
    %123 = arith.select %122, %107, %63 : vector<2x32xi1>, vector<2x32xf32>
    %124 = vector.shape_cast %114 : vector<2x1xi1> to vector<2x1xi1>
    %125 = vector.broadcast %124 : vector<2x1xi1> to vector<2x32xi1>
    %126 = arith.select %125, %110, %66 : vector<2x32xi1>, vector<2x32xf32>
    %127 = vector.shape_cast %112 : vector<2x1xi1> to vector<2x1xi1>
    %128 = vector.broadcast %127 : vector<2x1xi1> to vector<2x32xi1>
    %129 = arith.select %128, %102, %12 : vector<2x32xi1>, vector<2x32xf32>
    %130 = vector.shape_cast %114 : vector<2x1xi1> to vector<2x1xi1>
    %131 = vector.broadcast %130 : vector<2x1xi1> to vector<2x32xi1>
    %132 = arith.select %131, %110, %12 : vector<2x32xi1>, vector<2x32xf32>
    %133 = tpu.concatenate %120, %126 in 1 : vector<2x32xf32>, vector<2x32xf32> -> vector<2x64xf32>
    %cst_20 = arith.constant dense<0.000000e+00> : vector<2x256xf32>
    %134 = tpu.matmul %133, %7, %cst_20 {dimension_numbers = #tpu.dot_dimension_numbers<[1], [0], [0], [1], [0, 0, 1, 1], [], []>} : vector<2x64xf32>, vector<64x256xf32>, vector<2x256xf32> -> vector<2x256xf32>
    %135 = vector.extract_strided_slice %6 {offsets = [4, 0], sizes = [2, 128], strides = [1, 1]} : vector<32x256xf32> to vector<2x128xf32>
    %136 = vector.extract_strided_slice %134 {offsets = [0, 0], sizes = [2, 128], strides = [1, 1]} : vector<2x256xf32> to vector<2x128xf32>
    %137 = arith.addf %135, %136 : vector<2x128xf32>
    %138 = vector.extract_strided_slice %6 {offsets = [26, 128], sizes = [2, 128], strides = [1, 1]} : vector<32x256xf32> to vector<2x128xf32>
    %139 = vector.extract_strided_slice %134 {offsets = [0, 128], sizes = [2, 128], strides = [1, 1]} : vector<2x256xf32> to vector<2x128xf32>
    %140 = arith.addf %138, %139 : vector<2x128xf32>
    %141 = arith.negf %137 : vector<2x128xf32>
    %142 = math.exp %141 : vector<2x128xf32>
    %cst_21 = arith.constant 1.000000e+00 : f32
    %143 = vector.broadcast %cst_21 : f32 to vector<2x128xf32>
    %144 = arith.addf %143, %142 : vector<2x128xf32>
    %145 = arith.divf %143, %144 : vector<2x128xf32>
    %146 = arith.negf %140 : vector<2x128xf32>
    %147 = math.exp %146 : vector<2x128xf32>
    %cst_22 = arith.constant 1.000000e+00 : f32
    %148 = vector.broadcast %cst_22 : f32 to vector<2x128xf32>
    %149 = arith.addf %148, %147 : vector<2x128xf32>
    %150 = arith.divf %148, %149 : vector<2x128xf32>
    %151 = vector.extract_strided_slice %137 {offsets = [0, 64], sizes = [2, 32], strides = [1, 1]} : vector<2x128xf32> to vector<2x32xf32>
    %152 = math.tanh %151 : vector<2x32xf32>
    %153 = vector.extract_strided_slice %140 {offsets = [0, 64], sizes = [2, 32], strides = [1, 1]} : vector<2x128xf32> to vector<2x32xf32>
    %154 = math.tanh %153 : vector<2x32xf32>
    %155 = vector.extract_strided_slice %145 {offsets = [0, 32], sizes = [2, 32], strides = [1, 1]} : vector<2x128xf32> to vector<2x32xf32>
    %156 = arith.mulf %155, %117 : vector<2x32xf32>
    %157 = vector.extract_strided_slice %145 {offsets = [0, 0], sizes = [2, 32], strides = [1, 1]} : vector<2x128xf32> to vector<2x32xf32>
    %158 = arith.mulf %157, %152 : vector<2x32xf32>
    %159 = arith.addf %156, %158 : vector<2x32xf32>
    %160 = vector.extract_strided_slice %145 {offsets = [0, 96], sizes = [2, 32], strides = [1, 1]} : vector<2x128xf32> to vector<2x32xf32>
    %161 = math.tanh %159 : vector<2x32xf32>
    %162 = arith.mulf %160, %161 : vector<2x32xf32>
    %163 = vector.extract_strided_slice %150 {offsets = [0, 32], sizes = [2, 32], strides = [1, 1]} : vector<2x128xf32> to vector<2x32xf32>
    %164 = arith.mulf %163, %123 : vector<2x32xf32>
    %165 = vector.extract_strided_slice %150 {offsets = [0, 0], sizes = [2, 32], strides = [1, 1]} : vector<2x128xf32> to vector<2x32xf32>
    %166 = arith.mulf %165, %154 : vector<2x32xf32>
    %167 = arith.addf %164, %166 : vector<2x32xf32>
    %168 = vector.extract_strided_slice %150 {offsets = [0, 96], sizes = [2, 32], strides = [1, 1]} : vector<2x128xf32> to vector<2x32xf32>
    %169 = math.tanh %167 : vector<2x32xf32>
    %170 = arith.mulf %168, %169 : vector<2x32xf32>
    %c2_i32 = arith.constant 2 : i32
    %171 = vector.broadcast %c2_i32 : i32 to vector<2x1xi32>
    %172 = arith.cmpi sgt, %0, %171 : vector<2x1xi32>
    %c13_i32 = arith.constant 13 : i32
    %173 = vector.broadcast %c13_i32 : i32 to vector<2x1xi32>
    %174 = arith.cmpi sgt, %0, %173 : vector<2x1xi32>
    %175 = vector.shape_cast %172 : vector<2x1xi1> to vector<2x1xi1>
    %176 = vector.broadcast %175 : vector<2x1xi1> to vector<2x32xi1>
    %177 = arith.select %176, %159, %117 : vector<2x32xi1>, vector<2x32xf32>
    %178 = vector.shape_cast %172 : vector<2x1xi1> to vector<2x1xi1>
    %179 = vector.broadcast %178 : vector<2x1xi1> to vector<2x32xi1>
    %180 = arith.select %179, %162, %120 : vector<2x32xi1>, vector<2x32xf32>
    %181 = vector.shape_cast %174 : vector<2x1xi1> to vector<2x1xi1>
    %182 = vector.broadcast %181 : vector<2x1xi1> to vector<2x32xi1>
    %183 = arith.select %182, %167, %123 : vector<2x32xi1>, vector<2x32xf32>
    %184 = vector.shape_cast %174 : vector<2x1xi1> to vector<2x1xi1>
    %185 = vector.broadcast %184 : vector<2x1xi1> to vector<2x32xi1>
    %186 = arith.select %185, %170, %126 : vector<2x32xi1>, vector<2x32xf32>
    %187 = vector.shape_cast %172 : vector<2x1xi1> to vector<2x1xi1>
    %188 = vector.broadcast %187 : vector<2x1xi1> to vector<2x32xi1>
    %189 = arith.select %188, %162, %12 : vector<2x32xi1>, vector<2x32xf32>
    %190 = vector.shape_cast %174 : vector<2x1xi1> to vector<2x1xi1>
    %191 = vector.broadcast %190 : vector<2x1xi1> to vector<2x32xi1>
    %192 = arith.select %191, %170, %12 : vector<2x32xi1>, vector<2x32xf32>
    %193 = tpu.concatenate %180, %186 in 1 : vector<2x32xf32>, vector<2x32xf32> -> vector<2x64xf32>
    %cst_23 = arith.constant dense<0.000000e+00> : vector<2x256xf32>
    %194 = tpu.matmul %193, %7, %cst_23 {dimension_numbers = #tpu.dot_dimension_numbers<[1], [0], [0], [1], [0, 0, 1, 1], [], []>} : vector<2x64xf32>, vector<64x256xf32>, vector<2x256xf32> -> vector<2x256xf32>
    %195 = vector.extract_strided_slice %6 {offsets = [6, 0], sizes = [2, 128], strides = [1, 1]} : vector<32x256xf32> to vector<2x128xf32>
    %196 = vector.extract_strided_slice %194 {offsets = [0, 0], sizes = [2, 128], strides = [1, 1]} : vector<2x256xf32> to vector<2x128xf32>
    %197 = arith.addf %195, %196 : vector<2x128xf32>
    %198 = vector.extract_strided_slice %6 {offsets = [24, 128], sizes = [2, 128], strides = [1, 1]} : vector<32x256xf32> to vector<2x128xf32>
    %199 = vector.extract_strided_slice %194 {offsets = [0, 128], sizes = [2, 128], strides = [1, 1]} : vector<2x256xf32> to vector<2x128xf32>
    %200 = arith.addf %198, %199 : vector<2x128xf32>
    %201 = arith.negf %197 : vector<2x128xf32>
    %202 = math.exp %201 : vector<2x128xf32>
    %cst_24 = arith.constant 1.000000e+00 : f32
    %203 = vector.broadcast %cst_24 : f32 to vector<2x128xf32>
    %204 = arith.addf %203, %202 : vector<2x128xf32>
    %205 = arith.divf %203, %204 : vector<2x128xf32>
    %206 = arith.negf %200 : vector<2x128xf32>
    %207 = math.exp %206 : vector<2x128xf32>
    %cst_25 = arith.constant 1.000000e+00 : f32
    %208 = vector.broadcast %cst_25 : f32 to vector<2x128xf32>
    %209 = arith.addf %208, %207 : vector<2x128xf32>
    %210 = arith.divf %208, %209 : vector<2x128xf32>
    %211 = vector.extract_strided_slice %197 {offsets = [0, 64], sizes = [2, 32], strides = [1, 1]} : vector<2x128xf32> to vector<2x32xf32>
    %212 = math.tanh %211 : vector<2x32xf32>
    %213 = vector.extract_strided_slice %200 {offsets = [0, 64], sizes = [2, 32], strides = [1, 1]} : vector<2x128xf32> to vector<2x32xf32>
    %214 = math.tanh %213 : vector<2x32xf32>
    %215 = vector.extract_strided_slice %205 {offsets = [0, 32], sizes = [2, 32], strides = [1, 1]} : vector<2x128xf32> to vector<2x32xf32>
    %216 = arith.mulf %215, %177 : vector<2x32xf32>
    %217 = vector.extract_strided_slice %205 {offsets = [0, 0], sizes = [2, 32], strides = [1, 1]} : vector<2x128xf32> to vector<2x32xf32>
    %218 = arith.mulf %217, %212 : vector<2x32xf32>
    %219 = arith.addf %216, %218 : vector<2x32xf32>
    %220 = vector.extract_strided_slice %205 {offsets = [0, 96], sizes = [2, 32], strides = [1, 1]} : vector<2x128xf32> to vector<2x32xf32>
    %221 = math.tanh %219 : vector<2x32xf32>
    %222 = arith.mulf %220, %221 : vector<2x32xf32>
    %223 = vector.extract_strided_slice %210 {offsets = [0, 32], sizes = [2, 32], strides = [1, 1]} : vector<2x128xf32> to vector<2x32xf32>
    %224 = arith.mulf %223, %183 : vector<2x32xf32>
    %225 = vector.extract_strided_slice %210 {offsets = [0, 0], sizes = [2, 32], strides = [1, 1]} : vector<2x128xf32> to vector<2x32xf32>
    %226 = arith.mulf %225, %214 : vector<2x32xf32>
    %227 = arith.addf %224, %226 : vector<2x32xf32>
    %228 = vector.extract_strided_slice %210 {offsets = [0, 96], sizes = [2, 32], strides = [1, 1]} : vector<2x128xf32> to vector<2x32xf32>
    %229 = math.tanh %227 : vector<2x32xf32>
    %230 = arith.mulf %228, %229 : vector<2x32xf32>
    %c3_i32 = arith.constant 3 : i32
    %231 = vector.broadcast %c3_i32 : i32 to vector<2x1xi32>
    %232 = arith.cmpi sgt, %0, %231 : vector<2x1xi32>
    %c12_i32 = arith.constant 12 : i32
    %233 = vector.broadcast %c12_i32 : i32 to vector<2x1xi32>
    %234 = arith.cmpi sgt, %0, %233 : vector<2x1xi32>
    %235 = vector.shape_cast %232 : vector<2x1xi1> to vector<2x1xi1>
    %236 = vector.broadcast %235 : vector<2x1xi1> to vector<2x32xi1>
    %237 = arith.select %236, %219, %177 : vector<2x32xi1>, vector<2x32xf32>
    %238 = vector.shape_cast %232 : vector<2x1xi1> to vector<2x1xi1>
    %239 = vector.broadcast %238 : vector<2x1xi1> to vector<2x32xi1>
    %240 = arith.select %239, %222, %180 : vector<2x32xi1>, vector<2x32xf32>
    %241 = vector.shape_cast %234 : vector<2x1xi1> to vector<2x1xi1>
    %242 = vector.broadcast %241 : vector<2x1xi1> to vector<2x32xi1>
    %243 = arith.select %242, %227, %183 : vector<2x32xi1>, vector<2x32xf32>
    %244 = vector.shape_cast %234 : vector<2x1xi1> to vector<2x1xi1>
    %245 = vector.broadcast %244 : vector<2x1xi1> to vector<2x32xi1>
    %246 = arith.select %245, %230, %186 : vector<2x32xi1>, vector<2x32xf32>
    %247 = vector.shape_cast %232 : vector<2x1xi1> to vector<2x1xi1>
    %248 = vector.broadcast %247 : vector<2x1xi1> to vector<2x32xi1>
    %249 = arith.select %248, %222, %12 : vector<2x32xi1>, vector<2x32xf32>
    %250 = vector.shape_cast %234 : vector<2x1xi1> to vector<2x1xi1>
    %251 = vector.broadcast %250 : vector<2x1xi1> to vector<2x32xi1>
    %252 = arith.select %251, %230, %12 : vector<2x32xi1>, vector<2x32xf32>
    %253 = tpu.concatenate %240, %246 in 1 : vector<2x32xf32>, vector<2x32xf32> -> vector<2x64xf32>
    %cst_26 = arith.constant dense<0.000000e+00> : vector<2x256xf32>
    %254 = tpu.matmul %253, %7, %cst_26 {dimension_numbers = #tpu.dot_dimension_numbers<[1], [0], [0], [1], [0, 0, 1, 1], [], []>} : vector<2x64xf32>, vector<64x256xf32>, vector<2x256xf32> -> vector<2x256xf32>
    %255 = vector.extract_strided_slice %6 {offsets = [8, 0], sizes = [2, 128], strides = [1, 1]} : vector<32x256xf32> to vector<2x128xf32>
    %256 = vector.extract_strided_slice %254 {offsets = [0, 0], sizes = [2, 128], strides = [1, 1]} : vector<2x256xf32> to vector<2x128xf32>
    %257 = arith.addf %255, %256 : vector<2x128xf32>
    %258 = vector.extract_strided_slice %6 {offsets = [22, 128], sizes = [2, 128], strides = [1, 1]} : vector<32x256xf32> to vector<2x128xf32>
    %259 = vector.extract_strided_slice %254 {offsets = [0, 128], sizes = [2, 128], strides = [1, 1]} : vector<2x256xf32> to vector<2x128xf32>
    %260 = arith.addf %258, %259 : vector<2x128xf32>
    %261 = arith.negf %257 : vector<2x128xf32>
    %262 = math.exp %261 : vector<2x128xf32>
    %cst_27 = arith.constant 1.000000e+00 : f32
    %263 = vector.broadcast %cst_27 : f32 to vector<2x128xf32>
    %264 = arith.addf %263, %262 : vector<2x128xf32>
    %265 = arith.divf %263, %264 : vector<2x128xf32>
    %266 = arith.negf %260 : vector<2x128xf32>
    %267 = math.exp %266 : vector<2x128xf32>
    %cst_28 = arith.constant 1.000000e+00 : f32
    %268 = vector.broadcast %cst_28 : f32 to vector<2x128xf32>
    %269 = arith.addf %268, %267 : vector<2x128xf32>
    %270 = arith.divf %268, %269 : vector<2x128xf32>
    %271 = vector.extract_strided_slice %257 {offsets = [0, 64], sizes = [2, 32], strides = [1, 1]} : vector<2x128xf32> to vector<2x32xf32>
    %272 = math.tanh %271 : vector<2x32xf32>
    %273 = vector.extract_strided_slice %260 {offsets = [0, 64], sizes = [2, 32], strides = [1, 1]} : vector<2x128xf32> to vector<2x32xf32>
    %274 = math.tanh %273 : vector<2x32xf32>
    %275 = vector.extract_strided_slice %265 {offsets = [0, 32], sizes = [2, 32], strides = [1, 1]} : vector<2x128xf32> to vector<2x32xf32>
    %276 = arith.mulf %275, %237 : vector<2x32xf32>
    %277 = vector.extract_strided_slice %265 {offsets = [0, 0], sizes = [2, 32], strides = [1, 1]} : vector<2x128xf32> to vector<2x32xf32>
    %278 = arith.mulf %277, %272 : vector<2x32xf32>
    %279 = arith.addf %276, %278 : vector<2x32xf32>
    %280 = vector.extract_strided_slice %265 {offsets = [0, 96], sizes = [2, 32], strides = [1, 1]} : vector<2x128xf32> to vector<2x32xf32>
    %281 = math.tanh %279 : vector<2x32xf32>
    %282 = arith.mulf %280, %281 : vector<2x32xf32>
    %283 = vector.extract_strided_slice %270 {offsets = [0, 32], sizes = [2, 32], strides = [1, 1]} : vector<2x128xf32> to vector<2x32xf32>
    %284 = arith.mulf %283, %243 : vector<2x32xf32>
    %285 = vector.extract_strided_slice %270 {offsets = [0, 0], sizes = [2, 32], strides = [1, 1]} : vector<2x128xf32> to vector<2x32xf32>
    %286 = arith.mulf %285, %274 : vector<2x32xf32>
    %287 = arith.addf %284, %286 : vector<2x32xf32>
    %288 = vector.extract_strided_slice %270 {offsets = [0, 96], sizes = [2, 32], strides = [1, 1]} : vector<2x128xf32> to vector<2x32xf32>
    %289 = math.tanh %287 : vector<2x32xf32>
    %290 = arith.mulf %288, %289 : vector<2x32xf32>
    %c4_i32 = arith.constant 4 : i32
    %291 = vector.broadcast %c4_i32 : i32 to vector<2x1xi32>
    %292 = arith.cmpi sgt, %0, %291 : vector<2x1xi32>
    %c11_i32 = arith.constant 11 : i32
    %293 = vector.broadcast %c11_i32 : i32 to vector<2x1xi32>
    %294 = arith.cmpi sgt, %0, %293 : vector<2x1xi32>
    %295 = vector.shape_cast %292 : vector<2x1xi1> to vector<2x1xi1>
    %296 = vector.broadcast %295 : vector<2x1xi1> to vector<2x32xi1>
    %297 = arith.select %296, %279, %237 : vector<2x32xi1>, vector<2x32xf32>
    %298 = vector.shape_cast %292 : vector<2x1xi1> to vector<2x1xi1>
    %299 = vector.broadcast %298 : vector<2x1xi1> to vector<2x32xi1>
    %300 = arith.select %299, %282, %240 : vector<2x32xi1>, vector<2x32xf32>
    %301 = vector.shape_cast %294 : vector<2x1xi1> to vector<2x1xi1>
    %302 = vector.broadcast %301 : vector<2x1xi1> to vector<2x32xi1>
    %303 = arith.select %302, %287, %243 : vector<2x32xi1>, vector<2x32xf32>
    %304 = vector.shape_cast %294 : vector<2x1xi1> to vector<2x1xi1>
    %305 = vector.broadcast %304 : vector<2x1xi1> to vector<2x32xi1>
    %306 = arith.select %305, %290, %246 : vector<2x32xi1>, vector<2x32xf32>
    %307 = vector.shape_cast %292 : vector<2x1xi1> to vector<2x1xi1>
    %308 = vector.broadcast %307 : vector<2x1xi1> to vector<2x32xi1>
    %309 = arith.select %308, %282, %12 : vector<2x32xi1>, vector<2x32xf32>
    %310 = vector.shape_cast %294 : vector<2x1xi1> to vector<2x1xi1>
    %311 = vector.broadcast %310 : vector<2x1xi1> to vector<2x32xi1>
    %312 = arith.select %311, %290, %12 : vector<2x32xi1>, vector<2x32xf32>
    %313 = tpu.concatenate %300, %306 in 1 : vector<2x32xf32>, vector<2x32xf32> -> vector<2x64xf32>
    %cst_29 = arith.constant dense<0.000000e+00> : vector<2x256xf32>
    %314 = tpu.matmul %313, %7, %cst_29 {dimension_numbers = #tpu.dot_dimension_numbers<[1], [0], [0], [1], [0, 0, 1, 1], [], []>} : vector<2x64xf32>, vector<64x256xf32>, vector<2x256xf32> -> vector<2x256xf32>
    %315 = vector.extract_strided_slice %6 {offsets = [10, 0], sizes = [2, 128], strides = [1, 1]} : vector<32x256xf32> to vector<2x128xf32>
    %316 = vector.extract_strided_slice %314 {offsets = [0, 0], sizes = [2, 128], strides = [1, 1]} : vector<2x256xf32> to vector<2x128xf32>
    %317 = arith.addf %315, %316 : vector<2x128xf32>
    %318 = vector.extract_strided_slice %6 {offsets = [20, 128], sizes = [2, 128], strides = [1, 1]} : vector<32x256xf32> to vector<2x128xf32>
    %319 = vector.extract_strided_slice %314 {offsets = [0, 128], sizes = [2, 128], strides = [1, 1]} : vector<2x256xf32> to vector<2x128xf32>
    %320 = arith.addf %318, %319 : vector<2x128xf32>
    %321 = arith.negf %317 : vector<2x128xf32>
    %322 = math.exp %321 : vector<2x128xf32>
    %cst_30 = arith.constant 1.000000e+00 : f32
    %323 = vector.broadcast %cst_30 : f32 to vector<2x128xf32>
    %324 = arith.addf %323, %322 : vector<2x128xf32>
    %325 = arith.divf %323, %324 : vector<2x128xf32>
    %326 = arith.negf %320 : vector<2x128xf32>
    %327 = math.exp %326 : vector<2x128xf32>
    %cst_31 = arith.constant 1.000000e+00 : f32
    %328 = vector.broadcast %cst_31 : f32 to vector<2x128xf32>
    %329 = arith.addf %328, %327 : vector<2x128xf32>
    %330 = arith.divf %328, %329 : vector<2x128xf32>
    %331 = vector.extract_strided_slice %317 {offsets = [0, 64], sizes = [2, 32], strides = [1, 1]} : vector<2x128xf32> to vector<2x32xf32>
    %332 = math.tanh %331 : vector<2x32xf32>
    %333 = vector.extract_strided_slice %320 {offsets = [0, 64], sizes = [2, 32], strides = [1, 1]} : vector<2x128xf32> to vector<2x32xf32>
    %334 = math.tanh %333 : vector<2x32xf32>
    %335 = vector.extract_strided_slice %325 {offsets = [0, 32], sizes = [2, 32], strides = [1, 1]} : vector<2x128xf32> to vector<2x32xf32>
    %336 = arith.mulf %335, %297 : vector<2x32xf32>
    %337 = vector.extract_strided_slice %325 {offsets = [0, 0], sizes = [2, 32], strides = [1, 1]} : vector<2x128xf32> to vector<2x32xf32>
    %338 = arith.mulf %337, %332 : vector<2x32xf32>
    %339 = arith.addf %336, %338 : vector<2x32xf32>
    %340 = vector.extract_strided_slice %325 {offsets = [0, 96], sizes = [2, 32], strides = [1, 1]} : vector<2x128xf32> to vector<2x32xf32>
    %341 = math.tanh %339 : vector<2x32xf32>
    %342 = arith.mulf %340, %341 : vector<2x32xf32>
    %343 = vector.extract_strided_slice %330 {offsets = [0, 32], sizes = [2, 32], strides = [1, 1]} : vector<2x128xf32> to vector<2x32xf32>
    %344 = arith.mulf %343, %303 : vector<2x32xf32>
    %345 = vector.extract_strided_slice %330 {offsets = [0, 0], sizes = [2, 32], strides = [1, 1]} : vector<2x128xf32> to vector<2x32xf32>
    %346 = arith.mulf %345, %334 : vector<2x32xf32>
    %347 = arith.addf %344, %346 : vector<2x32xf32>
    %348 = vector.extract_strided_slice %330 {offsets = [0, 96], sizes = [2, 32], strides = [1, 1]} : vector<2x128xf32> to vector<2x32xf32>
    %349 = math.tanh %347 : vector<2x32xf32>
    %350 = arith.mulf %348, %349 : vector<2x32xf32>
    %c5_i32 = arith.constant 5 : i32
    %351 = vector.broadcast %c5_i32 : i32 to vector<2x1xi32>
    %352 = arith.cmpi sgt, %0, %351 : vector<2x1xi32>
    %c10_i32 = arith.constant 10 : i32
    %353 = vector.broadcast %c10_i32 : i32 to vector<2x1xi32>
    %354 = arith.cmpi sgt, %0, %353 : vector<2x1xi32>
    %355 = vector.shape_cast %352 : vector<2x1xi1> to vector<2x1xi1>
    %356 = vector.broadcast %355 : vector<2x1xi1> to vector<2x32xi1>
    %357 = arith.select %356, %339, %297 : vector<2x32xi1>, vector<2x32xf32>
    %358 = vector.shape_cast %352 : vector<2x1xi1> to vector<2x1xi1>
    %359 = vector.broadcast %358 : vector<2x1xi1> to vector<2x32xi1>
    %360 = arith.select %359, %342, %300 : vector<2x32xi1>, vector<2x32xf32>
    %361 = vector.shape_cast %354 : vector<2x1xi1> to vector<2x1xi1>
    %362 = vector.broadcast %361 : vector<2x1xi1> to vector<2x32xi1>
    %363 = arith.select %362, %347, %303 : vector<2x32xi1>, vector<2x32xf32>
    %364 = vector.shape_cast %354 : vector<2x1xi1> to vector<2x1xi1>
    %365 = vector.broadcast %364 : vector<2x1xi1> to vector<2x32xi1>
    %366 = arith.select %365, %350, %306 : vector<2x32xi1>, vector<2x32xf32>
    %367 = vector.shape_cast %352 : vector<2x1xi1> to vector<2x1xi1>
    %368 = vector.broadcast %367 : vector<2x1xi1> to vector<2x32xi1>
    %369 = arith.select %368, %342, %12 : vector<2x32xi1>, vector<2x32xf32>
    %370 = vector.shape_cast %354 : vector<2x1xi1> to vector<2x1xi1>
    %371 = vector.broadcast %370 : vector<2x1xi1> to vector<2x32xi1>
    %372 = arith.select %371, %350, %12 : vector<2x32xi1>, vector<2x32xf32>
    %373 = tpu.concatenate %360, %366 in 1 : vector<2x32xf32>, vector<2x32xf32> -> vector<2x64xf32>
    %cst_32 = arith.constant dense<0.000000e+00> : vector<2x256xf32>
    %374 = tpu.matmul %373, %7, %cst_32 {dimension_numbers = #tpu.dot_dimension_numbers<[1], [0], [0], [1], [0, 0, 1, 1], [], []>} : vector<2x64xf32>, vector<64x256xf32>, vector<2x256xf32> -> vector<2x256xf32>
    %375 = vector.extract_strided_slice %6 {offsets = [12, 0], sizes = [2, 128], strides = [1, 1]} : vector<32x256xf32> to vector<2x128xf32>
    %376 = vector.extract_strided_slice %374 {offsets = [0, 0], sizes = [2, 128], strides = [1, 1]} : vector<2x256xf32> to vector<2x128xf32>
    %377 = arith.addf %375, %376 : vector<2x128xf32>
    %378 = vector.extract_strided_slice %6 {offsets = [18, 128], sizes = [2, 128], strides = [1, 1]} : vector<32x256xf32> to vector<2x128xf32>
    %379 = vector.extract_strided_slice %374 {offsets = [0, 128], sizes = [2, 128], strides = [1, 1]} : vector<2x256xf32> to vector<2x128xf32>
    %380 = arith.addf %378, %379 : vector<2x128xf32>
    %381 = arith.negf %377 : vector<2x128xf32>
    %382 = math.exp %381 : vector<2x128xf32>
    %cst_33 = arith.constant 1.000000e+00 : f32
    %383 = vector.broadcast %cst_33 : f32 to vector<2x128xf32>
    %384 = arith.addf %383, %382 : vector<2x128xf32>
    %385 = arith.divf %383, %384 : vector<2x128xf32>
    %386 = arith.negf %380 : vector<2x128xf32>
    %387 = math.exp %386 : vector<2x128xf32>
    %cst_34 = arith.constant 1.000000e+00 : f32
    %388 = vector.broadcast %cst_34 : f32 to vector<2x128xf32>
    %389 = arith.addf %388, %387 : vector<2x128xf32>
    %390 = arith.divf %388, %389 : vector<2x128xf32>
    %391 = vector.extract_strided_slice %377 {offsets = [0, 64], sizes = [2, 32], strides = [1, 1]} : vector<2x128xf32> to vector<2x32xf32>
    %392 = math.tanh %391 : vector<2x32xf32>
    %393 = vector.extract_strided_slice %380 {offsets = [0, 64], sizes = [2, 32], strides = [1, 1]} : vector<2x128xf32> to vector<2x32xf32>
    %394 = math.tanh %393 : vector<2x32xf32>
    %395 = vector.extract_strided_slice %385 {offsets = [0, 32], sizes = [2, 32], strides = [1, 1]} : vector<2x128xf32> to vector<2x32xf32>
    %396 = arith.mulf %395, %357 : vector<2x32xf32>
    %397 = vector.extract_strided_slice %385 {offsets = [0, 0], sizes = [2, 32], strides = [1, 1]} : vector<2x128xf32> to vector<2x32xf32>
    %398 = arith.mulf %397, %392 : vector<2x32xf32>
    %399 = arith.addf %396, %398 : vector<2x32xf32>
    %400 = vector.extract_strided_slice %385 {offsets = [0, 96], sizes = [2, 32], strides = [1, 1]} : vector<2x128xf32> to vector<2x32xf32>
    %401 = math.tanh %399 : vector<2x32xf32>
    %402 = arith.mulf %400, %401 : vector<2x32xf32>
    %403 = vector.extract_strided_slice %390 {offsets = [0, 32], sizes = [2, 32], strides = [1, 1]} : vector<2x128xf32> to vector<2x32xf32>
    %404 = arith.mulf %403, %363 : vector<2x32xf32>
    %405 = vector.extract_strided_slice %390 {offsets = [0, 0], sizes = [2, 32], strides = [1, 1]} : vector<2x128xf32> to vector<2x32xf32>
    %406 = arith.mulf %405, %394 : vector<2x32xf32>
    %407 = arith.addf %404, %406 : vector<2x32xf32>
    %408 = vector.extract_strided_slice %390 {offsets = [0, 96], sizes = [2, 32], strides = [1, 1]} : vector<2x128xf32> to vector<2x32xf32>
    %409 = math.tanh %407 : vector<2x32xf32>
    %410 = arith.mulf %408, %409 : vector<2x32xf32>
    %c6_i32 = arith.constant 6 : i32
    %411 = vector.broadcast %c6_i32 : i32 to vector<2x1xi32>
    %412 = arith.cmpi sgt, %0, %411 : vector<2x1xi32>
    %c9_i32 = arith.constant 9 : i32
    %413 = vector.broadcast %c9_i32 : i32 to vector<2x1xi32>
    %414 = arith.cmpi sgt, %0, %413 : vector<2x1xi32>
    %415 = vector.shape_cast %412 : vector<2x1xi1> to vector<2x1xi1>
    %416 = vector.broadcast %415 : vector<2x1xi1> to vector<2x32xi1>
    %417 = arith.select %416, %399, %357 : vector<2x32xi1>, vector<2x32xf32>
    %418 = vector.shape_cast %412 : vector<2x1xi1> to vector<2x1xi1>
    %419 = vector.broadcast %418 : vector<2x1xi1> to vector<2x32xi1>
    %420 = arith.select %419, %402, %360 : vector<2x32xi1>, vector<2x32xf32>
    %421 = vector.shape_cast %414 : vector<2x1xi1> to vector<2x1xi1>
    %422 = vector.broadcast %421 : vector<2x1xi1> to vector<2x32xi1>
    %423 = arith.select %422, %407, %363 : vector<2x32xi1>, vector<2x32xf32>
    %424 = vector.shape_cast %414 : vector<2x1xi1> to vector<2x1xi1>
    %425 = vector.broadcast %424 : vector<2x1xi1> to vector<2x32xi1>
    %426 = arith.select %425, %410, %366 : vector<2x32xi1>, vector<2x32xf32>
    %427 = vector.shape_cast %412 : vector<2x1xi1> to vector<2x1xi1>
    %428 = vector.broadcast %427 : vector<2x1xi1> to vector<2x32xi1>
    %429 = arith.select %428, %402, %12 : vector<2x32xi1>, vector<2x32xf32>
    %430 = vector.shape_cast %414 : vector<2x1xi1> to vector<2x1xi1>
    %431 = vector.broadcast %430 : vector<2x1xi1> to vector<2x32xi1>
    %432 = arith.select %431, %410, %12 : vector<2x32xi1>, vector<2x32xf32>
    %433 = tpu.concatenate %420, %426 in 1 : vector<2x32xf32>, vector<2x32xf32> -> vector<2x64xf32>
    %cst_35 = arith.constant dense<0.000000e+00> : vector<2x256xf32>
    %434 = tpu.matmul %433, %7, %cst_35 {dimension_numbers = #tpu.dot_dimension_numbers<[1], [0], [0], [1], [0, 0, 1, 1], [], []>} : vector<2x64xf32>, vector<64x256xf32>, vector<2x256xf32> -> vector<2x256xf32>
    %435 = vector.extract_strided_slice %6 {offsets = [14, 0], sizes = [2, 128], strides = [1, 1]} : vector<32x256xf32> to vector<2x128xf32>
    %436 = vector.extract_strided_slice %434 {offsets = [0, 0], sizes = [2, 128], strides = [1, 1]} : vector<2x256xf32> to vector<2x128xf32>
    %437 = arith.addf %435, %436 : vector<2x128xf32>
    %438 = vector.extract_strided_slice %6 {offsets = [16, 128], sizes = [2, 128], strides = [1, 1]} : vector<32x256xf32> to vector<2x128xf32>
    %439 = vector.extract_strided_slice %434 {offsets = [0, 128], sizes = [2, 128], strides = [1, 1]} : vector<2x256xf32> to vector<2x128xf32>
    %440 = arith.addf %438, %439 : vector<2x128xf32>
    %441 = arith.negf %437 : vector<2x128xf32>
    %442 = math.exp %441 : vector<2x128xf32>
    %cst_36 = arith.constant 1.000000e+00 : f32
    %443 = vector.broadcast %cst_36 : f32 to vector<2x128xf32>
    %444 = arith.addf %443, %442 : vector<2x128xf32>
    %445 = arith.divf %443, %444 : vector<2x128xf32>
    %446 = arith.negf %440 : vector<2x128xf32>
    %447 = math.exp %446 : vector<2x128xf32>
    %cst_37 = arith.constant 1.000000e+00 : f32
    %448 = vector.broadcast %cst_37 : f32 to vector<2x128xf32>
    %449 = arith.addf %448, %447 : vector<2x128xf32>
    %450 = arith.divf %448, %449 : vector<2x128xf32>
    %451 = vector.extract_strided_slice %437 {offsets = [0, 64], sizes = [2, 32], strides = [1, 1]} : vector<2x128xf32> to vector<2x32xf32>
    %452 = math.tanh %451 : vector<2x32xf32>
    %453 = vector.extract_strided_slice %440 {offsets = [0, 64], sizes = [2, 32], strides = [1, 1]} : vector<2x128xf32> to vector<2x32xf32>
    %454 = math.tanh %453 : vector<2x32xf32>
    %455 = vector.extract_strided_slice %445 {offsets = [0, 32], sizes = [2, 32], strides = [1, 1]} : vector<2x128xf32> to vector<2x32xf32>
    %456 = arith.mulf %455, %417 : vector<2x32xf32>
    %457 = vector.extract_strided_slice %445 {offsets = [0, 0], sizes = [2, 32], strides = [1, 1]} : vector<2x128xf32> to vector<2x32xf32>
    %458 = arith.mulf %457, %452 : vector<2x32xf32>
    %459 = arith.addf %456, %458 : vector<2x32xf32>
    %460 = vector.extract_strided_slice %445 {offsets = [0, 96], sizes = [2, 32], strides = [1, 1]} : vector<2x128xf32> to vector<2x32xf32>
    %461 = math.tanh %459 : vector<2x32xf32>
    %462 = arith.mulf %460, %461 : vector<2x32xf32>
    %463 = vector.extract_strided_slice %450 {offsets = [0, 32], sizes = [2, 32], strides = [1, 1]} : vector<2x128xf32> to vector<2x32xf32>
    %464 = arith.mulf %463, %423 : vector<2x32xf32>
    %465 = vector.extract_strided_slice %450 {offsets = [0, 0], sizes = [2, 32], strides = [1, 1]} : vector<2x128xf32> to vector<2x32xf32>
    %466 = arith.mulf %465, %454 : vector<2x32xf32>
    %467 = arith.addf %464, %466 : vector<2x32xf32>
    %468 = vector.extract_strided_slice %450 {offsets = [0, 96], sizes = [2, 32], strides = [1, 1]} : vector<2x128xf32> to vector<2x32xf32>
    %469 = math.tanh %467 : vector<2x32xf32>
    %470 = arith.mulf %468, %469 : vector<2x32xf32>
    %c7_i32 = arith.constant 7 : i32
    %471 = vector.broadcast %c7_i32 : i32 to vector<2x1xi32>
    %472 = arith.cmpi sgt, %0, %471 : vector<2x1xi32>
    %c8_i32 = arith.constant 8 : i32
    %473 = vector.broadcast %c8_i32 : i32 to vector<2x1xi32>
    %474 = arith.cmpi sgt, %0, %473 : vector<2x1xi32>
    %475 = vector.shape_cast %472 : vector<2x1xi1> to vector<2x1xi1>
    %476 = vector.broadcast %475 : vector<2x1xi1> to vector<2x32xi1>
    %477 = arith.select %476, %459, %417 : vector<2x32xi1>, vector<2x32xf32>
    %478 = vector.shape_cast %472 : vector<2x1xi1> to vector<2x1xi1>
    %479 = vector.broadcast %478 : vector<2x1xi1> to vector<2x32xi1>
    %480 = arith.select %479, %462, %420 : vector<2x32xi1>, vector<2x32xf32>
    %481 = vector.shape_cast %474 : vector<2x1xi1> to vector<2x1xi1>
    %482 = vector.broadcast %481 : vector<2x1xi1> to vector<2x32xi1>
    %483 = arith.select %482, %467, %423 : vector<2x32xi1>, vector<2x32xf32>
    %484 = vector.shape_cast %474 : vector<2x1xi1> to vector<2x1xi1>
    %485 = vector.broadcast %484 : vector<2x1xi1> to vector<2x32xi1>
    %486 = arith.select %485, %470, %426 : vector<2x32xi1>, vector<2x32xf32>
    %487 = vector.shape_cast %472 : vector<2x1xi1> to vector<2x1xi1>
    %488 = vector.broadcast %487 : vector<2x1xi1> to vector<2x32xi1>
    %489 = arith.select %488, %462, %12 : vector<2x32xi1>, vector<2x32xf32>
    %490 = vector.shape_cast %474 : vector<2x1xi1> to vector<2x1xi1>
    %491 = vector.broadcast %490 : vector<2x1xi1> to vector<2x32xi1>
    %492 = arith.select %491, %470, %12 : vector<2x32xi1>, vector<2x32xf32>
    %493 = tpu.concatenate %480, %486 in 1 : vector<2x32xf32>, vector<2x32xf32> -> vector<2x64xf32>
    %cst_38 = arith.constant dense<0.000000e+00> : vector<2x256xf32>
    %494 = tpu.matmul %493, %7, %cst_38 {dimension_numbers = #tpu.dot_dimension_numbers<[1], [0], [0], [1], [0, 0, 1, 1], [], []>} : vector<2x64xf32>, vector<64x256xf32>, vector<2x256xf32> -> vector<2x256xf32>
    %495 = vector.extract_strided_slice %6 {offsets = [16, 0], sizes = [2, 128], strides = [1, 1]} : vector<32x256xf32> to vector<2x128xf32>
    %496 = vector.extract_strided_slice %494 {offsets = [0, 0], sizes = [2, 128], strides = [1, 1]} : vector<2x256xf32> to vector<2x128xf32>
    %497 = arith.addf %495, %496 : vector<2x128xf32>
    %498 = vector.extract_strided_slice %6 {offsets = [14, 128], sizes = [2, 128], strides = [1, 1]} : vector<32x256xf32> to vector<2x128xf32>
    %499 = vector.extract_strided_slice %494 {offsets = [0, 128], sizes = [2, 128], strides = [1, 1]} : vector<2x256xf32> to vector<2x128xf32>
    %500 = arith.addf %498, %499 : vector<2x128xf32>
    %501 = arith.negf %497 : vector<2x128xf32>
    %502 = math.exp %501 : vector<2x128xf32>
    %cst_39 = arith.constant 1.000000e+00 : f32
    %503 = vector.broadcast %cst_39 : f32 to vector<2x128xf32>
    %504 = arith.addf %503, %502 : vector<2x128xf32>
    %505 = arith.divf %503, %504 : vector<2x128xf32>
    %506 = arith.negf %500 : vector<2x128xf32>
    %507 = math.exp %506 : vector<2x128xf32>
    %cst_40 = arith.constant 1.000000e+00 : f32
    %508 = vector.broadcast %cst_40 : f32 to vector<2x128xf32>
    %509 = arith.addf %508, %507 : vector<2x128xf32>
    %510 = arith.divf %508, %509 : vector<2x128xf32>
    %511 = vector.extract_strided_slice %497 {offsets = [0, 64], sizes = [2, 32], strides = [1, 1]} : vector<2x128xf32> to vector<2x32xf32>
    %512 = math.tanh %511 : vector<2x32xf32>
    %513 = vector.extract_strided_slice %500 {offsets = [0, 64], sizes = [2, 32], strides = [1, 1]} : vector<2x128xf32> to vector<2x32xf32>
    %514 = math.tanh %513 : vector<2x32xf32>
    %515 = vector.extract_strided_slice %505 {offsets = [0, 32], sizes = [2, 32], strides = [1, 1]} : vector<2x128xf32> to vector<2x32xf32>
    %516 = arith.mulf %515, %477 : vector<2x32xf32>
    %517 = vector.extract_strided_slice %505 {offsets = [0, 0], sizes = [2, 32], strides = [1, 1]} : vector<2x128xf32> to vector<2x32xf32>
    %518 = arith.mulf %517, %512 : vector<2x32xf32>
    %519 = arith.addf %516, %518 : vector<2x32xf32>
    %520 = vector.extract_strided_slice %505 {offsets = [0, 96], sizes = [2, 32], strides = [1, 1]} : vector<2x128xf32> to vector<2x32xf32>
    %521 = math.tanh %519 : vector<2x32xf32>
    %522 = arith.mulf %520, %521 : vector<2x32xf32>
    %523 = vector.extract_strided_slice %510 {offsets = [0, 32], sizes = [2, 32], strides = [1, 1]} : vector<2x128xf32> to vector<2x32xf32>
    %524 = arith.mulf %523, %483 : vector<2x32xf32>
    %525 = vector.extract_strided_slice %510 {offsets = [0, 0], sizes = [2, 32], strides = [1, 1]} : vector<2x128xf32> to vector<2x32xf32>
    %526 = arith.mulf %525, %514 : vector<2x32xf32>
    %527 = arith.addf %524, %526 : vector<2x32xf32>
    %528 = vector.extract_strided_slice %510 {offsets = [0, 96], sizes = [2, 32], strides = [1, 1]} : vector<2x128xf32> to vector<2x32xf32>
    %529 = math.tanh %527 : vector<2x32xf32>
    %530 = arith.mulf %528, %529 : vector<2x32xf32>
    %c8_i32_41 = arith.constant 8 : i32
    %531 = vector.broadcast %c8_i32_41 : i32 to vector<2x1xi32>
    %532 = arith.cmpi sgt, %0, %531 : vector<2x1xi32>
    %c7_i32_42 = arith.constant 7 : i32
    %533 = vector.broadcast %c7_i32_42 : i32 to vector<2x1xi32>
    %534 = arith.cmpi sgt, %0, %533 : vector<2x1xi32>
    %535 = vector.shape_cast %532 : vector<2x1xi1> to vector<2x1xi1>
    %536 = vector.broadcast %535 : vector<2x1xi1> to vector<2x32xi1>
    %537 = arith.select %536, %519, %477 : vector<2x32xi1>, vector<2x32xf32>
    %538 = vector.shape_cast %532 : vector<2x1xi1> to vector<2x1xi1>
    %539 = vector.broadcast %538 : vector<2x1xi1> to vector<2x32xi1>
    %540 = arith.select %539, %522, %480 : vector<2x32xi1>, vector<2x32xf32>
    %541 = vector.shape_cast %534 : vector<2x1xi1> to vector<2x1xi1>
    %542 = vector.broadcast %541 : vector<2x1xi1> to vector<2x32xi1>
    %543 = arith.select %542, %527, %483 : vector<2x32xi1>, vector<2x32xf32>
    %544 = vector.shape_cast %534 : vector<2x1xi1> to vector<2x1xi1>
    %545 = vector.broadcast %544 : vector<2x1xi1> to vector<2x32xi1>
    %546 = arith.select %545, %530, %486 : vector<2x32xi1>, vector<2x32xf32>
    %547 = vector.shape_cast %532 : vector<2x1xi1> to vector<2x1xi1>
    %548 = vector.broadcast %547 : vector<2x1xi1> to vector<2x32xi1>
    %549 = arith.select %548, %522, %12 : vector<2x32xi1>, vector<2x32xf32>
    %550 = vector.shape_cast %534 : vector<2x1xi1> to vector<2x1xi1>
    %551 = vector.broadcast %550 : vector<2x1xi1> to vector<2x32xi1>
    %552 = arith.select %551, %530, %12 : vector<2x32xi1>, vector<2x32xf32>
    %553 = tpu.concatenate %540, %546 in 1 : vector<2x32xf32>, vector<2x32xf32> -> vector<2x64xf32>
    %cst_43 = arith.constant dense<0.000000e+00> : vector<2x256xf32>
    %554 = tpu.matmul %553, %7, %cst_43 {dimension_numbers = #tpu.dot_dimension_numbers<[1], [0], [0], [1], [0, 0, 1, 1], [], []>} : vector<2x64xf32>, vector<64x256xf32>, vector<2x256xf32> -> vector<2x256xf32>
    %555 = vector.extract_strided_slice %6 {offsets = [18, 0], sizes = [2, 128], strides = [1, 1]} : vector<32x256xf32> to vector<2x128xf32>
    %556 = vector.extract_strided_slice %554 {offsets = [0, 0], sizes = [2, 128], strides = [1, 1]} : vector<2x256xf32> to vector<2x128xf32>
    %557 = arith.addf %555, %556 : vector<2x128xf32>
    %558 = vector.extract_strided_slice %6 {offsets = [12, 128], sizes = [2, 128], strides = [1, 1]} : vector<32x256xf32> to vector<2x128xf32>
    %559 = vector.extract_strided_slice %554 {offsets = [0, 128], sizes = [2, 128], strides = [1, 1]} : vector<2x256xf32> to vector<2x128xf32>
    %560 = arith.addf %558, %559 : vector<2x128xf32>
    %561 = arith.negf %557 : vector<2x128xf32>
    %562 = math.exp %561 : vector<2x128xf32>
    %cst_44 = arith.constant 1.000000e+00 : f32
    %563 = vector.broadcast %cst_44 : f32 to vector<2x128xf32>
    %564 = arith.addf %563, %562 : vector<2x128xf32>
    %565 = arith.divf %563, %564 : vector<2x128xf32>
    %566 = arith.negf %560 : vector<2x128xf32>
    %567 = math.exp %566 : vector<2x128xf32>
    %cst_45 = arith.constant 1.000000e+00 : f32
    %568 = vector.broadcast %cst_45 : f32 to vector<2x128xf32>
    %569 = arith.addf %568, %567 : vector<2x128xf32>
    %570 = arith.divf %568, %569 : vector<2x128xf32>
    %571 = vector.extract_strided_slice %557 {offsets = [0, 64], sizes = [2, 32], strides = [1, 1]} : vector<2x128xf32> to vector<2x32xf32>
    %572 = math.tanh %571 : vector<2x32xf32>
    %573 = vector.extract_strided_slice %560 {offsets = [0, 64], sizes = [2, 32], strides = [1, 1]} : vector<2x128xf32> to vector<2x32xf32>
    %574 = math.tanh %573 : vector<2x32xf32>
    %575 = vector.extract_strided_slice %565 {offsets = [0, 32], sizes = [2, 32], strides = [1, 1]} : vector<2x128xf32> to vector<2x32xf32>
    %576 = arith.mulf %575, %537 : vector<2x32xf32>
    %577 = vector.extract_strided_slice %565 {offsets = [0, 0], sizes = [2, 32], strides = [1, 1]} : vector<2x128xf32> to vector<2x32xf32>
    %578 = arith.mulf %577, %572 : vector<2x32xf32>
    %579 = arith.addf %576, %578 : vector<2x32xf32>
    %580 = vector.extract_strided_slice %565 {offsets = [0, 96], sizes = [2, 32], strides = [1, 1]} : vector<2x128xf32> to vector<2x32xf32>
    %581 = math.tanh %579 : vector<2x32xf32>
    %582 = arith.mulf %580, %581 : vector<2x32xf32>
    %583 = vector.extract_strided_slice %570 {offsets = [0, 32], sizes = [2, 32], strides = [1, 1]} : vector<2x128xf32> to vector<2x32xf32>
    %584 = arith.mulf %583, %543 : vector<2x32xf32>
    %585 = vector.extract_strided_slice %570 {offsets = [0, 0], sizes = [2, 32], strides = [1, 1]} : vector<2x128xf32> to vector<2x32xf32>
    %586 = arith.mulf %585, %574 : vector<2x32xf32>
    %587 = arith.addf %584, %586 : vector<2x32xf32>
    %588 = vector.extract_strided_slice %570 {offsets = [0, 96], sizes = [2, 32], strides = [1, 1]} : vector<2x128xf32> to vector<2x32xf32>
    %589 = math.tanh %587 : vector<2x32xf32>
    %590 = arith.mulf %588, %589 : vector<2x32xf32>
    %c9_i32_46 = arith.constant 9 : i32
    %591 = vector.broadcast %c9_i32_46 : i32 to vector<2x1xi32>
    %592 = arith.cmpi sgt, %0, %591 : vector<2x1xi32>
    %c6_i32_47 = arith.constant 6 : i32
    %593 = vector.broadcast %c6_i32_47 : i32 to vector<2x1xi32>
    %594 = arith.cmpi sgt, %0, %593 : vector<2x1xi32>
    %595 = vector.shape_cast %592 : vector<2x1xi1> to vector<2x1xi1>
    %596 = vector.broadcast %595 : vector<2x1xi1> to vector<2x32xi1>
    %597 = arith.select %596, %579, %537 : vector<2x32xi1>, vector<2x32xf32>
    %598 = vector.shape_cast %592 : vector<2x1xi1> to vector<2x1xi1>
    %599 = vector.broadcast %598 : vector<2x1xi1> to vector<2x32xi1>
    %600 = arith.select %599, %582, %540 : vector<2x32xi1>, vector<2x32xf32>
    %601 = vector.shape_cast %594 : vector<2x1xi1> to vector<2x1xi1>
    %602 = vector.broadcast %601 : vector<2x1xi1> to vector<2x32xi1>
    %603 = arith.select %602, %587, %543 : vector<2x32xi1>, vector<2x32xf32>
    %604 = vector.shape_cast %594 : vector<2x1xi1> to vector<2x1xi1>
    %605 = vector.broadcast %604 : vector<2x1xi1> to vector<2x32xi1>
    %606 = arith.select %605, %590, %546 : vector<2x32xi1>, vector<2x32xf32>
    %607 = vector.shape_cast %592 : vector<2x1xi1> to vector<2x1xi1>
    %608 = vector.broadcast %607 : vector<2x1xi1> to vector<2x32xi1>
    %609 = arith.select %608, %582, %12 : vector<2x32xi1>, vector<2x32xf32>
    %610 = vector.shape_cast %594 : vector<2x1xi1> to vector<2x1xi1>
    %611 = vector.broadcast %610 : vector<2x1xi1> to vector<2x32xi1>
    %612 = arith.select %611, %590, %12 : vector<2x32xi1>, vector<2x32xf32>
    %613 = tpu.concatenate %600, %606 in 1 : vector<2x32xf32>, vector<2x32xf32> -> vector<2x64xf32>
    %cst_48 = arith.constant dense<0.000000e+00> : vector<2x256xf32>
    %614 = tpu.matmul %613, %7, %cst_48 {dimension_numbers = #tpu.dot_dimension_numbers<[1], [0], [0], [1], [0, 0, 1, 1], [], []>} : vector<2x64xf32>, vector<64x256xf32>, vector<2x256xf32> -> vector<2x256xf32>
    %615 = vector.extract_strided_slice %6 {offsets = [20, 0], sizes = [2, 128], strides = [1, 1]} : vector<32x256xf32> to vector<2x128xf32>
    %616 = vector.extract_strided_slice %614 {offsets = [0, 0], sizes = [2, 128], strides = [1, 1]} : vector<2x256xf32> to vector<2x128xf32>
    %617 = arith.addf %615, %616 : vector<2x128xf32>
    %618 = vector.extract_strided_slice %6 {offsets = [10, 128], sizes = [2, 128], strides = [1, 1]} : vector<32x256xf32> to vector<2x128xf32>
    %619 = vector.extract_strided_slice %614 {offsets = [0, 128], sizes = [2, 128], strides = [1, 1]} : vector<2x256xf32> to vector<2x128xf32>
    %620 = arith.addf %618, %619 : vector<2x128xf32>
    %621 = arith.negf %617 : vector<2x128xf32>
    %622 = math.exp %621 : vector<2x128xf32>
    %cst_49 = arith.constant 1.000000e+00 : f32
    %623 = vector.broadcast %cst_49 : f32 to vector<2x128xf32>
    %624 = arith.addf %623, %622 : vector<2x128xf32>
    %625 = arith.divf %623, %624 : vector<2x128xf32>
    %626 = arith.negf %620 : vector<2x128xf32>
    %627 = math.exp %626 : vector<2x128xf32>
    %cst_50 = arith.constant 1.000000e+00 : f32
    %628 = vector.broadcast %cst_50 : f32 to vector<2x128xf32>
    %629 = arith.addf %628, %627 : vector<2x128xf32>
    %630 = arith.divf %628, %629 : vector<2x128xf32>
    %631 = vector.extract_strided_slice %617 {offsets = [0, 64], sizes = [2, 32], strides = [1, 1]} : vector<2x128xf32> to vector<2x32xf32>
    %632 = math.tanh %631 : vector<2x32xf32>
    %633 = vector.extract_strided_slice %620 {offsets = [0, 64], sizes = [2, 32], strides = [1, 1]} : vector<2x128xf32> to vector<2x32xf32>
    %634 = math.tanh %633 : vector<2x32xf32>
    %635 = vector.extract_strided_slice %625 {offsets = [0, 32], sizes = [2, 32], strides = [1, 1]} : vector<2x128xf32> to vector<2x32xf32>
    %636 = arith.mulf %635, %597 : vector<2x32xf32>
    %637 = vector.extract_strided_slice %625 {offsets = [0, 0], sizes = [2, 32], strides = [1, 1]} : vector<2x128xf32> to vector<2x32xf32>
    %638 = arith.mulf %637, %632 : vector<2x32xf32>
    %639 = arith.addf %636, %638 : vector<2x32xf32>
    %640 = vector.extract_strided_slice %625 {offsets = [0, 96], sizes = [2, 32], strides = [1, 1]} : vector<2x128xf32> to vector<2x32xf32>
    %641 = math.tanh %639 : vector<2x32xf32>
    %642 = arith.mulf %640, %641 : vector<2x32xf32>
    %643 = vector.extract_strided_slice %630 {offsets = [0, 32], sizes = [2, 32], strides = [1, 1]} : vector<2x128xf32> to vector<2x32xf32>
    %644 = arith.mulf %643, %603 : vector<2x32xf32>
    %645 = vector.extract_strided_slice %630 {offsets = [0, 0], sizes = [2, 32], strides = [1, 1]} : vector<2x128xf32> to vector<2x32xf32>
    %646 = arith.mulf %645, %634 : vector<2x32xf32>
    %647 = arith.addf %644, %646 : vector<2x32xf32>
    %648 = vector.extract_strided_slice %630 {offsets = [0, 96], sizes = [2, 32], strides = [1, 1]} : vector<2x128xf32> to vector<2x32xf32>
    %649 = math.tanh %647 : vector<2x32xf32>
    %650 = arith.mulf %648, %649 : vector<2x32xf32>
    %c10_i32_51 = arith.constant 10 : i32
    %651 = vector.broadcast %c10_i32_51 : i32 to vector<2x1xi32>
    %652 = arith.cmpi sgt, %0, %651 : vector<2x1xi32>
    %c5_i32_52 = arith.constant 5 : i32
    %653 = vector.broadcast %c5_i32_52 : i32 to vector<2x1xi32>
    %654 = arith.cmpi sgt, %0, %653 : vector<2x1xi32>
    %655 = vector.shape_cast %652 : vector<2x1xi1> to vector<2x1xi1>
    %656 = vector.broadcast %655 : vector<2x1xi1> to vector<2x32xi1>
    %657 = arith.select %656, %639, %597 : vector<2x32xi1>, vector<2x32xf32>
    %658 = vector.shape_cast %652 : vector<2x1xi1> to vector<2x1xi1>
    %659 = vector.broadcast %658 : vector<2x1xi1> to vector<2x32xi1>
    %660 = arith.select %659, %642, %600 : vector<2x32xi1>, vector<2x32xf32>
    %661 = vector.shape_cast %654 : vector<2x1xi1> to vector<2x1xi1>
    %662 = vector.broadcast %661 : vector<2x1xi1> to vector<2x32xi1>
    %663 = arith.select %662, %647, %603 : vector<2x32xi1>, vector<2x32xf32>
    %664 = vector.shape_cast %654 : vector<2x1xi1> to vector<2x1xi1>
    %665 = vector.broadcast %664 : vector<2x1xi1> to vector<2x32xi1>
    %666 = arith.select %665, %650, %606 : vector<2x32xi1>, vector<2x32xf32>
    %667 = vector.shape_cast %652 : vector<2x1xi1> to vector<2x1xi1>
    %668 = vector.broadcast %667 : vector<2x1xi1> to vector<2x32xi1>
    %669 = arith.select %668, %642, %12 : vector<2x32xi1>, vector<2x32xf32>
    %670 = vector.shape_cast %654 : vector<2x1xi1> to vector<2x1xi1>
    %671 = vector.broadcast %670 : vector<2x1xi1> to vector<2x32xi1>
    %672 = arith.select %671, %650, %12 : vector<2x32xi1>, vector<2x32xf32>
    %673 = tpu.concatenate %660, %666 in 1 : vector<2x32xf32>, vector<2x32xf32> -> vector<2x64xf32>
    %cst_53 = arith.constant dense<0.000000e+00> : vector<2x256xf32>
    %674 = tpu.matmul %673, %7, %cst_53 {dimension_numbers = #tpu.dot_dimension_numbers<[1], [0], [0], [1], [0, 0, 1, 1], [], []>} : vector<2x64xf32>, vector<64x256xf32>, vector<2x256xf32> -> vector<2x256xf32>
    %675 = vector.extract_strided_slice %6 {offsets = [22, 0], sizes = [2, 128], strides = [1, 1]} : vector<32x256xf32> to vector<2x128xf32>
    %676 = vector.extract_strided_slice %674 {offsets = [0, 0], sizes = [2, 128], strides = [1, 1]} : vector<2x256xf32> to vector<2x128xf32>
    %677 = arith.addf %675, %676 : vector<2x128xf32>
    %678 = vector.extract_strided_slice %6 {offsets = [8, 128], sizes = [2, 128], strides = [1, 1]} : vector<32x256xf32> to vector<2x128xf32>
    %679 = vector.extract_strided_slice %674 {offsets = [0, 128], sizes = [2, 128], strides = [1, 1]} : vector<2x256xf32> to vector<2x128xf32>
    %680 = arith.addf %678, %679 : vector<2x128xf32>
    %681 = arith.negf %677 : vector<2x128xf32>
    %682 = math.exp %681 : vector<2x128xf32>
    %cst_54 = arith.constant 1.000000e+00 : f32
    %683 = vector.broadcast %cst_54 : f32 to vector<2x128xf32>
    %684 = arith.addf %683, %682 : vector<2x128xf32>
    %685 = arith.divf %683, %684 : vector<2x128xf32>
    %686 = arith.negf %680 : vector<2x128xf32>
    %687 = math.exp %686 : vector<2x128xf32>
    %cst_55 = arith.constant 1.000000e+00 : f32
    %688 = vector.broadcast %cst_55 : f32 to vector<2x128xf32>
    %689 = arith.addf %688, %687 : vector<2x128xf32>
    %690 = arith.divf %688, %689 : vector<2x128xf32>
    %691 = vector.extract_strided_slice %677 {offsets = [0, 64], sizes = [2, 32], strides = [1, 1]} : vector<2x128xf32> to vector<2x32xf32>
    %692 = math.tanh %691 : vector<2x32xf32>
    %693 = vector.extract_strided_slice %680 {offsets = [0, 64], sizes = [2, 32], strides = [1, 1]} : vector<2x128xf32> to vector<2x32xf32>
    %694 = math.tanh %693 : vector<2x32xf32>
    %695 = vector.extract_strided_slice %685 {offsets = [0, 32], sizes = [2, 32], strides = [1, 1]} : vector<2x128xf32> to vector<2x32xf32>
    %696 = arith.mulf %695, %657 : vector<2x32xf32>
    %697 = vector.extract_strided_slice %685 {offsets = [0, 0], sizes = [2, 32], strides = [1, 1]} : vector<2x128xf32> to vector<2x32xf32>
    %698 = arith.mulf %697, %692 : vector<2x32xf32>
    %699 = arith.addf %696, %698 : vector<2x32xf32>
    %700 = vector.extract_strided_slice %685 {offsets = [0, 96], sizes = [2, 32], strides = [1, 1]} : vector<2x128xf32> to vector<2x32xf32>
    %701 = math.tanh %699 : vector<2x32xf32>
    %702 = arith.mulf %700, %701 : vector<2x32xf32>
    %703 = vector.extract_strided_slice %690 {offsets = [0, 32], sizes = [2, 32], strides = [1, 1]} : vector<2x128xf32> to vector<2x32xf32>
    %704 = arith.mulf %703, %663 : vector<2x32xf32>
    %705 = vector.extract_strided_slice %690 {offsets = [0, 0], sizes = [2, 32], strides = [1, 1]} : vector<2x128xf32> to vector<2x32xf32>
    %706 = arith.mulf %705, %694 : vector<2x32xf32>
    %707 = arith.addf %704, %706 : vector<2x32xf32>
    %708 = vector.extract_strided_slice %690 {offsets = [0, 96], sizes = [2, 32], strides = [1, 1]} : vector<2x128xf32> to vector<2x32xf32>
    %709 = math.tanh %707 : vector<2x32xf32>
    %710 = arith.mulf %708, %709 : vector<2x32xf32>
    %c11_i32_56 = arith.constant 11 : i32
    %711 = vector.broadcast %c11_i32_56 : i32 to vector<2x1xi32>
    %712 = arith.cmpi sgt, %0, %711 : vector<2x1xi32>
    %c4_i32_57 = arith.constant 4 : i32
    %713 = vector.broadcast %c4_i32_57 : i32 to vector<2x1xi32>
    %714 = arith.cmpi sgt, %0, %713 : vector<2x1xi32>
    %715 = vector.shape_cast %712 : vector<2x1xi1> to vector<2x1xi1>
    %716 = vector.broadcast %715 : vector<2x1xi1> to vector<2x32xi1>
    %717 = arith.select %716, %699, %657 : vector<2x32xi1>, vector<2x32xf32>
    %718 = vector.shape_cast %712 : vector<2x1xi1> to vector<2x1xi1>
    %719 = vector.broadcast %718 : vector<2x1xi1> to vector<2x32xi1>
    %720 = arith.select %719, %702, %660 : vector<2x32xi1>, vector<2x32xf32>
    %721 = vector.shape_cast %714 : vector<2x1xi1> to vector<2x1xi1>
    %722 = vector.broadcast %721 : vector<2x1xi1> to vector<2x32xi1>
    %723 = arith.select %722, %707, %663 : vector<2x32xi1>, vector<2x32xf32>
    %724 = vector.shape_cast %714 : vector<2x1xi1> to vector<2x1xi1>
    %725 = vector.broadcast %724 : vector<2x1xi1> to vector<2x32xi1>
    %726 = arith.select %725, %710, %666 : vector<2x32xi1>, vector<2x32xf32>
    %727 = vector.shape_cast %712 : vector<2x1xi1> to vector<2x1xi1>
    %728 = vector.broadcast %727 : vector<2x1xi1> to vector<2x32xi1>
    %729 = arith.select %728, %702, %12 : vector<2x32xi1>, vector<2x32xf32>
    %730 = vector.shape_cast %714 : vector<2x1xi1> to vector<2x1xi1>
    %731 = vector.broadcast %730 : vector<2x1xi1> to vector<2x32xi1>
    %732 = arith.select %731, %710, %12 : vector<2x32xi1>, vector<2x32xf32>
    %733 = tpu.concatenate %720, %726 in 1 : vector<2x32xf32>, vector<2x32xf32> -> vector<2x64xf32>
    %cst_58 = arith.constant dense<0.000000e+00> : vector<2x256xf32>
    %734 = tpu.matmul %733, %7, %cst_58 {dimension_numbers = #tpu.dot_dimension_numbers<[1], [0], [0], [1], [0, 0, 1, 1], [], []>} : vector<2x64xf32>, vector<64x256xf32>, vector<2x256xf32> -> vector<2x256xf32>
    %735 = vector.extract_strided_slice %6 {offsets = [24, 0], sizes = [2, 128], strides = [1, 1]} : vector<32x256xf32> to vector<2x128xf32>
    %736 = vector.extract_strided_slice %734 {offsets = [0, 0], sizes = [2, 128], strides = [1, 1]} : vector<2x256xf32> to vector<2x128xf32>
    %737 = arith.addf %735, %736 : vector<2x128xf32>
    %738 = vector.extract_strided_slice %6 {offsets = [6, 128], sizes = [2, 128], strides = [1, 1]} : vector<32x256xf32> to vector<2x128xf32>
    %739 = vector.extract_strided_slice %734 {offsets = [0, 128], sizes = [2, 128], strides = [1, 1]} : vector<2x256xf32> to vector<2x128xf32>
    %740 = arith.addf %738, %739 : vector<2x128xf32>
    %741 = arith.negf %737 : vector<2x128xf32>
    %742 = math.exp %741 : vector<2x128xf32>
    %cst_59 = arith.constant 1.000000e+00 : f32
    %743 = vector.broadcast %cst_59 : f32 to vector<2x128xf32>
    %744 = arith.addf %743, %742 : vector<2x128xf32>
    %745 = arith.divf %743, %744 : vector<2x128xf32>
    %746 = arith.negf %740 : vector<2x128xf32>
    %747 = math.exp %746 : vector<2x128xf32>
    %cst_60 = arith.constant 1.000000e+00 : f32
    %748 = vector.broadcast %cst_60 : f32 to vector<2x128xf32>
    %749 = arith.addf %748, %747 : vector<2x128xf32>
    %750 = arith.divf %748, %749 : vector<2x128xf32>
    %751 = vector.extract_strided_slice %737 {offsets = [0, 64], sizes = [2, 32], strides = [1, 1]} : vector<2x128xf32> to vector<2x32xf32>
    %752 = math.tanh %751 : vector<2x32xf32>
    %753 = vector.extract_strided_slice %740 {offsets = [0, 64], sizes = [2, 32], strides = [1, 1]} : vector<2x128xf32> to vector<2x32xf32>
    %754 = math.tanh %753 : vector<2x32xf32>
    %755 = vector.extract_strided_slice %745 {offsets = [0, 32], sizes = [2, 32], strides = [1, 1]} : vector<2x128xf32> to vector<2x32xf32>
    %756 = arith.mulf %755, %717 : vector<2x32xf32>
    %757 = vector.extract_strided_slice %745 {offsets = [0, 0], sizes = [2, 32], strides = [1, 1]} : vector<2x128xf32> to vector<2x32xf32>
    %758 = arith.mulf %757, %752 : vector<2x32xf32>
    %759 = arith.addf %756, %758 : vector<2x32xf32>
    %760 = vector.extract_strided_slice %745 {offsets = [0, 96], sizes = [2, 32], strides = [1, 1]} : vector<2x128xf32> to vector<2x32xf32>
    %761 = math.tanh %759 : vector<2x32xf32>
    %762 = arith.mulf %760, %761 : vector<2x32xf32>
    %763 = vector.extract_strided_slice %750 {offsets = [0, 32], sizes = [2, 32], strides = [1, 1]} : vector<2x128xf32> to vector<2x32xf32>
    %764 = arith.mulf %763, %723 : vector<2x32xf32>
    %765 = vector.extract_strided_slice %750 {offsets = [0, 0], sizes = [2, 32], strides = [1, 1]} : vector<2x128xf32> to vector<2x32xf32>
    %766 = arith.mulf %765, %754 : vector<2x32xf32>
    %767 = arith.addf %764, %766 : vector<2x32xf32>
    %768 = vector.extract_strided_slice %750 {offsets = [0, 96], sizes = [2, 32], strides = [1, 1]} : vector<2x128xf32> to vector<2x32xf32>
    %769 = math.tanh %767 : vector<2x32xf32>
    %770 = arith.mulf %768, %769 : vector<2x32xf32>
    %c12_i32_61 = arith.constant 12 : i32
    %771 = vector.broadcast %c12_i32_61 : i32 to vector<2x1xi32>
    %772 = arith.cmpi sgt, %0, %771 : vector<2x1xi32>
    %c3_i32_62 = arith.constant 3 : i32
    %773 = vector.broadcast %c3_i32_62 : i32 to vector<2x1xi32>
    %774 = arith.cmpi sgt, %0, %773 : vector<2x1xi32>
    %775 = vector.shape_cast %772 : vector<2x1xi1> to vector<2x1xi1>
    %776 = vector.broadcast %775 : vector<2x1xi1> to vector<2x32xi1>
    %777 = arith.select %776, %759, %717 : vector<2x32xi1>, vector<2x32xf32>
    %778 = vector.shape_cast %772 : vector<2x1xi1> to vector<2x1xi1>
    %779 = vector.broadcast %778 : vector<2x1xi1> to vector<2x32xi1>
    %780 = arith.select %779, %762, %720 : vector<2x32xi1>, vector<2x32xf32>
    %781 = vector.shape_cast %774 : vector<2x1xi1> to vector<2x1xi1>
    %782 = vector.broadcast %781 : vector<2x1xi1> to vector<2x32xi1>
    %783 = arith.select %782, %767, %723 : vector<2x32xi1>, vector<2x32xf32>
    %784 = vector.shape_cast %774 : vector<2x1xi1> to vector<2x1xi1>
    %785 = vector.broadcast %784 : vector<2x1xi1> to vector<2x32xi1>
    %786 = arith.select %785, %770, %726 : vector<2x32xi1>, vector<2x32xf32>
    %787 = vector.shape_cast %772 : vector<2x1xi1> to vector<2x1xi1>
    %788 = vector.broadcast %787 : vector<2x1xi1> to vector<2x32xi1>
    %789 = arith.select %788, %762, %12 : vector<2x32xi1>, vector<2x32xf32>
    %790 = vector.shape_cast %774 : vector<2x1xi1> to vector<2x1xi1>
    %791 = vector.broadcast %790 : vector<2x1xi1> to vector<2x32xi1>
    %792 = arith.select %791, %770, %12 : vector<2x32xi1>, vector<2x32xf32>
    %793 = tpu.concatenate %780, %786 in 1 : vector<2x32xf32>, vector<2x32xf32> -> vector<2x64xf32>
    %cst_63 = arith.constant dense<0.000000e+00> : vector<2x256xf32>
    %794 = tpu.matmul %793, %7, %cst_63 {dimension_numbers = #tpu.dot_dimension_numbers<[1], [0], [0], [1], [0, 0, 1, 1], [], []>} : vector<2x64xf32>, vector<64x256xf32>, vector<2x256xf32> -> vector<2x256xf32>
    %795 = vector.extract_strided_slice %6 {offsets = [26, 0], sizes = [2, 128], strides = [1, 1]} : vector<32x256xf32> to vector<2x128xf32>
    %796 = vector.extract_strided_slice %794 {offsets = [0, 0], sizes = [2, 128], strides = [1, 1]} : vector<2x256xf32> to vector<2x128xf32>
    %797 = arith.addf %795, %796 : vector<2x128xf32>
    %798 = vector.extract_strided_slice %6 {offsets = [4, 128], sizes = [2, 128], strides = [1, 1]} : vector<32x256xf32> to vector<2x128xf32>
    %799 = vector.extract_strided_slice %794 {offsets = [0, 128], sizes = [2, 128], strides = [1, 1]} : vector<2x256xf32> to vector<2x128xf32>
    %800 = arith.addf %798, %799 : vector<2x128xf32>
    %801 = arith.negf %797 : vector<2x128xf32>
    %802 = math.exp %801 : vector<2x128xf32>
    %cst_64 = arith.constant 1.000000e+00 : f32
    %803 = vector.broadcast %cst_64 : f32 to vector<2x128xf32>
    %804 = arith.addf %803, %802 : vector<2x128xf32>
    %805 = arith.divf %803, %804 : vector<2x128xf32>
    %806 = arith.negf %800 : vector<2x128xf32>
    %807 = math.exp %806 : vector<2x128xf32>
    %cst_65 = arith.constant 1.000000e+00 : f32
    %808 = vector.broadcast %cst_65 : f32 to vector<2x128xf32>
    %809 = arith.addf %808, %807 : vector<2x128xf32>
    %810 = arith.divf %808, %809 : vector<2x128xf32>
    %811 = vector.extract_strided_slice %797 {offsets = [0, 64], sizes = [2, 32], strides = [1, 1]} : vector<2x128xf32> to vector<2x32xf32>
    %812 = math.tanh %811 : vector<2x32xf32>
    %813 = vector.extract_strided_slice %800 {offsets = [0, 64], sizes = [2, 32], strides = [1, 1]} : vector<2x128xf32> to vector<2x32xf32>
    %814 = math.tanh %813 : vector<2x32xf32>
    %815 = vector.extract_strided_slice %805 {offsets = [0, 32], sizes = [2, 32], strides = [1, 1]} : vector<2x128xf32> to vector<2x32xf32>
    %816 = arith.mulf %815, %777 : vector<2x32xf32>
    %817 = vector.extract_strided_slice %805 {offsets = [0, 0], sizes = [2, 32], strides = [1, 1]} : vector<2x128xf32> to vector<2x32xf32>
    %818 = arith.mulf %817, %812 : vector<2x32xf32>
    %819 = arith.addf %816, %818 : vector<2x32xf32>
    %820 = vector.extract_strided_slice %805 {offsets = [0, 96], sizes = [2, 32], strides = [1, 1]} : vector<2x128xf32> to vector<2x32xf32>
    %821 = math.tanh %819 : vector<2x32xf32>
    %822 = arith.mulf %820, %821 : vector<2x32xf32>
    %823 = vector.extract_strided_slice %810 {offsets = [0, 32], sizes = [2, 32], strides = [1, 1]} : vector<2x128xf32> to vector<2x32xf32>
    %824 = arith.mulf %823, %783 : vector<2x32xf32>
    %825 = vector.extract_strided_slice %810 {offsets = [0, 0], sizes = [2, 32], strides = [1, 1]} : vector<2x128xf32> to vector<2x32xf32>
    %826 = arith.mulf %825, %814 : vector<2x32xf32>
    %827 = arith.addf %824, %826 : vector<2x32xf32>
    %828 = vector.extract_strided_slice %810 {offsets = [0, 96], sizes = [2, 32], strides = [1, 1]} : vector<2x128xf32> to vector<2x32xf32>
    %829 = math.tanh %827 : vector<2x32xf32>
    %830 = arith.mulf %828, %829 : vector<2x32xf32>
    %c13_i32_66 = arith.constant 13 : i32
    %831 = vector.broadcast %c13_i32_66 : i32 to vector<2x1xi32>
    %832 = arith.cmpi sgt, %0, %831 : vector<2x1xi32>
    %c2_i32_67 = arith.constant 2 : i32
    %833 = vector.broadcast %c2_i32_67 : i32 to vector<2x1xi32>
    %834 = arith.cmpi sgt, %0, %833 : vector<2x1xi32>
    %835 = vector.shape_cast %832 : vector<2x1xi1> to vector<2x1xi1>
    %836 = vector.broadcast %835 : vector<2x1xi1> to vector<2x32xi1>
    %837 = arith.select %836, %819, %777 : vector<2x32xi1>, vector<2x32xf32>
    %838 = vector.shape_cast %832 : vector<2x1xi1> to vector<2x1xi1>
    %839 = vector.broadcast %838 : vector<2x1xi1> to vector<2x32xi1>
    %840 = arith.select %839, %822, %780 : vector<2x32xi1>, vector<2x32xf32>
    %841 = vector.shape_cast %834 : vector<2x1xi1> to vector<2x1xi1>
    %842 = vector.broadcast %841 : vector<2x1xi1> to vector<2x32xi1>
    %843 = arith.select %842, %827, %783 : vector<2x32xi1>, vector<2x32xf32>
    %844 = vector.shape_cast %834 : vector<2x1xi1> to vector<2x1xi1>
    %845 = vector.broadcast %844 : vector<2x1xi1> to vector<2x32xi1>
    %846 = arith.select %845, %830, %786 : vector<2x32xi1>, vector<2x32xf32>
    %847 = vector.shape_cast %832 : vector<2x1xi1> to vector<2x1xi1>
    %848 = vector.broadcast %847 : vector<2x1xi1> to vector<2x32xi1>
    %849 = arith.select %848, %822, %12 : vector<2x32xi1>, vector<2x32xf32>
    %850 = vector.shape_cast %834 : vector<2x1xi1> to vector<2x1xi1>
    %851 = vector.broadcast %850 : vector<2x1xi1> to vector<2x32xi1>
    %852 = arith.select %851, %830, %12 : vector<2x32xi1>, vector<2x32xf32>
    %853 = tpu.concatenate %840, %846 in 1 : vector<2x32xf32>, vector<2x32xf32> -> vector<2x64xf32>
    %cst_68 = arith.constant dense<0.000000e+00> : vector<2x256xf32>
    %854 = tpu.matmul %853, %7, %cst_68 {dimension_numbers = #tpu.dot_dimension_numbers<[1], [0], [0], [1], [0, 0, 1, 1], [], []>} : vector<2x64xf32>, vector<64x256xf32>, vector<2x256xf32> -> vector<2x256xf32>
    %855 = vector.extract_strided_slice %6 {offsets = [28, 0], sizes = [2, 128], strides = [1, 1]} : vector<32x256xf32> to vector<2x128xf32>
    %856 = vector.extract_strided_slice %854 {offsets = [0, 0], sizes = [2, 128], strides = [1, 1]} : vector<2x256xf32> to vector<2x128xf32>
    %857 = arith.addf %855, %856 : vector<2x128xf32>
    %858 = vector.extract_strided_slice %6 {offsets = [2, 128], sizes = [2, 128], strides = [1, 1]} : vector<32x256xf32> to vector<2x128xf32>
    %859 = vector.extract_strided_slice %854 {offsets = [0, 128], sizes = [2, 128], strides = [1, 1]} : vector<2x256xf32> to vector<2x128xf32>
    %860 = arith.addf %858, %859 : vector<2x128xf32>
    %861 = arith.negf %857 : vector<2x128xf32>
    %862 = math.exp %861 : vector<2x128xf32>
    %cst_69 = arith.constant 1.000000e+00 : f32
    %863 = vector.broadcast %cst_69 : f32 to vector<2x128xf32>
    %864 = arith.addf %863, %862 : vector<2x128xf32>
    %865 = arith.divf %863, %864 : vector<2x128xf32>
    %866 = arith.negf %860 : vector<2x128xf32>
    %867 = math.exp %866 : vector<2x128xf32>
    %cst_70 = arith.constant 1.000000e+00 : f32
    %868 = vector.broadcast %cst_70 : f32 to vector<2x128xf32>
    %869 = arith.addf %868, %867 : vector<2x128xf32>
    %870 = arith.divf %868, %869 : vector<2x128xf32>
    %871 = vector.extract_strided_slice %857 {offsets = [0, 64], sizes = [2, 32], strides = [1, 1]} : vector<2x128xf32> to vector<2x32xf32>
    %872 = math.tanh %871 : vector<2x32xf32>
    %873 = vector.extract_strided_slice %860 {offsets = [0, 64], sizes = [2, 32], strides = [1, 1]} : vector<2x128xf32> to vector<2x32xf32>
    %874 = math.tanh %873 : vector<2x32xf32>
    %875 = vector.extract_strided_slice %865 {offsets = [0, 32], sizes = [2, 32], strides = [1, 1]} : vector<2x128xf32> to vector<2x32xf32>
    %876 = arith.mulf %875, %837 : vector<2x32xf32>
    %877 = vector.extract_strided_slice %865 {offsets = [0, 0], sizes = [2, 32], strides = [1, 1]} : vector<2x128xf32> to vector<2x32xf32>
    %878 = arith.mulf %877, %872 : vector<2x32xf32>
    %879 = arith.addf %876, %878 : vector<2x32xf32>
    %880 = vector.extract_strided_slice %865 {offsets = [0, 96], sizes = [2, 32], strides = [1, 1]} : vector<2x128xf32> to vector<2x32xf32>
    %881 = math.tanh %879 : vector<2x32xf32>
    %882 = arith.mulf %880, %881 : vector<2x32xf32>
    %883 = vector.extract_strided_slice %870 {offsets = [0, 32], sizes = [2, 32], strides = [1, 1]} : vector<2x128xf32> to vector<2x32xf32>
    %884 = arith.mulf %883, %843 : vector<2x32xf32>
    %885 = vector.extract_strided_slice %870 {offsets = [0, 0], sizes = [2, 32], strides = [1, 1]} : vector<2x128xf32> to vector<2x32xf32>
    %886 = arith.mulf %885, %874 : vector<2x32xf32>
    %887 = arith.addf %884, %886 : vector<2x32xf32>
    %888 = vector.extract_strided_slice %870 {offsets = [0, 96], sizes = [2, 32], strides = [1, 1]} : vector<2x128xf32> to vector<2x32xf32>
    %889 = math.tanh %887 : vector<2x32xf32>
    %890 = arith.mulf %888, %889 : vector<2x32xf32>
    %c14_i32_71 = arith.constant 14 : i32
    %891 = vector.broadcast %c14_i32_71 : i32 to vector<2x1xi32>
    %892 = arith.cmpi sgt, %0, %891 : vector<2x1xi32>
    %c1_i32_72 = arith.constant 1 : i32
    %893 = vector.broadcast %c1_i32_72 : i32 to vector<2x1xi32>
    %894 = arith.cmpi sgt, %0, %893 : vector<2x1xi32>
    %895 = vector.shape_cast %892 : vector<2x1xi1> to vector<2x1xi1>
    %896 = vector.broadcast %895 : vector<2x1xi1> to vector<2x32xi1>
    %897 = arith.select %896, %879, %837 : vector<2x32xi1>, vector<2x32xf32>
    %898 = vector.shape_cast %892 : vector<2x1xi1> to vector<2x1xi1>
    %899 = vector.broadcast %898 : vector<2x1xi1> to vector<2x32xi1>
    %900 = arith.select %899, %882, %840 : vector<2x32xi1>, vector<2x32xf32>
    %901 = vector.shape_cast %894 : vector<2x1xi1> to vector<2x1xi1>
    %902 = vector.broadcast %901 : vector<2x1xi1> to vector<2x32xi1>
    %903 = arith.select %902, %887, %843 : vector<2x32xi1>, vector<2x32xf32>
    %904 = vector.shape_cast %894 : vector<2x1xi1> to vector<2x1xi1>
    %905 = vector.broadcast %904 : vector<2x1xi1> to vector<2x32xi1>
    %906 = arith.select %905, %890, %846 : vector<2x32xi1>, vector<2x32xf32>
    %907 = vector.shape_cast %892 : vector<2x1xi1> to vector<2x1xi1>
    %908 = vector.broadcast %907 : vector<2x1xi1> to vector<2x32xi1>
    %909 = arith.select %908, %882, %12 : vector<2x32xi1>, vector<2x32xf32>
    %910 = vector.shape_cast %894 : vector<2x1xi1> to vector<2x1xi1>
    %911 = vector.broadcast %910 : vector<2x1xi1> to vector<2x32xi1>
    %912 = arith.select %911, %890, %12 : vector<2x32xi1>, vector<2x32xf32>
    %913 = tpu.concatenate %900, %906 in 1 : vector<2x32xf32>, vector<2x32xf32> -> vector<2x64xf32>
    %cst_73 = arith.constant dense<0.000000e+00> : vector<2x256xf32>
    %914 = tpu.matmul %913, %7, %cst_73 {dimension_numbers = #tpu.dot_dimension_numbers<[1], [0], [0], [1], [0, 0, 1, 1], [], []>} : vector<2x64xf32>, vector<64x256xf32>, vector<2x256xf32> -> vector<2x256xf32>
    %915 = vector.extract_strided_slice %6 {offsets = [30, 0], sizes = [2, 128], strides = [1, 1]} : vector<32x256xf32> to vector<2x128xf32>
    %916 = vector.extract_strided_slice %914 {offsets = [0, 0], sizes = [2, 128], strides = [1, 1]} : vector<2x256xf32> to vector<2x128xf32>
    %917 = arith.addf %915, %916 : vector<2x128xf32>
    %918 = vector.extract_strided_slice %6 {offsets = [0, 128], sizes = [2, 128], strides = [1, 1]} : vector<32x256xf32> to vector<2x128xf32>
    %919 = vector.extract_strided_slice %914 {offsets = [0, 128], sizes = [2, 128], strides = [1, 1]} : vector<2x256xf32> to vector<2x128xf32>
    %920 = arith.addf %918, %919 : vector<2x128xf32>
    %921 = arith.negf %917 : vector<2x128xf32>
    %922 = math.exp %921 : vector<2x128xf32>
    %cst_74 = arith.constant 1.000000e+00 : f32
    %923 = vector.broadcast %cst_74 : f32 to vector<2x128xf32>
    %924 = arith.addf %923, %922 : vector<2x128xf32>
    %925 = arith.divf %923, %924 : vector<2x128xf32>
    %926 = arith.negf %920 : vector<2x128xf32>
    %927 = math.exp %926 : vector<2x128xf32>
    %cst_75 = arith.constant 1.000000e+00 : f32
    %928 = vector.broadcast %cst_75 : f32 to vector<2x128xf32>
    %929 = arith.addf %928, %927 : vector<2x128xf32>
    %930 = arith.divf %928, %929 : vector<2x128xf32>
    %931 = vector.extract_strided_slice %917 {offsets = [0, 64], sizes = [2, 32], strides = [1, 1]} : vector<2x128xf32> to vector<2x32xf32>
    %932 = math.tanh %931 : vector<2x32xf32>
    %933 = vector.extract_strided_slice %920 {offsets = [0, 64], sizes = [2, 32], strides = [1, 1]} : vector<2x128xf32> to vector<2x32xf32>
    %934 = math.tanh %933 : vector<2x32xf32>
    %935 = vector.extract_strided_slice %925 {offsets = [0, 32], sizes = [2, 32], strides = [1, 1]} : vector<2x128xf32> to vector<2x32xf32>
    %936 = arith.mulf %935, %897 : vector<2x32xf32>
    %937 = vector.extract_strided_slice %925 {offsets = [0, 0], sizes = [2, 32], strides = [1, 1]} : vector<2x128xf32> to vector<2x32xf32>
    %938 = arith.mulf %937, %932 : vector<2x32xf32>
    %939 = arith.addf %936, %938 : vector<2x32xf32>
    %940 = vector.extract_strided_slice %925 {offsets = [0, 96], sizes = [2, 32], strides = [1, 1]} : vector<2x128xf32> to vector<2x32xf32>
    %941 = math.tanh %939 : vector<2x32xf32>
    %942 = arith.mulf %940, %941 : vector<2x32xf32>
    %943 = vector.extract_strided_slice %930 {offsets = [0, 32], sizes = [2, 32], strides = [1, 1]} : vector<2x128xf32> to vector<2x32xf32>
    %944 = arith.mulf %943, %903 : vector<2x32xf32>
    %945 = vector.extract_strided_slice %930 {offsets = [0, 0], sizes = [2, 32], strides = [1, 1]} : vector<2x128xf32> to vector<2x32xf32>
    %946 = arith.mulf %945, %934 : vector<2x32xf32>
    %947 = arith.addf %944, %946 : vector<2x32xf32>
    %948 = vector.extract_strided_slice %930 {offsets = [0, 96], sizes = [2, 32], strides = [1, 1]} : vector<2x128xf32> to vector<2x32xf32>
    %949 = math.tanh %947 : vector<2x32xf32>
    %950 = arith.mulf %948, %949 : vector<2x32xf32>
    %c15_i32_76 = arith.constant 15 : i32
    %951 = vector.broadcast %c15_i32_76 : i32 to vector<2x1xi32>
    %952 = arith.cmpi sgt, %0, %951 : vector<2x1xi32>
    %c0_i32_77 = arith.constant 0 : i32
    %953 = vector.broadcast %c0_i32_77 : i32 to vector<2x1xi32>
    %954 = arith.cmpi sgt, %0, %953 : vector<2x1xi32>
    %955 = vector.shape_cast %952 : vector<2x1xi1> to vector<2x1xi1>
    %956 = vector.broadcast %955 : vector<2x1xi1> to vector<2x32xi1>
    %957 = arith.select %956, %942, %12 : vector<2x32xi1>, vector<2x32xf32>
    %958 = vector.shape_cast %954 : vector<2x1xi1> to vector<2x1xi1>
    %959 = vector.broadcast %958 : vector<2x1xi1> to vector<2x32xi1>
    %960 = arith.select %959, %950, %12 : vector<2x32xi1>, vector<2x32xf32>
    %961 = tpu.concatenate %69, %960, %129, %912 in 1 : vector<2x32xf32>, vector<2x32xf32>, vector<2x32xf32>, vector<2x32xf32> -> vector<2x128xf32>
    %962 = tpu.concatenate %189, %852, %249, %792 in 1 : vector<2x32xf32>, vector<2x32xf32>, vector<2x32xf32>, vector<2x32xf32> -> vector<2x128xf32>
    %963 = tpu.concatenate %309, %732, %369, %672 in 1 : vector<2x32xf32>, vector<2x32xf32>, vector<2x32xf32>, vector<2x32xf32> -> vector<2x128xf32>
    %964 = tpu.concatenate %429, %612, %489, %552 in 1 : vector<2x32xf32>, vector<2x32xf32>, vector<2x32xf32>, vector<2x32xf32> -> vector<2x128xf32>
    %965 = tpu.concatenate %549, %492, %609, %432 in 1 : vector<2x32xf32>, vector<2x32xf32>, vector<2x32xf32>, vector<2x32xf32> -> vector<2x128xf32>
    %966 = tpu.concatenate %669, %372, %729, %312 in 1 : vector<2x32xf32>, vector<2x32xf32>, vector<2x32xf32>, vector<2x32xf32> -> vector<2x128xf32>
    %967 = tpu.concatenate %789, %252, %849, %192 in 1 : vector<2x32xf32>, vector<2x32xf32>, vector<2x32xf32>, vector<2x32xf32> -> vector<2x128xf32>
    %968 = tpu.concatenate %909, %132, %957, %72 in 1 : vector<2x32xf32>, vector<2x32xf32>, vector<2x32xf32>, vector<2x32xf32> -> vector<2x128xf32>
    %969 = vector.shape_cast %961 : vector<2x128xf32> to vector<1x2x128xf32>
    %970 = vector.shape_cast %962 : vector<2x128xf32> to vector<1x2x128xf32>
    %971 = vector.shape_cast %963 : vector<2x128xf32> to vector<1x2x128xf32>
    %972 = vector.shape_cast %964 : vector<2x128xf32> to vector<1x2x128xf32>
    %973 = vector.shape_cast %965 : vector<2x128xf32> to vector<1x2x128xf32>
    %974 = vector.shape_cast %966 : vector<2x128xf32> to vector<1x2x128xf32>
    %975 = vector.shape_cast %967 : vector<2x128xf32> to vector<1x2x128xf32>
    %976 = vector.shape_cast %968 : vector<2x128xf32> to vector<1x2x128xf32>
    %977 = tpu.concatenate %969, %970, %971, %972, %973, %974, %975, %976 in 0 : vector<1x2x128xf32>, vector<1x2x128xf32>, vector<1x2x128xf32>, vector<1x2x128xf32>, vector<1x2x128xf32>, vector<1x2x128xf32>, vector<1x2x128xf32>, vector<1x2x128xf32> -> vector<8x2x128xf32>
    %c0_78 = arith.constant 0 : index
    %c0_79 = arith.constant 0 : index
    %c0_80 = arith.constant 0 : index
    %978 = vector.load %arg5[%c0_78, %c0_79, %c0_80] : memref<8x2x128xf32, #tpu.memory_space<vmem>>, vector<8x2x128xf32>
    tpu.vector_store %arg5[%c0_78, %c0_79, %c0_80], %977 {strides = array<i32>} : memref<8x2x128xf32, #tpu.memory_space<vmem>>, vector<8x2x128xf32>,
    return
  }
}

</mosaic_0001>

<llo_original>
// kernel: tpu_custom_call.1
$region0: #{tpu_custom_call.1}
  #allocation0 [shape = 'u32[]', space=smem, size = 0x4, offset = 0x4, fixed_abs, tag = 'smem constant byte address 0x4 - core index']
  #allocation1 [shape = 'u32[144,128]{1,0:T(1,128)}', space=vmem, size = 0x12000, scoped, tag = 'internal scratch']
  %s0 = inlined_call_operand.hbm [shape: f32[32,32], index: 0, kind: input, shape index: {}]
  %s1 = inlined_call_operand.vmem [shape: s32[2,1], index: 1, kind: input, shape index: {}]
  %s2 = inlined_call_operand.hbm [shape: f32[32,256], index: 2, kind: input, shape index: {}]
  %s3 = inlined_call_operand.hbm [shape: f32[64,256], index: 3, kind: input, shape index: {}]
  %s4 = inlined_call_operand.vmem [shape: f32[1,256], index: 4, kind: input, shape index: {}]
  %s5 = inlined_call_operand.hbm [shape: f32[8,2,128], index: 5, kind: output, shape index: {}]
  %s6 = sld [smem:[#allocation0]]
  $region42: #{tpu_custom_call.1} parent=0
    _
  %s8 = ssub.s32 1, %s6
  %s9 = scalar_select 0, %s8, %s6
  $region1: #{tpu_custom_call.1} parent=0
    #allocation2 [shape = 'u8[16384]{0}', space=vmem, size = 0x4000, scoped, tag = 'input window, operand 0, single buffered']
    #allocation3 [shape = 's32[1]{0}', space=sflag, size = 0x4, scoped, tag = 'scoped memory for tpu_custom_call.1']
    #allocation4 [shape = 's32[1]{0}', space=sflag, size = 0x4, scoped, tag = 'scoped memory for tpu_custom_call.1']
    #allocation5 [shape = 'u8[32768]{0}', space=vmem, size = 0x8000, scoped, tag = 'input window, operand 2, single buffered']
    #allocation6 [shape = 's32[1]{0}', space=sflag, size = 0x4, scoped, tag = 'scoped memory for tpu_custom_call.1']
    #allocation7 [shape = 'u8[65536]{0}', space=vmem, size = 0x10000, scoped, tag = 'input window, operand 3, single buffered']
    #allocation8 [shape = 'u8[8192]{0}', space=vmem, size = 0x2000, scoped, tag = 'output window, operand 0, single buffered']
    %10 = vsyncpa [#allocation3], 0
    %11 = vsyncpa [#allocation6], 0
    %12 = vsyncpa [#allocation4], 0
    // Predicated region
    $region2: #{tpu_custom_call.1} parent=1 // pred_check
      _
    $region3: #{tpu_custom_call.1} parent=1 // pred_check_branch
      %14 = sbr.rel (0) target = $region5
    $region4: #{tpu_custom_call.1} parent=1 // pred_region
      %s16 = ssub.s32 512, 512
      %17 = vsyncadd [#allocation3], %s16
      %s18 = sshll.u32 [#allocation2], 4
      %s19 = int_to_ptr.vmem [resolvable:$true] %s18
      %24 = dma.hbm_to_vmem [thread:$0]  %s0, 512, %s19, [#allocation3], 128, 128, 8
    $region5: #{tpu_custom_call.1} parent=1 // pred_fallthru
      _
    // Predicated region
    $region6: #{tpu_custom_call.1} parent=1 // pred_check
      _
    $region7: #{tpu_custom_call.1} parent=1 // pred_check_branch
      %26 = sbr.rel (0) target = $region9
    $region8: #{tpu_custom_call.1} parent=1 // pred_region
      _
    $region9: #{tpu_custom_call.1} parent=1 // pred_fallthru
      _
    // Predicated region
    $region10: #{tpu_custom_call.1} parent=1 // pred_check
      _
    $region11: #{tpu_custom_call.1} parent=1 // pred_check_branch
      %28 = sbr.rel (0) target = $region13
    $region12: #{tpu_custom_call.1} parent=1 // pred_region
      %s30 = ssub.s32 1024, 1024
      %31 = vsyncadd [#allocation6], %s30
      %s32 = sshll.u32 [#allocation5], 4
      %s33 = int_to_ptr.vmem [resolvable:$true] %s32
      %38 = dma.hbm_to_vmem [thread:$0]  %s2, 1024, %s33, [#allocation6], 256, 256, 16
    $region13: #{tpu_custom_call.1} parent=1 // pred_fallthru
      _
    // Predicated region
    $region14: #{tpu_custom_call.1} parent=1 // pred_check
      _
    $region15: #{tpu_custom_call.1} parent=1 // pred_check_branch
      %40 = sbr.rel (0) target = $region17
    $region16: #{tpu_custom_call.1} parent=1 // pred_region
      %s42 = ssub.s32 2048, 2048
      %43 = vsyncadd [#allocation6], %s42
      %s44 = sshll.u32 [#allocation7], 4
      %s45 = int_to_ptr.vmem [resolvable:$true] %s44
      %50 = dma.hbm_to_vmem [thread:$0]  %s3, 2048, %s45, [#allocation6], 256, 256, 16
    $region17: #{tpu_custom_call.1} parent=1 // pred_fallthru
      _
    // Predicated region
    $region18: #{tpu_custom_call.1} parent=1 // pred_check
      _
    $region19: #{tpu_custom_call.1} parent=1 // pred_check_branch
      %52 = sbr.rel (0) target = $region21
    $region20: #{tpu_custom_call.1} parent=1 // pred_region
      _
    $region21: #{tpu_custom_call.1} parent=1 // pred_fallthru
      _
    // Predicated region
    $region22: #{tpu_custom_call.1} parent=1 // pred_check
      _
    $region23: #{tpu_custom_call.1} parent=1 // pred_check_branch
      %54 = sbr.rel (0) target = $region25
    $region24: #{tpu_custom_call.1} parent=1 // pred_region
      %55 = dma.done [#allocation3], 512
    $region25: #{tpu_custom_call.1} parent=1 // pred_fallthru
      _
    // Predicated region
    $region26: #{tpu_custom_call.1} parent=1 // pred_check
      _
    $region27: #{tpu_custom_call.1} parent=1 // pred_check_branch
      %57 = sbr.rel (0) target = $region29
    $region28: #{tpu_custom_call.1} parent=1 // pred_region
      %58 = dma.done [#allocation6], 1024
    $region29: #{tpu_custom_call.1} parent=1 // pred_fallthru
      _
    // Predicated region
    $region30: #{tpu_custom_call.1} parent=1 // pred_check
      _
    $region31: #{tpu_custom_call.1} parent=1 // pred_check_branch
      %60 = sbr.rel (0) target = $region33
    $region32: #{tpu_custom_call.1} parent=1 // pred_region
      %61 = dma.done [#allocation6], 2048
    $region33: #{tpu_custom_call.1} parent=1 // pred_fallthru
      _
    %v62 = vld [vmem:[%s1] sm:$0x3]
    %v63 = vld [vmem:[#allocation2] sm:$0xff]
    %v64 = vld [vmem:[#allocation2 + $0x8] sm:$0xff]
    %v65 = vld [vmem:[#allocation2 + $0x10] sm:$0xff]
    %v66 = vld [vmem:[#allocation2 + $0x18] sm:$0xff]
    %v67 = vld [vmem:[#allocation5] sm:$0xff]
    %v68 = vld [vmem:[#allocation5 + $0x8] sm:$0xff]
    %v69 = vld [vmem:[#allocation5 + $0x10] sm:$0xff]
    %v70 = vld [vmem:[#allocation5 + $0x18] sm:$0xff]
    %v71 = vld [vmem:[#allocation5 + $0x20] sm:$0xff]
    %v72 = vld [vmem:[#allocation5 + $0x28] sm:$0xff]
    %v73 = vld [vmem:[#allocation5 + $0x30] sm:$0xff]
    %v74 = vld [vmem:[#allocation5 + $0x38] sm:$0xff]
    %v75 = vld [vmem:[%s4] sm:$0x3]
    %v77 = vlaneseq
    %v78 = vshrl.u32 %v77, 7
    %v79 = vsub.s32 0, %v78
    %v80 = vrot.slane %v75, %v79
    %v81 = vlaneseq
    %v82 = vshrl.u32 %v81, 7
    %v83 = vsub.s32 1, %v82
    %v84 = vrot.slane %v75, %v83
    %vm87 = vcmask 261120
    %v89 = vsel %vm87, %v63, 0
    %v92 = vsel %vm87, %v64, 0
    %v95 = vsel %vm87, %v65, 0
    %v98 = vsel %vm87, %v66, 0
    %100 = vmatprep.subr.mxu0 0.0
    %101 = vmatpush1.msra.mxu0 0.0
    %102 = vmatprep.subr.mxu0 0.0
    %103 = vmatpush1.msra.mxu0 0.0
    %104 = vmatprep.subr.mxu0 0.0
    %105 = vmatpush1.msra.mxu0 0.0
    %106 = vmatprep.subr.mxu0 0.0
    %107 = vmatpush1.msra.mxu0 0.0
    %108 = vmatprep.subr.mxu0 0.0
    %109 = vmatpush1.msra.mxu0 0.0
    %110 = vmatprep.subr.mxu0 0.0
    %111 = vmatpush1.msra.mxu0 0.0
    %112 = vmatprep.subr.mxu0 0.0
    %113 = vmatpush1.msra.mxu0 0.0
    %114 = vmatprep.subr.mxu0 0.0
    %115 = vmatpush1.msra.mxu0 0.0
    %116 = vmatprep.subr.mxu0 0.0
    %117 = vmatpush1.msra.mxu0 0.0
    %118 = vmatprep.subr.mxu0 0.0
    %119 = vmatpush1.msra.mxu0 0.0
    %120 = vmatprep.subr.mxu0 0.0
    %121 = vmatpush1.msra.mxu0 0.0
    %122 = vmatprep.subr.mxu0 0.0
    %123 = vmatpush1.msra.mxu0 0.0
    %124 = vmatprep.subr.mxu0 %v74
    %125 = vmatpush1.msra.mxu0 %v73
    %126 = vmatprep.subr.mxu0 %v72
    %127 = vmatpush1.msra.mxu0 %v71
    %128 = vmatprep.subr.mxu0 %v70
    %129 = vmatpush1.msra.mxu0 %v69
    %130 = vmatprep.subr.mxu0 %v68
    %131 = vmatpush1.msra.mxu0 %v67
    %132 = vmatprep.subr.mxu0 0.0
    %133 = vmatpush2.msra.mxu0 0.0
    %134 = vmatprep.subr.mxu0 0.0
    %135 = vmatpush2.msra.mxu0 0.0
    %136 = vmatprep.subr.mxu0 0.0
    %137 = vmatpush2.msra.mxu0 0.0
    %138 = vmatprep.subr.mxu0 0.0
    %139 = vmatpush2.msra.mxu0 0.0
    %140 = vmatprep.subr.mxu0 0.0
    %141 = vmatpush2.msra.mxu0 0.0
    %142 = vmatprep.subr.mxu0 0.0
    %143 = vmatpush2.msra.mxu0 0.0
    %144 = vmatprep.subr.mxu0 0.0
    %145 = vmatpush2.msra.mxu0 0.0
    %146 = vmatprep.subr.mxu0 0.0
    %147 = vmatpush2.msra.mxu0 0.0
    %148 = vmatprep.subr.mxu0 0.0
    %149 = vmatpush2.msra.mxu0 0.0
    %150 = vmatprep.subr.mxu0 0.0
    %151 = vmatpush2.msra.mxu0 0.0
    %152 = vmatprep.subr.mxu0 0.0
    %153 = vmatpush2.msra.mxu0 0.0
    %154 = vmatprep.subr.mxu0 0.0
    %155 = vmatpush2.msra.mxu0 0.0
    %156 = vmatprep.subr.mxu0 0.0
    %157 = vmatpush2.msra.mxu0 0.0
    %158 = vmatprep.subr.mxu0 0.0
    %159 = vmatpush2.msra.mxu0 0.0
    %160 = vmatprep.subr.mxu0 0.0
    %161 = vmatpush2.msra.mxu0 0.0
    %162 = vmatprep.subr.mxu0 0.0
    %163 = vmatpush2.msra.mxu0 0.0
    %164 = vmatprep.mubr.f32.mxu0 0.0
    %165 = vmatmul.mubr.f32.gmra.mxu0 %v89
    %v166 = vpop.f32.mrf.mxu0
    %v167 = vadd.f32 %v80, %v166
    %v168 = vpop.f32.mrf.mxu0
    %v169 = vadd.f32 %v84, %v168
    %170 = vmatprep.mubr.f32.mxu0 0.0
    %171 = vmatmul.mubr.f32.gmra.mxu0 %v92
    %v172 = vpop.f32.mrf.mxu0
    %v173 = vadd.f32 %v80, %v172
    %v174 = vpop.f32.mrf.mxu0
    %v175 = vadd.f32 %v84, %v174
    %176 = vmatprep.mubr.f32.mxu0 0.0
    %177 = vmatmul.mubr.f32.gmra.mxu0 %v95
    %v178 = vpop.f32.mrf.mxu0
    %v179 = vadd.f32 %v80, %v178
    %v180 = vpop.f32.mrf.mxu0
    %v181 = vadd.f32 %v84, %v180
    %182 = vmatprep.mubr.f32.mxu0 0.0
    %183 = vmatmul.mubr.f32.gmra.mxu0 %v98
    %v184 = vpop.f32.mrf.mxu0
    %v185 = vadd.f32 %v80, %v184
    %v186 = vpop.f32.mrf.mxu0
    %v187 = vadd.f32 %v84, %v186
    %188 = vdwg.mxu0
    %v189 = vld [vmem:[#allocation7] sm:$0xff]
    %v190 = vld [vmem:[#allocation7 + $0x8] sm:$0xff]
    %v191 = vld [vmem:[#allocation7 + $0x10] sm:$0xff]
    %v192 = vld [vmem:[#allocation7 + $0x18] sm:$0xff]
    %v193 = vld [vmem:[#allocation7 + $0x20] sm:$0xff]
    %v194 = vld [vmem:[#allocation7 + $0x28] sm:$0xff]
    %v195 = vld [vmem:[#allocation7 + $0x30] sm:$0xff]
    %v196 = vld [vmem:[#allocation7 + $0x38] sm:$0xff]
    %v197 = vld [vmem:[#allocation7 + $0x40] sm:$0xff]
    %v198 = vld [vmem:[#allocation7 + $0x48] sm:$0xff]
    %v199 = vld [vmem:[#allocation7 + $0x50] sm:$0xff]
    %v200 = vld [vmem:[#allocation7 + $0x58] sm:$0xff]
    %v201 = vld [vmem:[#allocation7 + $0x60] sm:$0xff]
    %v202 = vld [vmem:[#allocation7 + $0x68] sm:$0xff]
    %v203 = vld [vmem:[#allocation7 + $0x70] sm:$0xff]
    %v204 = vld [vmem:[#allocation7 + $0x78] sm:$0xff]
    %vm205 = vcmask 523264
    %v207 = vsel %vm205, 0.0, 0
    %209 = vmatprep.subr.mxu0 0.0
    %210 = vmatpush1.msra.mxu0 0.0
    %211 = vmatprep.subr.mxu0 0.0
    %212 = vmatpush1.msra.mxu0 0.0
    %213 = vmatprep.subr.mxu0 0.0
    %214 = vmatpush1.msra.mxu0 0.0
    %215 = vmatprep.subr.mxu0 0.0
    %216 = vmatpush1.msra.mxu0 0.0
    %217 = vmatprep.subr.mxu0 0.0
    %218 = vmatpush1.msra.mxu0 0.0
    %219 = vmatprep.subr.mxu0 0.0
    %220 = vmatpush1.msra.mxu0 0.0
    %221 = vmatprep.subr.mxu0 0.0
    %222 = vmatpush1.msra.mxu0 0.0
    %223 = vmatprep.subr.mxu0 0.0
    %224 = vmatpush1.msra.mxu0 0.0
    %225 = vmatprep.subr.mxu0 %v204
    %226 = vmatpush1.msra.mxu0 %v203
    %227 = vmatprep.subr.mxu0 %v202
    %228 = vmatpush1.msra.mxu0 %v201
    %229 = vmatprep.subr.mxu0 %v200
    %230 = vmatpush1.msra.mxu0 %v199
    %231 = vmatprep.subr.mxu0 %v198
    %232 = vmatpush1.msra.mxu0 %v197
    %233 = vmatprep.subr.mxu0 %v196
    %234 = vmatpush1.msra.mxu0 %v195
    %235 = vmatprep.subr.mxu0 %v194
    %236 = vmatpush1.msra.mxu0 %v193
    %237 = vmatprep.subr.mxu0 %v192
    %238 = vmatpush1.msra.mxu0 %v191
    %239 = vmatprep.subr.mxu0 %v190
    %240 = vmatpush1.msra.mxu0 %v189
    %241 = vmatprep.subr.mxu0 0.0
    %242 = vmatpush2.msra.mxu0 0.0
    %243 = vmatprep.subr.mxu0 0.0
    %244 = vmatpush2.msra.mxu0 0.0
    %245 = vmatprep.subr.mxu0 0.0
    %246 = vmatpush2.msra.mxu0 0.0
    %247 = vmatprep.subr.mxu0 0.0
    %248 = vmatpush2.msra.mxu0 0.0
    %249 = vmatprep.subr.mxu0 0.0
    %250 = vmatpush2.msra.mxu0 0.0
    %251 = vmatprep.subr.mxu0 0.0
    %252 = vmatpush2.msra.mxu0 0.0
    %253 = vmatprep.subr.mxu0 0.0
    %254 = vmatpush2.msra.mxu0 0.0
    %255 = vmatprep.subr.mxu0 0.0
    %256 = vmatpush2.msra.mxu0 0.0
    %257 = vmatprep.subr.mxu0 0.0
    %258 = vmatpush2.msra.mxu0 0.0
    %259 = vmatprep.subr.mxu0 0.0
    %260 = vmatpush2.msra.mxu0 0.0
    %261 = vmatprep.subr.mxu0 0.0
    %262 = vmatpush2.msra.mxu0 0.0
    %263 = vmatprep.subr.mxu0 0.0
    %264 = vmatpush2.msra.mxu0 0.0
    %265 = vmatprep.subr.mxu0 0.0
    %266 = vmatpush2.msra.mxu0 0.0
    %267 = vmatprep.subr.mxu0 0.0
    %268 = vmatpush2.msra.mxu0 0.0
    %269 = vmatprep.subr.mxu0 0.0
    %270 = vmatpush2.msra.mxu0 0.0
    %271 = vmatprep.subr.mxu0 0.0
    %272 = vmatpush2.msra.mxu0 0.0
    %273 = vmatprep.mubr.f32.mxu0 0.0
    %274 = vmatmul.mubr.f32.gmra.mxu0 %v207
    %v275 = vpop.f32.mrf.mxu0
    %v276 = vadd.f32 0.0, %v275
    %v277 = vpop.f32.mrf.mxu0
    %v278 = vadd.f32 0.0, %v277
    %279 = vdwg.mxu0
    %v280 = vadd.f32 %v167, %v276
    %v282 = vrot.slane %v278, 2
    %v284 = vadd.f32 %v187, %v282
    %v285 = vxor.u32 %v280, 2147483648
    %v286 = vmul.f32 %v285, 1.442695
    %v287 = vpow.pop %v286
    %v288 = vadd.f32 %v287, 1.0
    %v289 = vrcp.pop %v288
    %v290 = vmul.f32 1.0, %v289
    %v291 = vxor.u32 %v284, 2147483648
    %v292 = vmul.f32 %v291, 1.442695
    %v293 = vpow.pop %v292
    %v294 = vadd.f32 %v293, 1.0
    %v295 = vrcp.pop %v294
    %v296 = vmul.f32 1.0, %v295
    %v297 = vtanh.pop %v280
    %v298 = vtanh.pop %v284
    %v299 = vmul.f32 %v290, 0.0
    %301 = vrot.lane.b32.xlu0 %v297, 64
    %v302 = vpop.permute.xlu0 %301
    %v304 = vmul.f32 %v290, %v302
    %306 = vrot.lane.b32.xlu0 %v304, 32
    %v307 = vpop.permute.xlu0 %306
    %v309 = vadd.f32 %v299, %v307
    %v310 = vtanh.pop %v309
    %312 = vrot.lane.b32.xlu0 %v310, 64
    %v313 = vpop.permute.xlu0 %312
    %v315 = vmul.f32 %v290, %v313
    %v316 = vmul.f32 %v296, 0.0
    %318 = vrot.lane.b32.xlu0 %v298, 64
    %v319 = vpop.permute.xlu0 %318
    %v321 = vmul.f32 %v296, %v319
    %323 = vrot.lane.b32.xlu0 %v321, 32
    %v324 = vpop.permute.xlu0 %323
    %v326 = vadd.f32 %v316, %v324
    %v327 = vtanh.pop %v326
    %329 = vrot.lane.b32.xlu0 %v327, 64
    %v330 = vpop.permute.xlu0 %329
    %v332 = vmul.f32 %v296, %v330
    %vm333 = vcmp.gt.s32.totalorder %v62, 0
    %vm334 = vcmp.gt.s32.totalorder %v62, 15
    %v335 = vsel %vm333, 1, 0
    %336 = vset.pattern.permute.xlu0 0
    %337 = vperm.xlu0 %336, %v335
    %v338 = vpop.permute.xlu0 %337
    %vm339 = vcmp.eq.s32.totalorder %v338, 1
    %v340 = vsel %vm339, %v309, 0.0
    %v341 = vsel %vm339, %v315, 0.0
    %v342 = vsel %vm334, 1, 0
    %343 = vset.pattern.permute.xlu0 0
    %344 = vperm.xlu0 %343, %v342
    %v345 = vpop.permute.xlu0 %344
    %vm346 = vcmp.eq.s32.totalorder %v345, 1
    %v348 = vrot.slane %v326, 6
    %349 = vrot.lane.b32.xlu0 %v348, 96
    %v350 = vpop.permute.xlu0 %349
    %v352 = vsel %vm346, %v350, 0.0
    %v354 = vrot.slane %v332, 6
    %355 = vrot.lane.b32.xlu0 %v354, 32
    %v356 = vpop.permute.xlu0 %355
    %v358 = vsel %vm346, %v356, 0.0
    %360 = vrot.lane.b32.xlu0 %v341, 32
    %v361 = vpop.permute.xlu0 %360
    %364 = vrot.lane.b32.xlu0 %v358, 32
    %v365 = vpop.permute.xlu0 %364
    %v367 = vsel %vm87, %v361, %v365
    %v369 = vsel %vm205, %v367, 0
    %371 = vmatprep.subr.mxu0 0.0
    %372 = vmatpush1.msra.mxu0 0.0
    %373 = vmatprep.subr.mxu0 0.0
    %374 = vmatpush1.msra.mxu0 0.0
    %375 = vmatprep.subr.mxu0 0.0
    %376 = vmatpush1.msra.mxu0 0.0
    %377 = vmatprep.subr.mxu0 0.0
    %378 = vmatpush1.msra.mxu0 0.0
    %379 = vmatprep.subr.mxu0 0.0
    %380 = vmatpush1.msra.mxu0 0.0
    %381 = vmatprep.subr.mxu0 0.0
    %382 = vmatpush1.msra.mxu0 0.0
    %383 = vmatprep.subr.mxu0 0.0
    %384 = vmatpush1.msra.mxu0 0.0
    %385 = vmatprep.subr.mxu0 0.0
    %386 = vmatpush1.msra.mxu0 0.0
    %387 = vmatprep.subr.mxu0 %v204
    %388 = vmatpush1.msra.mxu0 %v203
    %389 = vmatprep.subr.mxu0 %v202
    %390 = vmatpush1.msra.mxu0 %v201
    %391 = vmatprep.subr.mxu0 %v200
    %392 = vmatpush1.msra.mxu0 %v199
    %393 = vmatprep.subr.mxu0 %v198
    %394 = vmatpush1.msra.mxu0 %v197
    %395 = vmatprep.subr.mxu0 %v196
    %396 = vmatpush1.msra.mxu0 %v195
    %397 = vmatprep.subr.mxu0 %v194
    %398 = vmatpush1.msra.mxu0 %v193
    %399 = vmatprep.subr.mxu0 %v192
    %400 = vmatpush1.msra.mxu0 %v191
    %401 = vmatprep.subr.mxu0 %v190
    %402 = vmatpush1.msra.mxu0 %v189
    %403 = vmatprep.subr.mxu0 0.0
    %404 = vmatpush2.msra.mxu0 0.0
    %405 = vmatprep.subr.mxu0 0.0
    %406 = vmatpush2.msra.mxu0 0.0
    %407 = vmatprep.subr.mxu0 0.0
    %408 = vmatpush2.msra.mxu0 0.0
    %409 = vmatprep.subr.mxu0 0.0
    %410 = vmatpush2.msra.mxu0 0.0
    %411 = vmatprep.subr.mxu0 0.0
    %412 = vmatpush2.msra.mxu0 0.0
    %413 = vmatprep.subr.mxu0 0.0
    %414 = vmatpush2.msra.mxu0 0.0
    %415 = vmatprep.subr.mxu0 0.0
    %416 = vmatpush2.msra.mxu0 0.0
    %417 = vmatprep.subr.mxu0 0.0
    %418 = vmatpush2.msra.mxu0 0.0
    %419 = vmatprep.subr.mxu0 0.0
    %420 = vmatpush2.msra.mxu0 0.0
    %421 = vmatprep.subr.mxu0 0.0
    %422 = vmatpush2.msra.mxu0 0.0
    %423 = vmatprep.subr.mxu0 0.0
    %424 = vmatpush2.msra.mxu0 0.0
    %425 = vmatprep.subr.mxu0 0.0
    %426 = vmatpush2.msra.mxu0 0.0
    %427 = vmatprep.subr.mxu0 0.0
    %428 = vmatpush2.msra.mxu0 0.0
    %429 = vmatprep.subr.mxu0 0.0
    %430 = vmatpush2.msra.mxu0 0.0
    %431 = vmatprep.subr.mxu0 0.0
    %432 = vmatpush2.msra.mxu0 0.0
    %433 = vmatprep.subr.mxu0 0.0
    %434 = vmatpush2.msra.mxu0 0.0
    %435 = vmatprep.mubr.f32.mxu0 0.0
    %436 = vmatmul.mubr.f32.gmra.mxu0 %v369
    %v437 = vpop.f32.mrf.mxu0
    %v438 = vadd.f32 0.0, %v437
    %v439 = vpop.f32.mrf.mxu0
    %v440 = vadd.f32 0.0, %v439
    %441 = vdwg.mxu0
    %v443 = vrot.slane %v438, 6
    %v445 = vadd.f32 %v167, %v443
    %v447 = vrot.slane %v440, 4
    %v449 = vadd.f32 %v187, %v447
    %v450 = vxor.u32 %v445, 2147483648
    %v451 = vmul.f32 %v450, 1.442695
    %v452 = vpow.pop %v451
    %v453 = vadd.f32 %v452, 1.0
    %v454 = vrcp.pop %v453
    %v455 = vmul.f32 1.0, %v454
    %v456 = vxor.u32 %v449, 2147483648
    %v457 = vmul.f32 %v456, 1.442695
    %v458 = vpow.pop %v457
    %v459 = vadd.f32 %v458, 1.0
    %v460 = vrcp.pop %v459
    %v461 = vmul.f32 1.0, %v460
    %v462 = vtanh.pop %v445
    %v463 = vtanh.pop %v449
    %v465 = vrot.slane %v340, 6
    %v467 = vmul.f32 %v455, %v465
    %469 = vrot.lane.b32.xlu0 %v462, 64
    %v470 = vpop.permute.xlu0 %469
    %v472 = vmul.f32 %v455, %v470
    %474 = vrot.lane.b32.xlu0 %v472, 32
    %v475 = vpop.permute.xlu0 %474
    %v477 = vadd.f32 %v467, %v475
    %v478 = vtanh.pop %v477
    %480 = vrot.lane.b32.xlu0 %v478, 64
    %v481 = vpop.permute.xlu0 %480
    %v483 = vmul.f32 %v455, %v481
    %v485 = vrot.slane %v352, 4
    %486 = vrot.lane.b32.xlu0 %v485, 32
    %v487 = vpop.permute.xlu0 %486
    %v489 = vmul.f32 %v461, %v487
    %491 = vrot.lane.b32.xlu0 %v463, 64
    %v492 = vpop.permute.xlu0 %491
    %v494 = vmul.f32 %v461, %v492
    %496 = vrot.lane.b32.xlu0 %v494, 32
    %v497 = vpop.permute.xlu0 %496
    %v499 = vadd.f32 %v489, %v497
    %v500 = vtanh.pop %v499
    %502 = vrot.lane.b32.xlu0 %v500, 64
    %v503 = vpop.permute.xlu0 %502
    %v505 = vmul.f32 %v461, %v503
    %vm506 = vcmp.gt.s32.totalorder %v62, 1
    %vm507 = vcmp.gt.s32.totalorder %v62, 14
    %v508 = vsel %vm506, 1, 0
    %509 = vset.pattern.permute.xlu0 0
    %510 = vperm.xlu0 %509, %v508
    %v511 = vpop.permute.xlu0 %510
    %vm512 = vcmp.eq.s32.totalorder %v511, 1
    %v514 = vrot.slane %v477, 2
    %515 = vrot.lane.b32.xlu0 %v514, 96
    %v516 = vpop.permute.xlu0 %515
    %518 = vrot.lane.b32.xlu0 %v340, 96
    %v519 = vpop.permute.xlu0 %518
    %v521 = vsel %vm512, %v516, %v519
    %v523 = vrot.slane %v483, 2
    %524 = vrot.lane.b32.xlu0 %v523, 32
    %v525 = vpop.permute.xlu0 %524
    %v527 = vsel %vm512, %v525, %v361
    %v528 = vsel %vm507, 1, 0
    %529 = vset.pattern.permute.xlu0 0
    %530 = vperm.xlu0 %529, %v528
    %v531 = vpop.permute.xlu0 %530
    %vm532 = vcmp.eq.s32.totalorder %v531, 1
    %v534 = vrot.slane %v499, 4
    %535 = vrot.lane.b32.xlu0 %v534, 96
    %v536 = vpop.permute.xlu0 %535
    %v538 = vsel %vm532, %v536, %v352
    %v540 = vrot.slane %v505, 4
    %541 = vrot.lane.b32.xlu0 %v540, 32
    %v542 = vpop.permute.xlu0 %541
    %v544 = vsel %vm532, %v542, %v358
    %v545 = vsel %vm512, %v525, 0.0
    %v546 = vsel %vm532, %v542, 0.0
    %548 = vrot.lane.b32.xlu0 %v544, 32
    %v549 = vpop.permute.xlu0 %548
    %v551 = vsel %vm87, %v527, %v549
    %v553 = vsel %vm205, %v551, 0
    %555 = vmatprep.subr.mxu0 0.0
    %556 = vmatpush1.msra.mxu0 0.0
    %557 = vmatprep.subr.mxu0 0.0
    %558 = vmatpush1.msra.mxu0 0.0
    %559 = vmatprep.subr.mxu0 0.0
    %560 = vmatpush1.msra.mxu0 0.0
    %561 = vmatprep.subr.mxu0 0.0
    %562 = vmatpush1.msra.mxu0 0.0
    %563 = vmatprep.subr.mxu0 0.0
    %564 = vmatpush1.msra.mxu0 0.0
    %565 = vmatprep.subr.mxu0 0.0
    %566 = vmatpush1.msra.mxu0 0.0
    %567 = vmatprep.subr.mxu0 0.0
    %568 = vmatpush1.msra.mxu0 0.0
    %569 = vmatprep.subr.mxu0 0.0
    %570 = vmatpush1.msra.mxu0 0.0
    %571 = vmatprep.subr.mxu0 %v204
    %572 = vmatpush1.msra.mxu0 %v203
    %573 = vmatprep.subr.mxu0 %v202
    %574 = vmatpush1.msra.mxu0 %v201
    %575 = vmatprep.subr.mxu0 %v200
    %576 = vmatpush1.msra.mxu0 %v199
    %577 = vmatprep.subr.mxu0 %v198
    %578 = vmatpush1.msra.mxu0 %v197
    %579 = vmatprep.subr.mxu0 %v196
    %580 = vmatpush1.msra.mxu0 %v195
    %581 = vmatprep.subr.mxu0 %v194
    %582 = vmatpush1.msra.mxu0 %v193
    %583 = vmatprep.subr.mxu0 %v192
    %584 = vmatpush1.msra.mxu0 %v191
    %585 = vmatprep.subr.mxu0 %v190
    %586 = vmatpush1.msra.mxu0 %v189
    %587 = vmatprep.subr.mxu0 0.0
    %588 = vmatpush2.msra.mxu0 0.0
    %589 = vmatprep.subr.mxu0 0.0
    %590 = vmatpush2.msra.mxu0 0.0
    %591 = vmatprep.subr.mxu0 0.0
    %592 = vmatpush2.msra.mxu0 0.0
    %593 = vmatprep.subr.mxu0 0.0
    %594 = vmatpush2.msra.mxu0 0.0
    %595 = vmatprep.subr.mxu0 0.0
    %596 = vmatpush2.msra.mxu0 0.0
    %597 = vmatprep.subr.mxu0 0.0
    %598 = vmatpush2.msra.mxu0 0.0
    %599 = vmatprep.subr.mxu0 0.0
    %600 = vmatpush2.msra.mxu0 0.0
    %601 = vmatprep.subr.mxu0 0.0
    %602 = vmatpush2.msra.mxu0 0.0
    %603 = vmatprep.subr.mxu0 0.0
    %604 = vmatpush2.msra.mxu0 0.0
    %605 = vmatprep.subr.mxu0 0.0
    %606 = vmatpush2.msra.mxu0 0.0
    %607 = vmatprep.subr.mxu0 0.0
    %608 = vmatpush2.msra.mxu0 0.0
    %609 = vmatprep.subr.mxu0 0.0
    %610 = vmatpush2.msra.mxu0 0.0
    %611 = vmatprep.subr.mxu0 0.0
    %612 = vmatpush2.msra.mxu0 0.0
    %613 = vmatprep.subr.mxu0 0.0
    %614 = vmatpush2.msra.mxu0 0.0
    %615 = vmatprep.subr.mxu0 0.0
    %616 = vmatpush2.msra.mxu0 0.0
    %617 = vmatprep.subr.mxu0 0.0
    %618 = vmatpush2.msra.mxu0 0.0
    %619 = vmatprep.mubr.f32.mxu0 0.0
    %620 = vmatmul.mubr.f32.gmra.mxu0 %v553
    %v621 = vpop.f32.mrf.mxu0
    %v622 = vadd.f32 0.0, %v621
    %v623 = vpop.f32.mrf.mxu0
    %v624 = vadd.f32 0.0, %v623
    %625 = vdwg.mxu0
    %v627 = vrot.slane %v622, 4
    %v629 = vadd.f32 %v167, %v627
    %v631 = vrot.slane %v624, 6
    %v633 = vadd.f32 %v187, %v631
    %v634 = vxor.u32 %v629, 2147483648
    %v635 = vmul.f32 %v634, 1.442695
    %v636 = vpow.pop %v635
    %v637 = vadd.f32 %v636, 1.0
    %v638 = vrcp.pop %v637
    %v639 = vmul.f32 1.0, %v638
    %v640 = vxor.u32 %v633, 2147483648
    %v641 = vmul.f32 %v640, 1.442695
    %v642 = vpow.pop %v641
    %v643 = vadd.f32 %v642, 1.0
    %v644 = vrcp.pop %v643
    %v645 = vmul.f32 1.0, %v644
    %v646 = vtanh.pop %v629
    %v647 = vtanh.pop %v633
    %v649 = vrot.slane %v521, 4
    %650 = vrot.lane.b32.xlu0 %v649, 32
    %v651 = vpop.permute.xlu0 %650
    %v653 = vmul.f32 %v639, %v651
    %655 = vrot.lane.b32.xlu0 %v646, 64
    %v656 = vpop.permute.xlu0 %655
    %v658 = vmul.f32 %v639, %v656
    %660 = vrot.lane.b32.xlu0 %v658, 32
    %v661 = vpop.permute.xlu0 %660
    %v663 = vadd.f32 %v653, %v661
    %v664 = vtanh.pop %v663
    %666 = vrot.lane.b32.xlu0 %v664, 64
    %v667 = vpop.permute.xlu0 %666
    %v669 = vmul.f32 %v639, %v667
    %v671 = vrot.slane %v538, 6
    %672 = vrot.lane.b32.xlu0 %v671, 32
    %v673 = vpop.permute.xlu0 %672
    %v675 = vmul.f32 %v645, %v673
    %677 = vrot.lane.b32.xlu0 %v647, 64
    %v678 = vpop.permute.xlu0 %677
    %v680 = vmul.f32 %v645, %v678
    %682 = vrot.lane.b32.xlu0 %v680, 32
    %v683 = vpop.permute.xlu0 %682
    %v685 = vadd.f32 %v675, %v683
    %v686 = vtanh.pop %v685
    %688 = vrot.lane.b32.xlu0 %v686, 64
    %v689 = vpop.permute.xlu0 %688
    %v691 = vmul.f32 %v645, %v689
    %vm692 = vcmp.gt.s32.totalorder %v62, 2
    %vm693 = vcmp.gt.s32.totalorder %v62, 13
    %v694 = vsel %vm692, 1, 0
    %695 = vset.pattern.permute.xlu0 0
    %696 = vperm.xlu0 %695, %v694
    %v697 = vpop.permute.xlu0 %696
    %vm698 = vcmp.eq.s32.totalorder %v697, 1
    %v700 = vrot.slane %v663, 4
    %701 = vrot.lane.b32.xlu0 %v700, 96
    %v702 = vpop.permute.xlu0 %701
    %v704 = vsel %vm698, %v702, %v521
    %v706 = vrot.slane %v669, 4
    %707 = vrot.lane.b32.xlu0 %v706, 32
    %v708 = vpop.permute.xlu0 %707
    %v710 = vsel %vm698, %v708, %v527
    %v711 = vsel %vm693, 1, 0
    %712 = vset.pattern.permute.xlu0 0
    %713 = vperm.xlu0 %712, %v711
    %v714 = vpop.permute.xlu0 %713
    %vm715 = vcmp.eq.s32.totalorder %v714, 1
    %v717 = vrot.slane %v685, 2
    %718 = vrot.lane.b32.xlu0 %v717, 96
    %v719 = vpop.permute.xlu0 %718
    %v721 = vsel %vm715, %v719, %v538
    %v723 = vrot.slane %v691, 2
    %724 = vrot.lane.b32.xlu0 %v723, 32
    %v725 = vpop.permute.xlu0 %724
    %v727 = vsel %vm715, %v725, %v544
    %v728 = vsel %vm698, %v708, 0.0
    %v729 = vsel %vm715, %v725, 0.0
    %731 = vrot.lane.b32.xlu0 %v727, 32
    %v732 = vpop.permute.xlu0 %731
    %v734 = vsel %vm87, %v710, %v732
    %v736 = vsel %vm205, %v734, 0
    %738 = vmatprep.subr.mxu0 0.0
    %739 = vmatpush1.msra.mxu0 0.0
    %740 = vmatprep.subr.mxu0 0.0
    %741 = vmatpush1.msra.mxu0 0.0
    %742 = vmatprep.subr.mxu0 0.0
    %743 = vmatpush1.msra.mxu0 0.0
    %744 = vmatprep.subr.mxu0 0.0
    %745 = vmatpush1.msra.mxu0 0.0
    %746 = vmatprep.subr.mxu0 0.0
    %747 = vmatpush1.msra.mxu0 0.0
    %748 = vmatprep.subr.mxu0 0.0
    %749 = vmatpush1.msra.mxu0 0.0
    %750 = vmatprep.subr.mxu0 0.0
    %751 = vmatpush1.msra.mxu0 0.0
    %752 = vmatprep.subr.mxu0 0.0
    %753 = vmatpush1.msra.mxu0 0.0
    %754 = vmatprep.subr.mxu0 %v204
    %755 = vmatpush1.msra.mxu0 %v203
    %756 = vmatprep.subr.mxu0 %v202
    %757 = vmatpush1.msra.mxu0 %v201
    %758 = vmatprep.subr.mxu0 %v200
    %759 = vmatpush1.msra.mxu0 %v199
    %760 = vmatprep.subr.mxu0 %v198
    %761 = vmatpush1.msra.mxu0 %v197
    %762 = vmatprep.subr.mxu0 %v196
    %763 = vmatpush1.msra.mxu0 %v195
    %764 = vmatprep.subr.mxu0 %v194
    %765 = vmatpush1.msra.mxu0 %v193
    %766 = vmatprep.subr.mxu0 %v192
    %767 = vmatpush1.msra.mxu0 %v191
    %768 = vmatprep.subr.mxu0 %v190
    %769 = vmatpush1.msra.mxu0 %v189
    %770 = vmatprep.subr.mxu0 0.0
    %771 = vmatpush2.msra.mxu0 0.0
    %772 = vmatprep.subr.mxu0 0.0
    %773 = vmatpush2.msra.mxu0 0.0
    %774 = vmatprep.subr.mxu0 0.0
    %775 = vmatpush2.msra.mxu0 0.0
    %776 = vmatprep.subr.mxu0 0.0
    %777 = vmatpush2.msra.mxu0 0.0
    %778 = vmatprep.subr.mxu0 0.0
    %779 = vmatpush2.msra.mxu0 0.0
    %780 = vmatprep.subr.mxu0 0.0
    %781 = vmatpush2.msra.mxu0 0.0
    %782 = vmatprep.subr.mxu0 0.0
    %783 = vmatpush2.msra.mxu0 0.0
    %784 = vmatprep.subr.mxu0 0.0
    %785 = vmatpush2.msra.mxu0 0.0
    %786 = vmatprep.subr.mxu0 0.0
    %787 = vmatpush2.msra.mxu0 0.0
    %788 = vmatprep.subr.mxu0 0.0
    %789 = vmatpush2.msra.mxu0 0.0
    %790 = vmatprep.subr.mxu0 0.0
    %791 = vmatpush2.msra.mxu0 0.0
    %792 = vmatprep.subr.mxu0 0.0
    %793 = vmatpush2.msra.mxu0 0.0
    %794 = vmatprep.subr.mxu0 0.0
    %795 = vmatpush2.msra.mxu0 0.0
    %796 = vmatprep.subr.mxu0 0.0
    %797 = vmatpush2.msra.mxu0 0.0
    %798 = vmatprep.subr.mxu0 0.0
    %799 = vmatpush2.msra.mxu0 0.0
    %800 = vmatprep.subr.mxu0 0.0
    %801 = vmatpush2.msra.mxu0 0.0
    %802 = vmatprep.mubr.f32.mxu0 0.0
    %803 = vmatmul.mubr.f32.gmra.mxu0 %v736
    %v804 = vpop.f32.mrf.mxu0
    %v805 = vadd.f32 0.0, %v804
    %v806 = vpop.f32.mrf.mxu0
    %v807 = vadd.f32 0.0, %v806
    %808 = vdwg.mxu0
    %v810 = vrot.slane %v805, 2
    %v812 = vadd.f32 %v167, %v810
    %v813 = vadd.f32 %v187, %v807
    %v814 = vxor.u32 %v812, 2147483648
    %v815 = vmul.f32 %v814, 1.442695
    %v816 = vpow.pop %v815
    %v817 = vadd.f32 %v816, 1.0
    %v818 = vrcp.pop %v817
    %v819 = vmul.f32 1.0, %v818
    %v820 = vxor.u32 %v813, 2147483648
    %v821 = vmul.f32 %v820, 1.442695
    %v822 = vpow.pop %v821
    %v823 = vadd.f32 %v822, 1.0
    %v824 = vrcp.pop %v823
    %v825 = vmul.f32 1.0, %v824
    %v826 = vtanh.pop %v812
    %v827 = vtanh.pop %v813
    %v829 = vrot.slane %v704, 2
    %830 = vrot.lane.b32.xlu0 %v829, 32
    %v831 = vpop.permute.xlu0 %830
    %v833 = vmul.f32 %v819, %v831
    %835 = vrot.lane.b32.xlu0 %v826, 64
    %v836 = vpop.permute.xlu0 %835
    %v838 = vmul.f32 %v819, %v836
    %840 = vrot.lane.b32.xlu0 %v838, 32
    %v841 = vpop.permute.xlu0 %840
    %v843 = vadd.f32 %v833, %v841
    %v844 = vtanh.pop %v843
    %846 = vrot.lane.b32.xlu0 %v844, 64
    %v847 = vpop.permute.xlu0 %846
    %v849 = vmul.f32 %v819, %v847
    %851 = vrot.lane.b32.xlu0 %v721, 32
    %v852 = vpop.permute.xlu0 %851
    %v854 = vmul.f32 %v825, %v852
    %856 = vrot.lane.b32.xlu0 %v827, 64
    %v857 = vpop.permute.xlu0 %856
    %v859 = vmul.f32 %v825, %v857
    %861 = vrot.lane.b32.xlu0 %v859, 32
    %v862 = vpop.permute.xlu0 %861
    %v864 = vadd.f32 %v854, %v862
    %v865 = vtanh.pop %v864
    %867 = vrot.lane.b32.xlu0 %v865, 64
    %v868 = vpop.permute.xlu0 %867
    %v870 = vmul.f32 %v825, %v868
    %vm871 = vcmp.gt.s32.totalorder %v62, 3
    %vm872 = vcmp.gt.s32.totalorder %v62, 12
    %v873 = vsel %vm871, 1, 0
    %874 = vset.pattern.permute.xlu0 0
    %875 = vperm.xlu0 %874, %v873
    %v876 = vpop.permute.xlu0 %875
    %vm877 = vcmp.eq.s32.totalorder %v876, 1
    %v879 = vrot.slane %v843, 6
    %880 = vrot.lane.b32.xlu0 %v879, 96
    %v881 = vpop.permute.xlu0 %880
    %v883 = vsel %vm877, %v881, %v704
    %v885 = vrot.slane %v849, 6
    %886 = vrot.lane.b32.xlu0 %v885, 32
    %v887 = vpop.permute.xlu0 %886
    %v889 = vsel %vm877, %v887, %v710
    %v890 = vsel %vm872, 1, 0
    %891 = vset.pattern.permute.xlu0 0
    %892 = vperm.xlu0 %891, %v890
    %v893 = vpop.permute.xlu0 %892
    %vm894 = vcmp.eq.s32.totalorder %v893, 1
    %v895 = vsel %vm894, %v864, %v852
    %896 = vrot.lane.b32.xlu0 %v727, 96
    %v897 = vpop.permute.xlu0 %896
    %v899 = vsel %vm894, %v870, %v897
    %v900 = vsel %vm877, %v887, 0.0
    %v901 = vsel %vm894, %v870, 0.0
    %903 = vrot.lane.b32.xlu0 %v899, 64
    %v904 = vpop.permute.xlu0 %903
    %v906 = vsel %vm87, %v889, %v904
    %v908 = vsel %vm205, %v906, 0
    %910 = vmatprep.subr.mxu0 0.0
    %911 = vmatpush1.msra.mxu0 0.0
    %912 = vmatprep.subr.mxu0 0.0
    %913 = vmatpush1.msra.mxu0 0.0
    %914 = vmatprep.subr.mxu0 0.0
    %915 = vmatpush1.msra.mxu0 0.0
    %916 = vmatprep.subr.mxu0 0.0
    %917 = vmatpush1.msra.mxu0 0.0
    %918 = vmatprep.subr.mxu0 0.0
    %919 = vmatpush1.msra.mxu0 0.0
    %920 = vmatprep.subr.mxu0 0.0
    %921 = vmatpush1.msra.mxu0 0.0
    %922 = vmatprep.subr.mxu0 0.0
    %923 = vmatpush1.msra.mxu0 0.0
    %924 = vmatprep.subr.mxu0 0.0
    %925 = vmatpush1.msra.mxu0 0.0
    %926 = vmatprep.subr.mxu0 %v204
    %927 = vmatpush1.msra.mxu0 %v203
    %928 = vmatprep.subr.mxu0 %v202
    %929 = vmatpush1.msra.mxu0 %v201
    %930 = vmatprep.subr.mxu0 %v200
    %931 = vmatpush1.msra.mxu0 %v199
    %932 = vmatprep.subr.mxu0 %v198
    %933 = vmatpush1.msra.mxu0 %v197
    %934 = vmatprep.subr.mxu0 %v196
    %935 = vmatpush1.msra.mxu0 %v195
    %936 = vmatprep.subr.mxu0 %v194
    %937 = vmatpush1.msra.mxu0 %v193
    %938 = vmatprep.subr.mxu0 %v192
    %939 = vmatpush1.msra.mxu0 %v191
    %940 = vmatprep.subr.mxu0 %v190
    %941 = vmatpush1.msra.mxu0 %v189
    %942 = vmatprep.subr.mxu0 0.0
    %943 = vmatpush2.msra.mxu0 0.0
    %944 = vmatprep.subr.mxu0 0.0
    %945 = vmatpush2.msra.mxu0 0.0
    %946 = vmatprep.subr.mxu0 0.0
    %947 = vmatpush2.msra.mxu0 0.0
    %948 = vmatprep.subr.mxu0 0.0
    %949 = vmatpush2.msra.mxu0 0.0
    %950 = vmatprep.subr.mxu0 0.0
    %951 = vmatpush2.msra.mxu0 0.0
    %952 = vmatprep.subr.mxu0 0.0
    %953 = vmatpush2.msra.mxu0 0.0
    %954 = vmatprep.subr.mxu0 0.0
    %955 = vmatpush2.msra.mxu0 0.0
    %956 = vmatprep.subr.mxu0 0.0
    %957 = vmatpush2.msra.mxu0 0.0
    %958 = vmatprep.subr.mxu0 0.0
    %959 = vmatpush2.msra.mxu0 0.0
    %960 = vmatprep.subr.mxu0 0.0
    %961 = vmatpush2.msra.mxu0 0.0
    %962 = vmatprep.subr.mxu0 0.0
    %963 = vmatpush2.msra.mxu0 0.0
    %964 = vmatprep.subr.mxu0 0.0
    %965 = vmatpush2.msra.mxu0 0.0
    %966 = vmatprep.subr.mxu0 0.0
    %967 = vmatpush2.msra.mxu0 0.0
    %968 = vmatprep.subr.mxu0 0.0
    %969 = vmatpush2.msra.mxu0 0.0
    %970 = vmatprep.subr.mxu0 0.0
    %971 = vmatpush2.msra.mxu0 0.0
    %972 = vmatprep.subr.mxu0 0.0
    %973 = vmatpush2.msra.mxu0 0.0
    %974 = vmatprep.mubr.f32.mxu0 0.0
    %975 = vmatmul.mubr.f32.gmra.mxu0 %v908
    %v976 = vpop.f32.mrf.mxu0
    %v977 = vadd.f32 0.0, %v976
    %v978 = vpop.f32.mrf.mxu0
    %v979 = vadd.f32 0.0, %v978
    %980 = vdwg.mxu0
    %v981 = vadd.f32 %v173, %v977
    %v983 = vrot.slane %v979, 2
    %v985 = vadd.f32 %v181, %v983
    %v986 = vxor.u32 %v981, 2147483648
    %v987 = vmul.f32 %v986, 1.442695
    %v988 = vpow.pop %v987
    %v989 = vadd.f32 %v988, 1.0
    %v990 = vrcp.pop %v989
    %v991 = vmul.f32 1.0, %v990
    %v992 = vxor.u32 %v985, 2147483648
    %v993 = vmul.f32 %v992, 1.442695
    %v994 = vpow.pop %v993
    %v995 = vadd.f32 %v994, 1.0
    %v996 = vrcp.pop %v995
    %v997 = vmul.f32 1.0, %v996
    %v998 = vtanh.pop %v981
    %v999 = vtanh.pop %v985
    %1001 = vrot.lane.b32.xlu0 %v883, 32
    %v1002 = vpop.permute.xlu0 %1001
    %v1004 = vmul.f32 %v991, %v1002
    %1006 = vrot.lane.b32.xlu0 %v998, 64
    %v1007 = vpop.permute.xlu0 %1006
    %v1009 = vmul.f32 %v991, %v1007
    %1011 = vrot.lane.b32.xlu0 %v1009, 32
    %v1012 = vpop.permute.xlu0 %1011
    %v1014 = vadd.f32 %v1004, %v1012
    %v1015 = vtanh.pop %v1014
    %1017 = vrot.lane.b32.xlu0 %v1015, 64
    %v1018 = vpop.permute.xlu0 %1017
    %v1020 = vmul.f32 %v991, %v1018
    %v1022 = vrot.slane %v895, 2
    %v1024 = vmul.f32 %v997, %v1022
    %1026 = vrot.lane.b32.xlu0 %v999, 64
    %v1027 = vpop.permute.xlu0 %1026
    %v1029 = vmul.f32 %v997, %v1027
    %1031 = vrot.lane.b32.xlu0 %v1029, 32
    %v1032 = vpop.permute.xlu0 %1031
    %v1034 = vadd.f32 %v1024, %v1032
    %v1035 = vtanh.pop %v1034
    %1037 = vrot.lane.b32.xlu0 %v1035, 64
    %v1038 = vpop.permute.xlu0 %1037
    %v1040 = vmul.f32 %v997, %v1038
    %vm1041 = vcmp.gt.s32.totalorder %v62, 4
    %vm1042 = vcmp.gt.s32.totalorder %v62, 11
    %v1043 = vsel %vm1041, 1, 0
    %1044 = vset.pattern.permute.xlu0 0
    %1045 = vperm.xlu0 %1044, %v1043
    %v1046 = vpop.permute.xlu0 %1045
    %vm1047 = vcmp.eq.s32.totalorder %v1046, 1
    %v1048 = vsel %vm1047, %v1014, %v1002
    %1050 = vrot.lane.b32.xlu0 %v889, 96
    %v1051 = vpop.permute.xlu0 %1050
    %v1053 = vsel %vm1047, %v1020, %v1051
    %v1054 = vsel %vm1042, 1, 0
    %1055 = vset.pattern.permute.xlu0 0
    %1056 = vperm.xlu0 %1055, %v1054
    %v1057 = vpop.permute.xlu0 %1056
    %vm1058 = vcmp.eq.s32.totalorder %v1057, 1
    %v1060 = vrot.slane %v1034, 6
    %1061 = vrot.lane.b32.xlu0 %v1060, 96
    %v1062 = vpop.permute.xlu0 %1061
    %1064 = vrot.lane.b32.xlu0 %v895, 96
    %v1065 = vpop.permute.xlu0 %1064
    %v1067 = vsel %vm1058, %v1062, %v1065
    %v1069 = vrot.slane %v1040, 6
    %1070 = vrot.lane.b32.xlu0 %v1069, 32
    %v1071 = vpop.permute.xlu0 %1070
    %1073 = vrot.lane.b32.xlu0 %v899, 32
    %v1074 = vpop.permute.xlu0 %1073
    %v1076 = vsel %vm1058, %v1071, %v1074
    %v1077 = vsel %vm1047, %v1020, 0.0
    %v1078 = vsel %vm1058, %v1071, 0.0
    %1080 = vrot.lane.b32.xlu0 %v1053, 32
    %v1081 = vpop.permute.xlu0 %1080
    %1084 = vrot.lane.b32.xlu0 %v1076, 32
    %v1085 = vpop.permute.xlu0 %1084
    %v1087 = vsel %vm87, %v1081, %v1085
    %v1089 = vsel %vm205, %v1087, 0
    %1091 = vmatprep.subr.mxu0 0.0
    %1092 = vmatpush1.msra.mxu0 0.0
    %1093 = vmatprep.subr.mxu0 0.0
    %1094 = vmatpush1.msra.mxu0 0.0
    %1095 = vmatprep.subr.mxu0 0.0
    %1096 = vmatpush1.msra.mxu0 0.0
    %1097 = vmatprep.subr.mxu0 0.0
    %1098 = vmatpush1.msra.mxu0 0.0
    %1099 = vmatprep.subr.mxu0 0.0
    %1100 = vmatpush1.msra.mxu0 0.0
    %1101 = vmatprep.subr.mxu0 0.0
    %1102 = vmatpush1.msra.mxu0 0.0
    %1103 = vmatprep.subr.mxu0 0.0
    %1104 = vmatpush1.msra.mxu0 0.0
    %1105 = vmatprep.subr.mxu0 0.0
    %1106 = vmatpush1.msra.mxu0 0.0
    %1107 = vmatprep.subr.mxu0 %v204
    %1108 = vmatpush1.msra.mxu0 %v203
    %1109 = vmatprep.subr.mxu0 %v202
    %1110 = vmatpush1.msra.mxu0 %v201
    %1111 = vmatprep.subr.mxu0 %v200
    %1112 = vmatpush1.msra.mxu0 %v199
    %1113 = vmatprep.subr.mxu0 %v198
    %1114 = vmatpush1.msra.mxu0 %v197
    %1115 = vmatprep.subr.mxu0 %v196
    %1116 = vmatpush1.msra.mxu0 %v195
    %1117 = vmatprep.subr.mxu0 %v194
    %1118 = vmatpush1.msra.mxu0 %v193
    %1119 = vmatprep.subr.mxu0 %v192
    %1120 = vmatpush1.msra.mxu0 %v191
    %1121 = vmatprep.subr.mxu0 %v190
    %1122 = vmatpush1.msra.mxu0 %v189
    %1123 = vmatprep.subr.mxu0 0.0
    %1124 = vmatpush2.msra.mxu0 0.0
    %1125 = vmatprep.subr.mxu0 0.0
    %1126 = vmatpush2.msra.mxu0 0.0
    %1127 = vmatprep.subr.mxu0 0.0
    %1128 = vmatpush2.msra.mxu0 0.0
    %1129 = vmatprep.subr.mxu0 0.0
    %1130 = vmatpush2.msra.mxu0 0.0
    %1131 = vmatprep.subr.mxu0 0.0
    %1132 = vmatpush2.msra.mxu0 0.0
    %1133 = vmatprep.subr.mxu0 0.0
    %1134 = vmatpush2.msra.mxu0 0.0
    %1135 = vmatprep.subr.mxu0 0.0
    %1136 = vmatpush2.msra.mxu0 0.0
    %1137 = vmatprep.subr.mxu0 0.0
    %1138 = vmatpush2.msra.mxu0 0.0
    %1139 = vmatprep.subr.mxu0 0.0
    %1140 = vmatpush2.msra.mxu0 0.0
    %1141 = vmatprep.subr.mxu0 0.0
    %1142 = vmatpush2.msra.mxu0 0.0
    %1143 = vmatprep.subr.mxu0 0.0
    %1144 = vmatpush2.msra.mxu0 0.0
    %1145 = vmatprep.subr.mxu0 0.0
    %1146 = vmatpush2.msra.mxu0 0.0
    %1147 = vmatprep.subr.mxu0 0.0
    %1148 = vmatpush2.msra.mxu0 0.0
    %1149 = vmatprep.subr.mxu0 0.0
    %1150 = vmatpush2.msra.mxu0 0.0
    %1151 = vmatprep.subr.mxu0 0.0
    %1152 = vmatpush2.msra.mxu0 0.0
    %1153 = vmatprep.subr.mxu0 0.0
    %1154 = vmatpush2.msra.mxu0 0.0
    %1155 = vmatprep.mubr.f32.mxu0 0.0
    %1156 = vmatmul.mubr.f32.gmra.mxu0 %v1089
    %v1157 = vpop.f32.mrf.mxu0
    %v1158 = vadd.f32 0.0, %v1157
    %v1159 = vpop.f32.mrf.mxu0
    %v1160 = vadd.f32 0.0, %v1159
    %1161 = vdwg.mxu0
    %v1163 = vrot.slane %v1158, 6
    %v1165 = vadd.f32 %v173, %v1163
    %v1167 = vrot.slane %v1160, 4
    %v1169 = vadd.f32 %v181, %v1167
    %v1170 = vxor.u32 %v1165, 2147483648
    %v1171 = vmul.f32 %v1170, 1.442695
    %v1172 = vpow.pop %v1171
    %v1173 = vadd.f32 %v1172, 1.0
    %v1174 = vrcp.pop %v1173
    %v1175 = vmul.f32 1.0, %v1174
    %v1176 = vxor.u32 %v1169, 2147483648
    %v1177 = vmul.f32 %v1176, 1.442695
    %v1178 = vpow.pop %v1177
    %v1179 = vadd.f32 %v1178, 1.0
    %v1180 = vrcp.pop %v1179
    %v1181 = vmul.f32 1.0, %v1180
    %v1182 = vtanh.pop %v1165
    %v1183 = vtanh.pop %v1169
    %v1185 = vrot.slane %v1048, 6
    %v1187 = vmul.f32 %v1175, %v1185
    %1189 = vrot.lane.b32.xlu0 %v1182, 64
    %v1190 = vpop.permute.xlu0 %1189
    %v1192 = vmul.f32 %v1175, %v1190
    %1194 = vrot.lane.b32.xlu0 %v1192, 32
    %v1195 = vpop.permute.xlu0 %1194
    %v1197 = vadd.f32 %v1187, %v1195
    %v1198 = vtanh.pop %v1197
    %1200 = vrot.lane.b32.xlu0 %v1198, 64
    %v1201 = vpop.permute.xlu0 %1200
    %v1203 = vmul.f32 %v1175, %v1201
    %v1205 = vrot.slane %v1067, 4
    %1206 = vrot.lane.b32.xlu0 %v1205, 32
    %v1207 = vpop.permute.xlu0 %1206
    %v1209 = vmul.f32 %v1181, %v1207
    %1211 = vrot.lane.b32.xlu0 %v1183, 64
    %v1212 = vpop.permute.xlu0 %1211
    %v1214 = vmul.f32 %v1181, %v1212
    %1216 = vrot.lane.b32.xlu0 %v1214, 32
    %v1217 = vpop.permute.xlu0 %1216
    %v1219 = vadd.f32 %v1209, %v1217
    %v1220 = vtanh.pop %v1219
    %1222 = vrot.lane.b32.xlu0 %v1220, 64
    %v1223 = vpop.permute.xlu0 %1222
    %v1225 = vmul.f32 %v1181, %v1223
    %vm1226 = vcmp.gt.s32.totalorder %v62, 5
    %vm1227 = vcmp.gt.s32.totalorder %v62, 10
    %v1228 = vsel %vm1226, 1, 0
    %1229 = vset.pattern.permute.xlu0 0
    %1230 = vperm.xlu0 %1229, %v1228
    %v1231 = vpop.permute.xlu0 %1230
    %vm1232 = vcmp.eq.s32.totalorder %v1231, 1
    %v1234 = vrot.slane %v1197, 2
    %1235 = vrot.lane.b32.xlu0 %v1234, 96
    %v1236 = vpop.permute.xlu0 %1235
    %1238 = vrot.lane.b32.xlu0 %v1048, 96
    %v1239 = vpop.permute.xlu0 %1238
    %v1241 = vsel %vm1232, %v1236, %v1239
    %v1243 = vrot.slane %v1203, 2
    %1244 = vrot.lane.b32.xlu0 %v1243, 32
    %v1245 = vpop.permute.xlu0 %1244
    %v1247 = vsel %vm1232, %v1245, %v1081
    %v1248 = vsel %vm1227, 1, 0
    %1249 = vset.pattern.permute.xlu0 0
    %1250 = vperm.xlu0 %1249, %v1248
    %v1251 = vpop.permute.xlu0 %1250
    %vm1252 = vcmp.eq.s32.totalorder %v1251, 1
    %v1254 = vrot.slane %v1219, 4
    %1255 = vrot.lane.b32.xlu0 %v1254, 96
    %v1256 = vpop.permute.xlu0 %1255
    %v1258 = vsel %vm1252, %v1256, %v1067
    %v1260 = vrot.slane %v1225, 4
    %1261 = vrot.lane.b32.xlu0 %v1260, 32
    %v1262 = vpop.permute.xlu0 %1261
    %v1264 = vsel %vm1252, %v1262, %v1076
    %v1265 = vsel %vm1232, %v1245, 0.0
    %v1266 = vsel %vm1252, %v1262, 0.0
    %1268 = vrot.lane.b32.xlu0 %v1264, 32
    %v1269 = vpop.permute.xlu0 %1268
    %v1271 = vsel %vm87, %v1247, %v1269
    %v1273 = vsel %vm205, %v1271, 0
    %1275 = vmatprep.subr.mxu0 0.0
    %1276 = vmatpush1.msra.mxu0 0.0
    %1277 = vmatprep.subr.mxu0 0.0
    %1278 = vmatpush1.msra.mxu0 0.0
    %1279 = vmatprep.subr.mxu0 0.0
    %1280 = vmatpush1.msra.mxu0 0.0
    %1281 = vmatprep.subr.mxu0 0.0
    %1282 = vmatpush1.msra.mxu0 0.0
    %1283 = vmatprep.subr.mxu0 0.0
    %1284 = vmatpush1.msra.mxu0 0.0
    %1285 = vmatprep.subr.mxu0 0.0
    %1286 = vmatpush1.msra.mxu0 0.0
    %1287 = vmatprep.subr.mxu0 0.0
    %1288 = vmatpush1.msra.mxu0 0.0
    %1289 = vmatprep.subr.mxu0 0.0
    %1290 = vmatpush1.msra.mxu0 0.0
    %1291 = vmatprep.subr.mxu0 %v204
    %1292 = vmatpush1.msra.mxu0 %v203
    %1293 = vmatprep.subr.mxu0 %v202
    %1294 = vmatpush1.msra.mxu0 %v201
    %1295 = vmatprep.subr.mxu0 %v200
    %1296 = vmatpush1.msra.mxu0 %v199
    %1297 = vmatprep.subr.mxu0 %v198
    %1298 = vmatpush1.msra.mxu0 %v197
    %1299 = vmatprep.subr.mxu0 %v196
    %1300 = vmatpush1.msra.mxu0 %v195
    %1301 = vmatprep.subr.mxu0 %v194
    %1302 = vmatpush1.msra.mxu0 %v193
    %1303 = vmatprep.subr.mxu0 %v192
    %1304 = vmatpush1.msra.mxu0 %v191
    %1305 = vmatprep.subr.mxu0 %v190
    %1306 = vmatpush1.msra.mxu0 %v189
    %1307 = vmatprep.subr.mxu0 0.0
    %1308 = vmatpush2.msra.mxu0 0.0
    %1309 = vmatprep.subr.mxu0 0.0
    %1310 = vmatpush2.msra.mxu0 0.0
    %1311 = vmatprep.subr.mxu0 0.0
    %1312 = vmatpush2.msra.mxu0 0.0
    %1313 = vmatprep.subr.mxu0 0.0
    %1314 = vmatpush2.msra.mxu0 0.0
    %1315 = vmatprep.subr.mxu0 0.0
    %1316 = vmatpush2.msra.mxu0 0.0
    %1317 = vmatprep.subr.mxu0 0.0
    %1318 = vmatpush2.msra.mxu0 0.0
    %1319 = vmatprep.subr.mxu0 0.0
    %1320 = vmatpush2.msra.mxu0 0.0
    %1321 = vmatprep.subr.mxu0 0.0
    %1322 = vmatpush2.msra.mxu0 0.0
    %1323 = vmatprep.subr.mxu0 0.0
    %1324 = vmatpush2.msra.mxu0 0.0
    %1325 = vmatprep.subr.mxu0 0.0
    %1326 = vmatpush2.msra.mxu0 0.0
    %1327 = vmatprep.subr.mxu0 0.0
    %1328 = vmatpush2.msra.mxu0 0.0
    %1329 = vmatprep.subr.mxu0 0.0
    %1330 = vmatpush2.msra.mxu0 0.0
    %1331 = vmatprep.subr.mxu0 0.0
    %1332 = vmatpush2.msra.mxu0 0.0
    %1333 = vmatprep.subr.mxu0 0.0
    %1334 = vmatpush2.msra.mxu0 0.0
    %1335 = vmatprep.subr.mxu0 0.0
    %1336 = vmatpush2.msra.mxu0 0.0
    %1337 = vmatprep.subr.mxu0 0.0
    %1338 = vmatpush2.msra.mxu0 0.0
    %1339 = vmatprep.mubr.f32.mxu0 0.0
    %1340 = vmatmul.mubr.f32.gmra.mxu0 %v1273
    %v1341 = vpop.f32.mrf.mxu0
    %v1342 = vadd.f32 0.0, %v1341
    %v1343 = vpop.f32.mrf.mxu0
    %v1344 = vadd.f32 0.0, %v1343
    %1345 = vdwg.mxu0
    %v1347 = vrot.slane %v1342, 4
    %v1349 = vadd.f32 %v173, %v1347
    %v1351 = vrot.slane %v1344, 6
    %v1353 = vadd.f32 %v181, %v1351
    %v1354 = vxor.u32 %v1349, 2147483648
    %v1355 = vmul.f32 %v1354, 1.442695
    %v1356 = vpow.pop %v1355
    %v1357 = vadd.f32 %v1356, 1.0
    %v1358 = vrcp.pop %v1357
    %v1359 = vmul.f32 1.0, %v1358
    %v1360 = vxor.u32 %v1353, 2147483648
    %v1361 = vmul.f32 %v1360, 1.442695
    %v1362 = vpow.pop %v1361
    %v1363 = vadd.f32 %v1362, 1.0
    %v1364 = vrcp.pop %v1363
    %v1365 = vmul.f32 1.0, %v1364
    %v1366 = vtanh.pop %v1349
    %v1367 = vtanh.pop %v1353
    %v1369 = vrot.slane %v1241, 4
    %1370 = vrot.lane.b32.xlu0 %v1369, 32
    %v1371 = vpop.permute.xlu0 %1370
    %v1373 = vmul.f32 %v1359, %v1371
    %1375 = vrot.lane.b32.xlu0 %v1366, 64
    %v1376 = vpop.permute.xlu0 %1375
    %v1378 = vmul.f32 %v1359, %v1376
    %1380 = vrot.lane.b32.xlu0 %v1378, 32
    %v1381 = vpop.permute.xlu0 %1380
    %v1383 = vadd.f32 %v1373, %v1381
    %v1384 = vtanh.pop %v1383
    %1386 = vrot.lane.b32.xlu0 %v1384, 64
    %v1387 = vpop.permute.xlu0 %1386
    %v1389 = vmul.f32 %v1359, %v1387
    %v1391 = vrot.slane %v1258, 6
    %1392 = vrot.lane.b32.xlu0 %v1391, 32
    %v1393 = vpop.permute.xlu0 %1392
    %v1395 = vmul.f32 %v1365, %v1393
    %1397 = vrot.lane.b32.xlu0 %v1367, 64
    %v1398 = vpop.permute.xlu0 %1397
    %v1400 = vmul.f32 %v1365, %v1398
    %1402 = vrot.lane.b32.xlu0 %v1400, 32
    %v1403 = vpop.permute.xlu0 %1402
    %v1405 = vadd.f32 %v1395, %v1403
    %v1406 = vtanh.pop %v1405
    %1408 = vrot.lane.b32.xlu0 %v1406, 64
    %v1409 = vpop.permute.xlu0 %1408
    %v1411 = vmul.f32 %v1365, %v1409
    %vm1412 = vcmp.gt.s32.totalorder %v62, 6
    %vm1413 = vcmp.gt.s32.totalorder %v62, 9
    %v1414 = vsel %vm1412, 1, 0
    %1415 = vset.pattern.permute.xlu0 0
    %1416 = vperm.xlu0 %1415, %v1414
    %v1417 = vpop.permute.xlu0 %1416
    %vm1418 = vcmp.eq.s32.totalorder %v1417, 1
    %v1420 = vrot.slane %v1383, 4
    %1421 = vrot.lane.b32.xlu0 %v1420, 96
    %v1422 = vpop.permute.xlu0 %1421
    %v1424 = vsel %vm1418, %v1422, %v1241
    %v1426 = vrot.slane %v1389, 4
    %1427 = vrot.lane.b32.xlu0 %v1426, 32
    %v1428 = vpop.permute.xlu0 %1427
    %v1430 = vsel %vm1418, %v1428, %v1247
    %v1431 = vsel %vm1413, 1, 0
    %1432 = vset.pattern.permute.xlu0 0
    %1433 = vperm.xlu0 %1432, %v1431
    %v1434 = vpop.permute.xlu0 %1433
    %vm1435 = vcmp.eq.s32.totalorder %v1434, 1
    %v1437 = vrot.slane %v1405, 2
    %1438 = vrot.lane.b32.xlu0 %v1437, 96
    %v1439 = vpop.permute.xlu0 %1438
    %v1441 = vsel %vm1435, %v1439, %v1258
    %v1443 = vrot.slane %v1411, 2
    %1444 = vrot.lane.b32.xlu0 %v1443, 32
    %v1445 = vpop.permute.xlu0 %1444
    %v1447 = vsel %vm1435, %v1445, %v1264
    %v1448 = vsel %vm1418, %v1428, 0.0
    %v1449 = vsel %vm1435, %v1445, 0.0
    %1451 = vrot.lane.b32.xlu0 %v1447, 32
    %v1452 = vpop.permute.xlu0 %1451
    %v1454 = vsel %vm87, %v1430, %v1452
    %v1456 = vsel %vm205, %v1454, 0
    %1458 = vmatprep.subr.mxu0 0.0
    %1459 = vmatpush1.msra.mxu0 0.0
    %1460 = vmatprep.subr.mxu0 0.0
    %1461 = vmatpush1.msra.mxu0 0.0
    %1462 = vmatprep.subr.mxu0 0.0
    %1463 = vmatpush1.msra.mxu0 0.0
    %1464 = vmatprep.subr.mxu0 0.0
    %1465 = vmatpush1.msra.mxu0 0.0
    %1466 = vmatprep.subr.mxu0 0.0
    %1467 = vmatpush1.msra.mxu0 0.0
    %1468 = vmatprep.subr.mxu0 0.0
    %1469 = vmatpush1.msra.mxu0 0.0
    %1470 = vmatprep.subr.mxu0 0.0
    %1471 = vmatpush1.msra.mxu0 0.0
    %1472 = vmatprep.subr.mxu0 0.0
    %1473 = vmatpush1.msra.mxu0 0.0
    %1474 = vmatprep.subr.mxu0 %v204
    %1475 = vmatpush1.msra.mxu0 %v203
    %1476 = vmatprep.subr.mxu0 %v202
    %1477 = vmatpush1.msra.mxu0 %v201
    %1478 = vmatprep.subr.mxu0 %v200
    %1479 = vmatpush1.msra.mxu0 %v199
    %1480 = vmatprep.subr.mxu0 %v198
    %1481 = vmatpush1.msra.mxu0 %v197
    %1482 = vmatprep.subr.mxu0 %v196
    %1483 = vmatpush1.msra.mxu0 %v195
    %1484 = vmatprep.subr.mxu0 %v194
    %1485 = vmatpush1.msra.mxu0 %v193
    %1486 = vmatprep.subr.mxu0 %v192
    %1487 = vmatpush1.msra.mxu0 %v191
    %1488 = vmatprep.subr.mxu0 %v190
    %1489 = vmatpush1.msra.mxu0 %v189
    %1490 = vmatprep.subr.mxu0 0.0
    %1491 = vmatpush2.msra.mxu0 0.0
    %1492 = vmatprep.subr.mxu0 0.0
    %1493 = vmatpush2.msra.mxu0 0.0
    %1494 = vmatprep.subr.mxu0 0.0
    %1495 = vmatpush2.msra.mxu0 0.0
    %1496 = vmatprep.subr.mxu0 0.0
    %1497 = vmatpush2.msra.mxu0 0.0
    %1498 = vmatprep.subr.mxu0 0.0
    %1499 = vmatpush2.msra.mxu0 0.0
    %1500 = vmatprep.subr.mxu0 0.0
    %1501 = vmatpush2.msra.mxu0 0.0
    %1502 = vmatprep.subr.mxu0 0.0
    %1503 = vmatpush2.msra.mxu0 0.0
    %1504 = vmatprep.subr.mxu0 0.0
    %1505 = vmatpush2.msra.mxu0 0.0
    %1506 = vmatprep.subr.mxu0 0.0
    %1507 = vmatpush2.msra.mxu0 0.0
    %1508 = vmatprep.subr.mxu0 0.0
    %1509 = vmatpush2.msra.mxu0 0.0
    %1510 = vmatprep.subr.mxu0 0.0
    %1511 = vmatpush2.msra.mxu0 0.0
    %1512 = vmatprep.subr.mxu0 0.0
    %1513 = vmatpush2.msra.mxu0 0.0
    %1514 = vmatprep.subr.mxu0 0.0
    %1515 = vmatpush2.msra.mxu0 0.0
    %1516 = vmatprep.subr.mxu0 0.0
    %1517 = vmatpush2.msra.mxu0 0.0
    %1518 = vmatprep.subr.mxu0 0.0
    %1519 = vmatpush2.msra.mxu0 0.0
    %1520 = vmatprep.subr.mxu0 0.0
    %1521 = vmatpush2.msra.mxu0 0.0
    %1522 = vmatprep.mubr.f32.mxu0 0.0
    %1523 = vmatmul.mubr.f32.gmra.mxu0 %v1456
    %v1524 = vpop.f32.mrf.mxu0
    %v1525 = vadd.f32 0.0, %v1524
    %v1526 = vpop.f32.mrf.mxu0
    %v1527 = vadd.f32 0.0, %v1526
    %1528 = vdwg.mxu0
    %v1530 = vrot.slane %v1525, 2
    %v1532 = vadd.f32 %v173, %v1530
    %v1533 = vadd.f32 %v181, %v1527
    %v1534 = vxor.u32 %v1532, 2147483648
    %v1535 = vmul.f32 %v1534, 1.442695
    %v1536 = vpow.pop %v1535
    %v1537 = vadd.f32 %v1536, 1.0
    %v1538 = vrcp.pop %v1537
    %v1539 = vmul.f32 1.0, %v1538
    %v1540 = vxor.u32 %v1533, 2147483648
    %v1541 = vmul.f32 %v1540, 1.442695
    %v1542 = vpow.pop %v1541
    %v1543 = vadd.f32 %v1542, 1.0
    %v1544 = vrcp.pop %v1543
    %v1545 = vmul.f32 1.0, %v1544
    %v1546 = vtanh.pop %v1532
    %v1547 = vtanh.pop %v1533
    %v1549 = vrot.slane %v1424, 2
    %1550 = vrot.lane.b32.xlu0 %v1549, 32
    %v1551 = vpop.permute.xlu0 %1550
    %v1553 = vmul.f32 %v1539, %v1551
    %1555 = vrot.lane.b32.xlu0 %v1546, 64
    %v1556 = vpop.permute.xlu0 %1555
    %v1558 = vmul.f32 %v1539, %v1556
    %1560 = vrot.lane.b32.xlu0 %v1558, 32
    %v1561 = vpop.permute.xlu0 %1560
    %v1563 = vadd.f32 %v1553, %v1561
    %v1564 = vtanh.pop %v1563
    %1566 = vrot.lane.b32.xlu0 %v1564, 64
    %v1567 = vpop.permute.xlu0 %1566
    %v1569 = vmul.f32 %v1539, %v1567
    %1571 = vrot.lane.b32.xlu0 %v1441, 32
    %v1572 = vpop.permute.xlu0 %1571
    %v1574 = vmul.f32 %v1545, %v1572
    %1576 = vrot.lane.b32.xlu0 %v1547, 64
    %v1577 = vpop.permute.xlu0 %1576
    %v1579 = vmul.f32 %v1545, %v1577
    %1581 = vrot.lane.b32.xlu0 %v1579, 32
    %v1582 = vpop.permute.xlu0 %1581
    %v1584 = vadd.f32 %v1574, %v1582
    %v1585 = vtanh.pop %v1584
    %1587 = vrot.lane.b32.xlu0 %v1585, 64
    %v1588 = vpop.permute.xlu0 %1587
    %v1590 = vmul.f32 %v1545, %v1588
    %vm1591 = vcmp.gt.s32.totalorder %v62, 7
    %vm1592 = vcmp.gt.s32.totalorder %v62, 8
    %v1593 = vsel %vm1591, 1, 0
    %1594 = vset.pattern.permute.xlu0 0
    %1595 = vperm.xlu0 %1594, %v1593
    %v1596 = vpop.permute.xlu0 %1595
    %vm1597 = vcmp.eq.s32.totalorder %v1596, 1
    %v1599 = vrot.slane %v1563, 6
    %1600 = vrot.lane.b32.xlu0 %v1599, 96
    %v1601 = vpop.permute.xlu0 %1600
    %v1603 = vsel %vm1597, %v1601, %v1424
    %v1605 = vrot.slane %v1569, 6
    %1606 = vrot.lane.b32.xlu0 %v1605, 32
    %v1607 = vpop.permute.xlu0 %1606
    %v1609 = vsel %vm1597, %v1607, %v1430
    %v1610 = vsel %vm1592, 1, 0
    %1611 = vset.pattern.permute.xlu0 0
    %1612 = vperm.xlu0 %1611, %v1610
    %v1613 = vpop.permute.xlu0 %1612
    %vm1614 = vcmp.eq.s32.totalorder %v1613, 1
    %v1615 = vsel %vm1614, %v1584, %v1572
    %1616 = vrot.lane.b32.xlu0 %v1447, 96
    %v1617 = vpop.permute.xlu0 %1616
    %v1619 = vsel %vm1614, %v1590, %v1617
    %v1620 = vsel %vm1597, %v1607, 0.0
    %v1621 = vsel %vm1614, %v1590, 0.0
    %1623 = vrot.lane.b32.xlu0 %v1619, 64
    %v1624 = vpop.permute.xlu0 %1623
    %v1626 = vsel %vm87, %v1609, %v1624
    %v1628 = vsel %vm205, %v1626, 0
    %1630 = vmatprep.subr.mxu0 0.0
    %1631 = vmatpush1.msra.mxu0 0.0
    %1632 = vmatprep.subr.mxu0 0.0
    %1633 = vmatpush1.msra.mxu0 0.0
    %1634 = vmatprep.subr.mxu0 0.0
    %1635 = vmatpush1.msra.mxu0 0.0
    %1636 = vmatprep.subr.mxu0 0.0
    %1637 = vmatpush1.msra.mxu0 0.0
    %1638 = vmatprep.subr.mxu0 0.0
    %1639 = vmatpush1.msra.mxu0 0.0
    %1640 = vmatprep.subr.mxu0 0.0
    %1641 = vmatpush1.msra.mxu0 0.0
    %1642 = vmatprep.subr.mxu0 0.0
    %1643 = vmatpush1.msra.mxu0 0.0
    %1644 = vmatprep.subr.mxu0 0.0
    %1645 = vmatpush1.msra.mxu0 0.0
    %1646 = vmatprep.subr.mxu0 %v204
    %1647 = vmatpush1.msra.mxu0 %v203
    %1648 = vmatprep.subr.mxu0 %v202
    %1649 = vmatpush1.msra.mxu0 %v201
    %1650 = vmatprep.subr.mxu0 %v200
    %1651 = vmatpush1.msra.mxu0 %v199
    %1652 = vmatprep.subr.mxu0 %v198
    %1653 = vmatpush1.msra.mxu0 %v197
    %1654 = vmatprep.subr.mxu0 %v196
    %1655 = vmatpush1.msra.mxu0 %v195
    %1656 = vmatprep.subr.mxu0 %v194
    %1657 = vmatpush1.msra.mxu0 %v193
    %1658 = vmatprep.subr.mxu0 %v192
    %1659 = vmatpush1.msra.mxu0 %v191
    %1660 = vmatprep.subr.mxu0 %v190
    %1661 = vmatpush1.msra.mxu0 %v189
    %1662 = vmatprep.subr.mxu0 0.0
    %1663 = vmatpush2.msra.mxu0 0.0
    %1664 = vmatprep.subr.mxu0 0.0
    %1665 = vmatpush2.msra.mxu0 0.0
    %1666 = vmatprep.subr.mxu0 0.0
    %1667 = vmatpush2.msra.mxu0 0.0
    %1668 = vmatprep.subr.mxu0 0.0
    %1669 = vmatpush2.msra.mxu0 0.0
    %1670 = vmatprep.subr.mxu0 0.0
    %1671 = vmatpush2.msra.mxu0 0.0
    %1672 = vmatprep.subr.mxu0 0.0
    %1673 = vmatpush2.msra.mxu0 0.0
    %1674 = vmatprep.subr.mxu0 0.0
    %1675 = vmatpush2.msra.mxu0 0.0
    %1676 = vmatprep.subr.mxu0 0.0
    %1677 = vmatpush2.msra.mxu0 0.0
    %1678 = vmatprep.subr.mxu0 0.0
    %1679 = vmatpush2.msra.mxu0 0.0
    %1680 = vmatprep.subr.mxu0 0.0
    %1681 = vmatpush2.msra.mxu0 0.0
    %1682 = vmatprep.subr.mxu0 0.0
    %1683 = vmatpush2.msra.mxu0 0.0
    %1684 = vmatprep.subr.mxu0 0.0
    %1685 = vmatpush2.msra.mxu0 0.0
    %1686 = vmatprep.subr.mxu0 0.0
    %1687 = vmatpush2.msra.mxu0 0.0
    %1688 = vmatprep.subr.mxu0 0.0
    %1689 = vmatpush2.msra.mxu0 0.0
    %1690 = vmatprep.subr.mxu0 0.0
    %1691 = vmatpush2.msra.mxu0 0.0
    %1692 = vmatprep.subr.mxu0 0.0
    %1693 = vmatpush2.msra.mxu0 0.0
    %1694 = vmatprep.mubr.f32.mxu0 0.0
    %1695 = vmatmul.mubr.f32.gmra.mxu0 %v1628
    %v1696 = vpop.f32.mrf.mxu0
    %v1697 = vadd.f32 0.0, %v1696
    %v1698 = vpop.f32.mrf.mxu0
    %v1699 = vadd.f32 0.0, %v1698
    %1700 = vdwg.mxu0
    %v1701 = vadd.f32 %v179, %v1697
    %v1703 = vrot.slane %v1699, 2
    %v1705 = vadd.f32 %v175, %v1703
    %v1706 = vxor.u32 %v1701, 2147483648
    %v1707 = vmul.f32 %v1706, 1.442695
    %v1708 = vpow.pop %v1707
    %v1709 = vadd.f32 %v1708, 1.0
    %v1710 = vrcp.pop %v1709
    %v1711 = vmul.f32 1.0, %v1710
    %v1712 = vxor.u32 %v1705, 2147483648
    %v1713 = vmul.f32 %v1712, 1.442695
    %v1714 = vpow.pop %v1713
    %v1715 = vadd.f32 %v1714, 1.0
    %v1716 = vrcp.pop %v1715
    %v1717 = vmul.f32 1.0, %v1716
    %v1718 = vtanh.pop %v1701
    %v1719 = vtanh.pop %v1705
    %1721 = vrot.lane.b32.xlu0 %v1603, 32
    %v1722 = vpop.permute.xlu0 %1721
    %v1724 = vmul.f32 %v1711, %v1722
    %1726 = vrot.lane.b32.xlu0 %v1718, 64
    %v1727 = vpop.permute.xlu0 %1726
    %v1729 = vmul.f32 %v1711, %v1727
    %1731 = vrot.lane.b32.xlu0 %v1729, 32
    %v1732 = vpop.permute.xlu0 %1731
    %v1734 = vadd.f32 %v1724, %v1732
    %v1735 = vtanh.pop %v1734
    %1737 = vrot.lane.b32.xlu0 %v1735, 64
    %v1738 = vpop.permute.xlu0 %1737
    %v1740 = vmul.f32 %v1711, %v1738
    %v1742 = vrot.slane %v1615, 2
    %v1744 = vmul.f32 %v1717, %v1742
    %1746 = vrot.lane.b32.xlu0 %v1719, 64
    %v1747 = vpop.permute.xlu0 %1746
    %v1749 = vmul.f32 %v1717, %v1747
    %1751 = vrot.lane.b32.xlu0 %v1749, 32
    %v1752 = vpop.permute.xlu0 %1751
    %v1754 = vadd.f32 %v1744, %v1752
    %v1755 = vtanh.pop %v1754
    %1757 = vrot.lane.b32.xlu0 %v1755, 64
    %v1758 = vpop.permute.xlu0 %1757
    %v1760 = vmul.f32 %v1717, %v1758
    %v1761 = vsel %vm1614, %v1734, %v1722
    %1763 = vrot.lane.b32.xlu0 %v1609, 96
    %v1764 = vpop.permute.xlu0 %1763
    %v1766 = vsel %vm1614, %v1740, %v1764
    %v1768 = vrot.slane %v1754, 6
    %1769 = vrot.lane.b32.xlu0 %v1768, 96
    %v1770 = vpop.permute.xlu0 %1769
    %1772 = vrot.lane.b32.xlu0 %v1615, 96
    %v1773 = vpop.permute.xlu0 %1772
    %v1775 = vsel %vm1597, %v1770, %v1773
    %v1777 = vrot.slane %v1760, 6
    %1778 = vrot.lane.b32.xlu0 %v1777, 32
    %v1779 = vpop.permute.xlu0 %1778
    %1781 = vrot.lane.b32.xlu0 %v1619, 32
    %v1782 = vpop.permute.xlu0 %1781
    %v1784 = vsel %vm1597, %v1779, %v1782
    %v1785 = vsel %vm1614, %v1740, 0.0
    %v1786 = vsel %vm1597, %v1779, 0.0
    %1788 = vrot.lane.b32.xlu0 %v1766, 32
    %v1789 = vpop.permute.xlu0 %1788
    %1792 = vrot.lane.b32.xlu0 %v1784, 32
    %v1793 = vpop.permute.xlu0 %1792
    %v1795 = vsel %vm87, %v1789, %v1793
    %v1797 = vsel %vm205, %v1795, 0
    %1799 = vmatprep.subr.mxu0 0.0
    %1800 = vmatpush1.msra.mxu0 0.0
    %1801 = vmatprep.subr.mxu0 0.0
    %1802 = vmatpush1.msra.mxu0 0.0
    %1803 = vmatprep.subr.mxu0 0.0
    %1804 = vmatpush1.msra.mxu0 0.0
    %1805 = vmatprep.subr.mxu0 0.0
    %1806 = vmatpush1.msra.mxu0 0.0
    %1807 = vmatprep.subr.mxu0 0.0
    %1808 = vmatpush1.msra.mxu0 0.0
    %1809 = vmatprep.subr.mxu0 0.0
    %1810 = vmatpush1.msra.mxu0 0.0
    %1811 = vmatprep.subr.mxu0 0.0
    %1812 = vmatpush1.msra.mxu0 0.0
    %1813 = vmatprep.subr.mxu0 0.0
    %1814 = vmatpush1.msra.mxu0 0.0
    %1815 = vmatprep.subr.mxu0 %v204
    %1816 = vmatpush1.msra.mxu0 %v203
    %1817 = vmatprep.subr.mxu0 %v202
    %1818 = vmatpush1.msra.mxu0 %v201
    %1819 = vmatprep.subr.mxu0 %v200
    %1820 = vmatpush1.msra.mxu0 %v199
    %1821 = vmatprep.subr.mxu0 %v198
    %1822 = vmatpush1.msra.mxu0 %v197
    %1823 = vmatprep.subr.mxu0 %v196
    %1824 = vmatpush1.msra.mxu0 %v195
    %1825 = vmatprep.subr.mxu0 %v194
    %1826 = vmatpush1.msra.mxu0 %v193
    %1827 = vmatprep.subr.mxu0 %v192
    %1828 = vmatpush1.msra.mxu0 %v191
    %1829 = vmatprep.subr.mxu0 %v190
    %1830 = vmatpush1.msra.mxu0 %v189
    %1831 = vmatprep.subr.mxu0 0.0
    %1832 = vmatpush2.msra.mxu0 0.0
    %1833 = vmatprep.subr.mxu0 0.0
    %1834 = vmatpush2.msra.mxu0 0.0
    %1835 = vmatprep.subr.mxu0 0.0
    %1836 = vmatpush2.msra.mxu0 0.0
    %1837 = vmatprep.subr.mxu0 0.0
    %1838 = vmatpush2.msra.mxu0 0.0
    %1839 = vmatprep.subr.mxu0 0.0
    %1840 = vmatpush2.msra.mxu0 0.0
    %1841 = vmatprep.subr.mxu0 0.0
    %1842 = vmatpush2.msra.mxu0 0.0
    %1843 = vmatprep.subr.mxu0 0.0
    %1844 = vmatpush2.msra.mxu0 0.0
    %1845 = vmatprep.subr.mxu0 0.0
    %1846 = vmatpush2.msra.mxu0 0.0
    %1847 = vmatprep.subr.mxu0 0.0
    %1848 = vmatpush2.msra.mxu0 0.0
    %1849 = vmatprep.subr.mxu0 0.0
    %1850 = vmatpush2.msra.mxu0 0.0
    %1851 = vmatprep.subr.mxu0 0.0
    %1852 = vmatpush2.msra.mxu0 0.0
    %1853 = vmatprep.subr.mxu0 0.0
    %1854 = vmatpush2.msra.mxu0 0.0
    %1855 = vmatprep.subr.mxu0 0.0
    %1856 = vmatpush2.msra.mxu0 0.0
    %1857 = vmatprep.subr.mxu0 0.0
    %1858 = vmatpush2.msra.mxu0 0.0
    %1859 = vmatprep.subr.mxu0 0.0
    %1860 = vmatpush2.msra.mxu0 0.0
    %1861 = vmatprep.subr.mxu0 0.0
    %1862 = vmatpush2.msra.mxu0 0.0
    %1863 = vmatprep.mubr.f32.mxu0 0.0
    %1864 = vmatmul.mubr.f32.gmra.mxu0 %v1797
    %v1865 = vpop.f32.mrf.mxu0
    %v1866 = vadd.f32 0.0, %v1865
    %v1867 = vpop.f32.mrf.mxu0
    %v1868 = vadd.f32 0.0, %v1867
    %1869 = vdwg.mxu0
    %v1871 = vrot.slane %v1866, 6
    %v1873 = vadd.f32 %v179, %v1871
    %v1875 = vrot.slane %v1868, 4
    %v1877 = vadd.f32 %v175, %v1875
    %v1878 = vxor.u32 %v1873, 2147483648
    %v1879 = vmul.f32 %v1878, 1.442695
    %v1880 = vpow.pop %v1879
    %v1881 = vadd.f32 %v1880, 1.0
    %v1882 = vrcp.pop %v1881
    %v1883 = vmul.f32 1.0, %v1882
    %v1884 = vxor.u32 %v1877, 2147483648
    %v1885 = vmul.f32 %v1884, 1.442695
    %v1886 = vpow.pop %v1885
    %v1887 = vadd.f32 %v1886, 1.0
    %v1888 = vrcp.pop %v1887
    %v1889 = vmul.f32 1.0, %v1888
    %v1890 = vtanh.pop %v1873
    %v1891 = vtanh.pop %v1877
    %v1893 = vrot.slane %v1761, 6
    %v1895 = vmul.f32 %v1883, %v1893
    %1897 = vrot.lane.b32.xlu0 %v1890, 64
    %v1898 = vpop.permute.xlu0 %1897
    %v1900 = vmul.f32 %v1883, %v1898
    %1902 = vrot.lane.b32.xlu0 %v1900, 32
    %v1903 = vpop.permute.xlu0 %1902
    %v1905 = vadd.f32 %v1895, %v1903
    %v1906 = vtanh.pop %v1905
    %1908 = vrot.lane.b32.xlu0 %v1906, 64
    %v1909 = vpop.permute.xlu0 %1908
    %v1911 = vmul.f32 %v1883, %v1909
    %v1913 = vrot.slane %v1775, 4
    %1914 = vrot.lane.b32.xlu0 %v1913, 32
    %v1915 = vpop.permute.xlu0 %1914
    %v1917 = vmul.f32 %v1889, %v1915
    %1919 = vrot.lane.b32.xlu0 %v1891, 64
    %v1920 = vpop.permute.xlu0 %1919
    %v1922 = vmul.f32 %v1889, %v1920
    %1924 = vrot.lane.b32.xlu0 %v1922, 32
    %v1925 = vpop.permute.xlu0 %1924
    %v1927 = vadd.f32 %v1917, %v1925
    %v1928 = vtanh.pop %v1927
    %1930 = vrot.lane.b32.xlu0 %v1928, 64
    %v1931 = vpop.permute.xlu0 %1930
    %v1933 = vmul.f32 %v1889, %v1931
    %v1935 = vrot.slane %v1905, 2
    %1936 = vrot.lane.b32.xlu0 %v1935, 96
    %v1937 = vpop.permute.xlu0 %1936
    %1939 = vrot.lane.b32.xlu0 %v1761, 96
    %v1940 = vpop.permute.xlu0 %1939
    %v1942 = vsel %vm1435, %v1937, %v1940
    %v1944 = vrot.slane %v1911, 2
    %1945 = vrot.lane.b32.xlu0 %v1944, 32
    %v1946 = vpop.permute.xlu0 %1945
    %v1948 = vsel %vm1435, %v1946, %v1789
    %v1950 = vrot.slane %v1927, 4
    %1951 = vrot.lane.b32.xlu0 %v1950, 96
    %v1952 = vpop.permute.xlu0 %1951
    %v1954 = vsel %vm1418, %v1952, %v1775
    %v1956 = vrot.slane %v1933, 4
    %1957 = vrot.lane.b32.xlu0 %v1956, 32
    %v1958 = vpop.permute.xlu0 %1957
    %v1960 = vsel %vm1418, %v1958, %v1784
    %v1961 = vsel %vm1435, %v1946, 0.0
    %v1962 = vsel %vm1418, %v1958, 0.0
    %1964 = vrot.lane.b32.xlu0 %v1960, 32
    %v1965 = vpop.permute.xlu0 %1964
    %v1967 = vsel %vm87, %v1948, %v1965
    %v1969 = vsel %vm205, %v1967, 0
    %1971 = vmatprep.subr.mxu0 0.0
    %1972 = vmatpush1.msra.mxu0 0.0
    %1973 = vmatprep.subr.mxu0 0.0
    %1974 = vmatpush1.msra.mxu0 0.0
    %1975 = vmatprep.subr.mxu0 0.0
    %1976 = vmatpush1.msra.mxu0 0.0
    %1977 = vmatprep.subr.mxu0 0.0
    %1978 = vmatpush1.msra.mxu0 0.0
    %1979 = vmatprep.subr.mxu0 0.0
    %1980 = vmatpush1.msra.mxu0 0.0
    %1981 = vmatprep.subr.mxu0 0.0
    %1982 = vmatpush1.msra.mxu0 0.0
    %1983 = vmatprep.subr.mxu0 0.0
    %1984 = vmatpush1.msra.mxu0 0.0
    %1985 = vmatprep.subr.mxu0 0.0
    %1986 = vmatpush1.msra.mxu0 0.0
    %1987 = vmatprep.subr.mxu0 %v204
    %1988 = vmatpush1.msra.mxu0 %v203
    %1989 = vmatprep.subr.mxu0 %v202
    %1990 = vmatpush1.msra.mxu0 %v201
    %1991 = vmatprep.subr.mxu0 %v200
    %1992 = vmatpush1.msra.mxu0 %v199
    %1993 = vmatprep.subr.mxu0 %v198
    %1994 = vmatpush1.msra.mxu0 %v197
    %1995 = vmatprep.subr.mxu0 %v196
    %1996 = vmatpush1.msra.mxu0 %v195
    %1997 = vmatprep.subr.mxu0 %v194
    %1998 = vmatpush1.msra.mxu0 %v193
    %1999 = vmatprep.subr.mxu0 %v192
    %2000 = vmatpush1.msra.mxu0 %v191
    %2001 = vmatprep.subr.mxu0 %v190
    %2002 = vmatpush1.msra.mxu0 %v189
    %2003 = vmatprep.subr.mxu0 0.0
    %2004 = vmatpush2.msra.mxu0 0.0
    %2005 = vmatprep.subr.mxu0 0.0
    %2006 = vmatpush2.msra.mxu0 0.0
    %2007 = vmatprep.subr.mxu0 0.0
    %2008 = vmatpush2.msra.mxu0 0.0
    %2009 = vmatprep.subr.mxu0 0.0
    %2010 = vmatpush2.msra.mxu0 0.0
    %2011 = vmatprep.subr.mxu0 0.0
    %2012 = vmatpush2.msra.mxu0 0.0
    %2013 = vmatprep.subr.mxu0 0.0
    %2014 = vmatpush2.msra.mxu0 0.0
    %2015 = vmatprep.subr.mxu0 0.0
    %2016 = vmatpush2.msra.mxu0 0.0
    %2017 = vmatprep.subr.mxu0 0.0
    %2018 = vmatpush2.msra.mxu0 0.0
    %2019 = vmatprep.subr.mxu0 0.0
    %2020 = vmatpush2.msra.mxu0 0.0
    %2021 = vmatprep.subr.mxu0 0.0
    %2022 = vmatpush2.msra.mxu0 0.0
    %2023 = vmatprep.subr.mxu0 0.0
    %2024 = vmatpush2.msra.mxu0 0.0
    %2025 = vmatprep.subr.mxu0 0.0
    %2026 = vmatpush2.msra.mxu0 0.0
    %2027 = vmatprep.subr.mxu0 0.0
    %2028 = vmatpush2.msra.mxu0 0.0
    %2029 = vmatprep.subr.mxu0 0.0
    %2030 = vmatpush2.msra.mxu0 0.0
    %2031 = vmatprep.subr.mxu0 0.0
    %2032 = vmatpush2.msra.mxu0 0.0
    %2033 = vmatprep.subr.mxu0 0.0
    %2034 = vmatpush2.msra.mxu0 0.0
    %2035 = vmatprep.mubr.f32.mxu0 0.0
    %2036 = vmatmul.mubr.f32.gmra.mxu0 %v1969
    %v2037 = vpop.f32.mrf.mxu0
    %v2038 = vadd.f32 0.0, %v2037
    %v2039 = vpop.f32.mrf.mxu0
    %v2040 = vadd.f32 0.0, %v2039
    %2041 = vdwg.mxu0
    %v2043 = vrot.slane %v2038, 4
    %v2045 = vadd.f32 %v179, %v2043
    %v2047 = vrot.slane %v2040, 6
    %v2049 = vadd.f32 %v175, %v2047
    %v2050 = vxor.u32 %v2045, 2147483648
    %v2051 = vmul.f32 %v2050, 1.442695
    %v2052 = vpow.pop %v2051
    %v2053 = vadd.f32 %v2052, 1.0
    %v2054 = vrcp.pop %v2053
    %v2055 = vmul.f32 1.0, %v2054
    %v2056 = vxor.u32 %v2049, 2147483648
    %v2057 = vmul.f32 %v2056, 1.442695
    %v2058 = vpow.pop %v2057
    %v2059 = vadd.f32 %v2058, 1.0
    %v2060 = vrcp.pop %v2059
    %v2061 = vmul.f32 1.0, %v2060
    %v2062 = vtanh.pop %v2045
    %v2063 = vtanh.pop %v2049
    %v2065 = vrot.slane %v1942, 4
    %2066 = vrot.lane.b32.xlu0 %v2065, 32
    %v2067 = vpop.permute.xlu0 %2066
    %v2069 = vmul.f32 %v2055, %v2067
    %2071 = vrot.lane.b32.xlu0 %v2062, 64
    %v2072 = vpop.permute.xlu0 %2071
    %v2074 = vmul.f32 %v2055, %v2072
    %2076 = vrot.lane.b32.xlu0 %v2074, 32
    %v2077 = vpop.permute.xlu0 %2076
    %v2079 = vadd.f32 %v2069, %v2077
    %v2080 = vtanh.pop %v2079
    %2082 = vrot.lane.b32.xlu0 %v2080, 64
    %v2083 = vpop.permute.xlu0 %2082
    %v2085 = vmul.f32 %v2055, %v2083
    %v2087 = vrot.slane %v1954, 6
    %2088 = vrot.lane.b32.xlu0 %v2087, 32
    %v2089 = vpop.permute.xlu0 %2088
    %v2091 = vmul.f32 %v2061, %v2089
    %2093 = vrot.lane.b32.xlu0 %v2063, 64
    %v2094 = vpop.permute.xlu0 %2093
    %v2096 = vmul.f32 %v2061, %v2094
    %2098 = vrot.lane.b32.xlu0 %v2096, 32
    %v2099 = vpop.permute.xlu0 %2098
    %v2101 = vadd.f32 %v2091, %v2099
    %v2102 = vtanh.pop %v2101
    %2104 = vrot.lane.b32.xlu0 %v2102, 64
    %v2105 = vpop.permute.xlu0 %2104
    %v2107 = vmul.f32 %v2061, %v2105
    %v2109 = vrot.slane %v2079, 4
    %2110 = vrot.lane.b32.xlu0 %v2109, 96
    %v2111 = vpop.permute.xlu0 %2110
    %v2113 = vsel %vm1252, %v2111, %v1942
    %v2115 = vrot.slane %v2085, 4
    %2116 = vrot.lane.b32.xlu0 %v2115, 32
    %v2117 = vpop.permute.xlu0 %2116
    %v2119 = vsel %vm1252, %v2117, %v1948
    %v2121 = vrot.slane %v2101, 2
    %2122 = vrot.lane.b32.xlu0 %v2121, 96
    %v2123 = vpop.permute.xlu0 %2122
    %v2125 = vsel %vm1232, %v2123, %v1954
    %v2127 = vrot.slane %v2107, 2
    %2128 = vrot.lane.b32.xlu0 %v2127, 32
    %v2129 = vpop.permute.xlu0 %2128
    %v2131 = vsel %vm1232, %v2129, %v1960
    %v2132 = vsel %vm1252, %v2117, 0.0
    %v2133 = vsel %vm1232, %v2129, 0.0
    %2135 = vrot.lane.b32.xlu0 %v2131, 32
    %v2136 = vpop.permute.xlu0 %2135
    %v2138 = vsel %vm87, %v2119, %v2136
    %v2140 = vsel %vm205, %v2138, 0
    %2142 = vmatprep.subr.mxu0 0.0
    %2143 = vmatpush1.msra.mxu0 0.0
    %2144 = vmatprep.subr.mxu0 0.0
    %2145 = vmatpush1.msra.mxu0 0.0
    %2146 = vmatprep.subr.mxu0 0.0
    %2147 = vmatpush1.msra.mxu0 0.0
    %2148 = vmatprep.subr.mxu0 0.0
    %2149 = vmatpush1.msra.mxu0 0.0
    %2150 = vmatprep.subr.mxu0 0.0
    %2151 = vmatpush1.msra.mxu0 0.0
    %2152 = vmatprep.subr.mxu0 0.0
    %2153 = vmatpush1.msra.mxu0 0.0
    %2154 = vmatprep.subr.mxu0 0.0
    %2155 = vmatpush1.msra.mxu0 0.0
    %2156 = vmatprep.subr.mxu0 0.0
    %2157 = vmatpush1.msra.mxu0 0.0
    %2158 = vmatprep.subr.mxu0 %v204
    %2159 = vmatpush1.msra.mxu0 %v203
    %2160 = vmatprep.subr.mxu0 %v202
    %2161 = vmatpush1.msra.mxu0 %v201
    %2162 = vmatprep.subr.mxu0 %v200
    %2163 = vmatpush1.msra.mxu0 %v199
    %2164 = vmatprep.subr.mxu0 %v198
    %2165 = vmatpush1.msra.mxu0 %v197
    %2166 = vmatprep.subr.mxu0 %v196
    %2167 = vmatpush1.msra.mxu0 %v195
    %2168 = vmatprep.subr.mxu0 %v194
    %2169 = vmatpush1.msra.mxu0 %v193
    %2170 = vmatprep.subr.mxu0 %v192
    %2171 = vmatpush1.msra.mxu0 %v191
    %2172 = vmatprep.subr.mxu0 %v190
    %2173 = vmatpush1.msra.mxu0 %v189
    %2174 = vmatprep.subr.mxu0 0.0
    %2175 = vmatpush2.msra.mxu0 0.0
    %2176 = vmatprep.subr.mxu0 0.0
    %2177 = vmatpush2.msra.mxu0 0.0
    %2178 = vmatprep.subr.mxu0 0.0
    %2179 = vmatpush2.msra.mxu0 0.0
    %2180 = vmatprep.subr.mxu0 0.0
    %2181 = vmatpush2.msra.mxu0 0.0
    %2182 = vmatprep.subr.mxu0 0.0
    %2183 = vmatpush2.msra.mxu0 0.0
    %2184 = vmatprep.subr.mxu0 0.0
    %2185 = vmatpush2.msra.mxu0 0.0
    %2186 = vmatprep.subr.mxu0 0.0
    %2187 = vmatpush2.msra.mxu0 0.0
    %2188 = vmatprep.subr.mxu0 0.0
    %2189 = vmatpush2.msra.mxu0 0.0
    %2190 = vmatprep.subr.mxu0 0.0
    %2191 = vmatpush2.msra.mxu0 0.0
    %2192 = vmatprep.subr.mxu0 0.0
    %2193 = vmatpush2.msra.mxu0 0.0
    %2194 = vmatprep.subr.mxu0 0.0
    %2195 = vmatpush2.msra.mxu0 0.0
    %2196 = vmatprep.subr.mxu0 0.0
    %2197 = vmatpush2.msra.mxu0 0.0
    %2198 = vmatprep.subr.mxu0 0.0
    %2199 = vmatpush2.msra.mxu0 0.0
    %2200 = vmatprep.subr.mxu0 0.0
    %2201 = vmatpush2.msra.mxu0 0.0
    %2202 = vmatprep.subr.mxu0 0.0
    %2203 = vmatpush2.msra.mxu0 0.0
    %2204 = vmatprep.subr.mxu0 0.0
    %2205 = vmatpush2.msra.mxu0 0.0
    %2206 = vmatprep.mubr.f32.mxu0 0.0
    %2207 = vmatmul.mubr.f32.gmra.mxu0 %v2140
    %v2208 = vpop.f32.mrf.mxu0
    %v2209 = vadd.f32 0.0, %v2208
    %v2210 = vpop.f32.mrf.mxu0
    %v2211 = vadd.f32 0.0, %v2210
    %2212 = vdwg.mxu0
    %v2214 = vrot.slane %v2209, 2
    %v2216 = vadd.f32 %v179, %v2214
    %v2217 = vadd.f32 %v175, %v2211
    %v2218 = vxor.u32 %v2216, 2147483648
    %v2219 = vmul.f32 %v2218, 1.442695
    %v2220 = vpow.pop %v2219
    %v2221 = vadd.f32 %v2220, 1.0
    %v2222 = vrcp.pop %v2221
    %v2223 = vmul.f32 1.0, %v2222
    %v2224 = vxor.u32 %v2217, 2147483648
    %v2225 = vmul.f32 %v2224, 1.442695
    %v2226 = vpow.pop %v2225
    %v2227 = vadd.f32 %v2226, 1.0
    %v2228 = vrcp.pop %v2227
    %v2229 = vmul.f32 1.0, %v2228
    %v2230 = vtanh.pop %v2216
    %v2231 = vtanh.pop %v2217
    %v2233 = vrot.slane %v2113, 2
    %2234 = vrot.lane.b32.xlu0 %v2233, 32
    %v2235 = vpop.permute.xlu0 %2234
    %v2237 = vmul.f32 %v2223, %v2235
    %2239 = vrot.lane.b32.xlu0 %v2230, 64
    %v2240 = vpop.permute.xlu0 %2239
    %v2242 = vmul.f32 %v2223, %v2240
    %2244 = vrot.lane.b32.xlu0 %v2242, 32
    %v2245 = vpop.permute.xlu0 %2244
    %v2247 = vadd.f32 %v2237, %v2245
    %v2248 = vtanh.pop %v2247
    %2250 = vrot.lane.b32.xlu0 %v2248, 64
    %v2251 = vpop.permute.xlu0 %2250
    %v2253 = vmul.f32 %v2223, %v2251
    %2255 = vrot.lane.b32.xlu0 %v2125, 32
    %v2256 = vpop.permute.xlu0 %2255
    %v2258 = vmul.f32 %v2229, %v2256
    %2260 = vrot.lane.b32.xlu0 %v2231, 64
    %v2261 = vpop.permute.xlu0 %2260
    %v2263 = vmul.f32 %v2229, %v2261
    %2265 = vrot.lane.b32.xlu0 %v2263, 32
    %v2266 = vpop.permute.xlu0 %2265
    %v2268 = vadd.f32 %v2258, %v2266
    %v2269 = vtanh.pop %v2268
    %2271 = vrot.lane.b32.xlu0 %v2269, 64
    %v2272 = vpop.permute.xlu0 %2271
    %v2274 = vmul.f32 %v2229, %v2272
    %v2276 = vrot.slane %v2247, 6
    %2277 = vrot.lane.b32.xlu0 %v2276, 96
    %v2278 = vpop.permute.xlu0 %2277
    %v2280 = vsel %vm1058, %v2278, %v2113
    %v2282 = vrot.slane %v2253, 6
    %2283 = vrot.lane.b32.xlu0 %v2282, 32
    %v2284 = vpop.permute.xlu0 %2283
    %v2286 = vsel %vm1058, %v2284, %v2119
    %v2287 = vsel %vm1047, %v2268, %v2256
    %2288 = vrot.lane.b32.xlu0 %v2131, 96
    %v2289 = vpop.permute.xlu0 %2288
    %v2291 = vsel %vm1047, %v2274, %v2289
    %v2292 = vsel %vm1058, %v2284, 0.0
    %v2293 = vsel %vm1047, %v2274, 0.0
    %2295 = vrot.lane.b32.xlu0 %v2291, 64
    %v2296 = vpop.permute.xlu0 %2295
    %v2298 = vsel %vm87, %v2286, %v2296
    %v2300 = vsel %vm205, %v2298, 0
    %2302 = vmatprep.subr.mxu0 0.0
    %2303 = vmatpush1.msra.mxu0 0.0
    %2304 = vmatprep.subr.mxu0 0.0
    %2305 = vmatpush1.msra.mxu0 0.0
    %2306 = vmatprep.subr.mxu0 0.0
    %2307 = vmatpush1.msra.mxu0 0.0
    %2308 = vmatprep.subr.mxu0 0.0
    %2309 = vmatpush1.msra.mxu0 0.0
    %2310 = vmatprep.subr.mxu0 0.0
    %2311 = vmatpush1.msra.mxu0 0.0
    %2312 = vmatprep.subr.mxu0 0.0
    %2313 = vmatpush1.msra.mxu0 0.0
    %2314 = vmatprep.subr.mxu0 0.0
    %2315 = vmatpush1.msra.mxu0 0.0
    %2316 = vmatprep.subr.mxu0 0.0
    %2317 = vmatpush1.msra.mxu0 0.0
    %2318 = vmatprep.subr.mxu0 %v204
    %2319 = vmatpush1.msra.mxu0 %v203
    %2320 = vmatprep.subr.mxu0 %v202
    %2321 = vmatpush1.msra.mxu0 %v201
    %2322 = vmatprep.subr.mxu0 %v200
    %2323 = vmatpush1.msra.mxu0 %v199
    %2324 = vmatprep.subr.mxu0 %v198
    %2325 = vmatpush1.msra.mxu0 %v197
    %2326 = vmatprep.subr.mxu0 %v196
    %2327 = vmatpush1.msra.mxu0 %v195
    %2328 = vmatprep.subr.mxu0 %v194
    %2329 = vmatpush1.msra.mxu0 %v193
    %2330 = vmatprep.subr.mxu0 %v192
    %2331 = vmatpush1.msra.mxu0 %v191
    %2332 = vmatprep.subr.mxu0 %v190
    %2333 = vmatpush1.msra.mxu0 %v189
    %2334 = vmatprep.subr.mxu0 0.0
    %2335 = vmatpush2.msra.mxu0 0.0
    %2336 = vmatprep.subr.mxu0 0.0
    %2337 = vmatpush2.msra.mxu0 0.0
    %2338 = vmatprep.subr.mxu0 0.0
    %2339 = vmatpush2.msra.mxu0 0.0
    %2340 = vmatprep.subr.mxu0 0.0
    %2341 = vmatpush2.msra.mxu0 0.0
    %2342 = vmatprep.subr.mxu0 0.0
    %2343 = vmatpush2.msra.mxu0 0.0
    %2344 = vmatprep.subr.mxu0 0.0
    %2345 = vmatpush2.msra.mxu0 0.0
    %2346 = vmatprep.subr.mxu0 0.0
    %2347 = vmatpush2.msra.mxu0 0.0
    %2348 = vmatprep.subr.mxu0 0.0
    %2349 = vmatpush2.msra.mxu0 0.0
    %2350 = vmatprep.subr.mxu0 0.0
    %2351 = vmatpush2.msra.mxu0 0.0
    %2352 = vmatprep.subr.mxu0 0.0
    %2353 = vmatpush2.msra.mxu0 0.0
    %2354 = vmatprep.subr.mxu0 0.0
    %2355 = vmatpush2.msra.mxu0 0.0
    %2356 = vmatprep.subr.mxu0 0.0
    %2357 = vmatpush2.msra.mxu0 0.0
    %2358 = vmatprep.subr.mxu0 0.0
    %2359 = vmatpush2.msra.mxu0 0.0
    %2360 = vmatprep.subr.mxu0 0.0
    %2361 = vmatpush2.msra.mxu0 0.0
    %2362 = vmatprep.subr.mxu0 0.0
    %2363 = vmatpush2.msra.mxu0 0.0
    %2364 = vmatprep.subr.mxu0 0.0
    %2365 = vmatpush2.msra.mxu0 0.0
    %2366 = vmatprep.mubr.f32.mxu0 0.0
    %2367 = vmatmul.mubr.f32.gmra.mxu0 %v2300
    %v2368 = vpop.f32.mrf.mxu0
    %v2369 = vadd.f32 0.0, %v2368
    %v2370 = vpop.f32.mrf.mxu0
    %v2371 = vadd.f32 0.0, %v2370
    %2372 = vdwg.mxu0
    %v2373 = vadd.f32 %v185, %v2369
    %v2375 = vrot.slane %v2371, 2
    %v2377 = vadd.f32 %v169, %v2375
    %v2378 = vxor.u32 %v2373, 2147483648
    %v2379 = vmul.f32 %v2378, 1.442695
    %v2380 = vpow.pop %v2379
    %v2381 = vadd.f32 %v2380, 1.0
    %v2382 = vrcp.pop %v2381
    %v2383 = vmul.f32 1.0, %v2382
    %v2384 = vxor.u32 %v2377, 2147483648
    %v2385 = vmul.f32 %v2384, 1.442695
    %v2386 = vpow.pop %v2385
    %v2387 = vadd.f32 %v2386, 1.0
    %v2388 = vrcp.pop %v2387
    %v2389 = vmul.f32 1.0, %v2388
    %v2390 = vtanh.pop %v2373
    %v2391 = vtanh.pop %v2377
    %2393 = vrot.lane.b32.xlu0 %v2280, 32
    %v2394 = vpop.permute.xlu0 %2393
    %v2396 = vmul.f32 %v2383, %v2394
    %2398 = vrot.lane.b32.xlu0 %v2390, 64
    %v2399 = vpop.permute.xlu0 %2398
    %v2401 = vmul.f32 %v2383, %v2399
    %2403 = vrot.lane.b32.xlu0 %v2401, 32
    %v2404 = vpop.permute.xlu0 %2403
    %v2406 = vadd.f32 %v2396, %v2404
    %v2407 = vtanh.pop %v2406
    %2409 = vrot.lane.b32.xlu0 %v2407, 64
    %v2410 = vpop.permute.xlu0 %2409
    %v2412 = vmul.f32 %v2383, %v2410
    %v2414 = vrot.slane %v2287, 2
    %v2416 = vmul.f32 %v2389, %v2414
    %2418 = vrot.lane.b32.xlu0 %v2391, 64
    %v2419 = vpop.permute.xlu0 %2418
    %v2421 = vmul.f32 %v2389, %v2419
    %2423 = vrot.lane.b32.xlu0 %v2421, 32
    %v2424 = vpop.permute.xlu0 %2423
    %v2426 = vadd.f32 %v2416, %v2424
    %v2427 = vtanh.pop %v2426
    %2429 = vrot.lane.b32.xlu0 %v2427, 64
    %v2430 = vpop.permute.xlu0 %2429
    %v2432 = vmul.f32 %v2389, %v2430
    %v2433 = vsel %vm894, %v2406, %v2394
    %2435 = vrot.lane.b32.xlu0 %v2286, 96
    %v2436 = vpop.permute.xlu0 %2435
    %v2438 = vsel %vm894, %v2412, %v2436
    %v2440 = vrot.slane %v2426, 6
    %2441 = vrot.lane.b32.xlu0 %v2440, 96
    %v2442 = vpop.permute.xlu0 %2441
    %2444 = vrot.lane.b32.xlu0 %v2287, 96
    %v2445 = vpop.permute.xlu0 %2444
    %v2447 = vsel %vm877, %v2442, %v2445
    %v2449 = vrot.slane %v2432, 6
    %2450 = vrot.lane.b32.xlu0 %v2449, 32
    %v2451 = vpop.permute.xlu0 %2450
    %2453 = vrot.lane.b32.xlu0 %v2291, 32
    %v2454 = vpop.permute.xlu0 %2453
    %v2456 = vsel %vm877, %v2451, %v2454
    %v2457 = vsel %vm894, %v2412, 0.0
    %v2458 = vsel %vm877, %v2451, 0.0
    %2460 = vrot.lane.b32.xlu0 %v2438, 32
    %v2461 = vpop.permute.xlu0 %2460
    %2464 = vrot.lane.b32.xlu0 %v2456, 32
    %v2465 = vpop.permute.xlu0 %2464
    %v2467 = vsel %vm87, %v2461, %v2465
    %v2469 = vsel %vm205, %v2467, 0
    %2471 = vmatprep.subr.mxu0 0.0
    %2472 = vmatpush1.msra.mxu0 0.0
    %2473 = vmatprep.subr.mxu0 0.0
    %2474 = vmatpush1.msra.mxu0 0.0
    %2475 = vmatprep.subr.mxu0 0.0
    %2476 = vmatpush1.msra.mxu0 0.0
    %2477 = vmatprep.subr.mxu0 0.0
    %2478 = vmatpush1.msra.mxu0 0.0
    %2479 = vmatprep.subr.mxu0 0.0
    %2480 = vmatpush1.msra.mxu0 0.0
    %2481 = vmatprep.subr.mxu0 0.0
    %2482 = vmatpush1.msra.mxu0 0.0
    %2483 = vmatprep.subr.mxu0 0.0
    %2484 = vmatpush1.msra.mxu0 0.0
    %2485 = vmatprep.subr.mxu0 0.0
    %2486 = vmatpush1.msra.mxu0 0.0
    %2487 = vmatprep.subr.mxu0 %v204
    %2488 = vmatpush1.msra.mxu0 %v203
    %2489 = vmatprep.subr.mxu0 %v202
    %2490 = vmatpush1.msra.mxu0 %v201
    %2491 = vmatprep.subr.mxu0 %v200
    %2492 = vmatpush1.msra.mxu0 %v199
    %2493 = vmatprep.subr.mxu0 %v198
    %2494 = vmatpush1.msra.mxu0 %v197
    %2495 = vmatprep.subr.mxu0 %v196
    %2496 = vmatpush1.msra.mxu0 %v195
    %2497 = vmatprep.subr.mxu0 %v194
    %2498 = vmatpush1.msra.mxu0 %v193
    %2499 = vmatprep.subr.mxu0 %v192
    %2500 = vmatpush1.msra.mxu0 %v191
    %2501 = vmatprep.subr.mxu0 %v190
    %2502 = vmatpush1.msra.mxu0 %v189
    %2503 = vmatprep.subr.mxu0 0.0
    %2504 = vmatpush2.msra.mxu0 0.0
    %2505 = vmatprep.subr.mxu0 0.0
    %2506 = vmatpush2.msra.mxu0 0.0
    %2507 = vmatprep.subr.mxu0 0.0
    %2508 = vmatpush2.msra.mxu0 0.0
    %2509 = vmatprep.subr.mxu0 0.0
    %2510 = vmatpush2.msra.mxu0 0.0
    %2511 = vmatprep.subr.mxu0 0.0
    %2512 = vmatpush2.msra.mxu0 0.0
    %2513 = vmatprep.subr.mxu0 0.0
    %2514 = vmatpush2.msra.mxu0 0.0
    %2515 = vmatprep.subr.mxu0 0.0
    %2516 = vmatpush2.msra.mxu0 0.0
    %2517 = vmatprep.subr.mxu0 0.0
    %2518 = vmatpush2.msra.mxu0 0.0
    %2519 = vmatprep.subr.mxu0 0.0
    %2520 = vmatpush2.msra.mxu0 0.0
    %2521 = vmatprep.subr.mxu0 0.0
    %2522 = vmatpush2.msra.mxu0 0.0
    %2523 = vmatprep.subr.mxu0 0.0
    %2524 = vmatpush2.msra.mxu0 0.0
    %2525 = vmatprep.subr.mxu0 0.0
    %2526 = vmatpush2.msra.mxu0 0.0
    %2527 = vmatprep.subr.mxu0 0.0
    %2528 = vmatpush2.msra.mxu0 0.0
    %2529 = vmatprep.subr.mxu0 0.0
    %2530 = vmatpush2.msra.mxu0 0.0
    %2531 = vmatprep.subr.mxu0 0.0
    %2532 = vmatpush2.msra.mxu0 0.0
    %2533 = vmatprep.subr.mxu0 0.0
    %2534 = vmatpush2.msra.mxu0 0.0
    %2535 = vmatprep.mubr.f32.mxu0 0.0
    %2536 = vmatmul.mubr.f32.gmra.mxu0 %v2469
    %v2537 = vpop.f32.mrf.mxu0
    %v2538 = vadd.f32 0.0, %v2537
    %v2539 = vpop.f32.mrf.mxu0
    %v2540 = vadd.f32 0.0, %v2539
    %2541 = vdwg.mxu0
    %v2543 = vrot.slane %v2538, 6
    %v2545 = vadd.f32 %v185, %v2543
    %v2547 = vrot.slane %v2540, 4
    %v2549 = vadd.f32 %v169, %v2547
    %v2550 = vxor.u32 %v2545, 2147483648
    %v2551 = vmul.f32 %v2550, 1.442695
    %v2552 = vpow.pop %v2551
    %v2553 = vadd.f32 %v2552, 1.0
    %v2554 = vrcp.pop %v2553
    %v2555 = vmul.f32 1.0, %v2554
    %v2556 = vxor.u32 %v2549, 2147483648
    %v2557 = vmul.f32 %v2556, 1.442695
    %v2558 = vpow.pop %v2557
    %v2559 = vadd.f32 %v2558, 1.0
    %v2560 = vrcp.pop %v2559
    %v2561 = vmul.f32 1.0, %v2560
    %v2562 = vtanh.pop %v2545
    %v2563 = vtanh.pop %v2549
    %v2565 = vrot.slane %v2433, 6
    %v2567 = vmul.f32 %v2555, %v2565
    %2569 = vrot.lane.b32.xlu0 %v2562, 64
    %v2570 = vpop.permute.xlu0 %2569
    %v2572 = vmul.f32 %v2555, %v2570
    %2574 = vrot.lane.b32.xlu0 %v2572, 32
    %v2575 = vpop.permute.xlu0 %2574
    %v2577 = vadd.f32 %v2567, %v2575
    %v2578 = vtanh.pop %v2577
    %2580 = vrot.lane.b32.xlu0 %v2578, 64
    %v2581 = vpop.permute.xlu0 %2580
    %v2583 = vmul.f32 %v2555, %v2581
    %v2585 = vrot.slane %v2447, 4
    %2586 = vrot.lane.b32.xlu0 %v2585, 32
    %v2587 = vpop.permute.xlu0 %2586
    %v2589 = vmul.f32 %v2561, %v2587
    %2591 = vrot.lane.b32.xlu0 %v2563, 64
    %v2592 = vpop.permute.xlu0 %2591
    %v2594 = vmul.f32 %v2561, %v2592
    %2596 = vrot.lane.b32.xlu0 %v2594, 32
    %v2597 = vpop.permute.xlu0 %2596
    %v2599 = vadd.f32 %v2589, %v2597
    %v2600 = vtanh.pop %v2599
    %2602 = vrot.lane.b32.xlu0 %v2600, 64
    %v2603 = vpop.permute.xlu0 %2602
    %v2605 = vmul.f32 %v2561, %v2603
    %v2607 = vrot.slane %v2577, 2
    %2608 = vrot.lane.b32.xlu0 %v2607, 96
    %v2609 = vpop.permute.xlu0 %2608
    %2611 = vrot.lane.b32.xlu0 %v2433, 96
    %v2612 = vpop.permute.xlu0 %2611
    %v2614 = vsel %vm715, %v2609, %v2612
    %v2616 = vrot.slane %v2583, 2
    %2617 = vrot.lane.b32.xlu0 %v2616, 32
    %v2618 = vpop.permute.xlu0 %2617
    %v2620 = vsel %vm715, %v2618, %v2461
    %v2622 = vrot.slane %v2599, 4
    %2623 = vrot.lane.b32.xlu0 %v2622, 96
    %v2624 = vpop.permute.xlu0 %2623
    %v2626 = vsel %vm698, %v2624, %v2447
    %v2628 = vrot.slane %v2605, 4
    %2629 = vrot.lane.b32.xlu0 %v2628, 32
    %v2630 = vpop.permute.xlu0 %2629
    %v2632 = vsel %vm698, %v2630, %v2456
    %v2633 = vsel %vm715, %v2618, 0.0
    %v2634 = vsel %vm698, %v2630, 0.0
    %2636 = vrot.lane.b32.xlu0 %v2632, 32
    %v2637 = vpop.permute.xlu0 %2636
    %v2639 = vsel %vm87, %v2620, %v2637
    %v2641 = vsel %vm205, %v2639, 0
    %2643 = vmatprep.subr.mxu0 0.0
    %2644 = vmatpush1.msra.mxu0 0.0
    %2645 = vmatprep.subr.mxu0 0.0
    %2646 = vmatpush1.msra.mxu0 0.0
    %2647 = vmatprep.subr.mxu0 0.0
    %2648 = vmatpush1.msra.mxu0 0.0
    %2649 = vmatprep.subr.mxu0 0.0
    %2650 = vmatpush1.msra.mxu0 0.0
    %2651 = vmatprep.subr.mxu0 0.0
    %2652 = vmatpush1.msra.mxu0 0.0
    %2653 = vmatprep.subr.mxu0 0.0
    %2654 = vmatpush1.msra.mxu0 0.0
    %2655 = vmatprep.subr.mxu0 0.0
    %2656 = vmatpush1.msra.mxu0 0.0
    %2657 = vmatprep.subr.mxu0 0.0
    %2658 = vmatpush1.msra.mxu0 0.0
    %2659 = vmatprep.subr.mxu0 %v204
    %2660 = vmatpush1.msra.mxu0 %v203
    %2661 = vmatprep.subr.mxu0 %v202
    %2662 = vmatpush1.msra.mxu0 %v201
    %2663 = vmatprep.subr.mxu0 %v200
    %2664 = vmatpush1.msra.mxu0 %v199
    %2665 = vmatprep.subr.mxu0 %v198
    %2666 = vmatpush1.msra.mxu0 %v197
    %2667 = vmatprep.subr.mxu0 %v196
    %2668 = vmatpush1.msra.mxu0 %v195
    %2669 = vmatprep.subr.mxu0 %v194
    %2670 = vmatpush1.msra.mxu0 %v193
    %2671 = vmatprep.subr.mxu0 %v192
    %2672 = vmatpush1.msra.mxu0 %v191
    %2673 = vmatprep.subr.mxu0 %v190
    %2674 = vmatpush1.msra.mxu0 %v189
    %2675 = vmatprep.subr.mxu0 0.0
    %2676 = vmatpush2.msra.mxu0 0.0
    %2677 = vmatprep.subr.mxu0 0.0
    %2678 = vmatpush2.msra.mxu0 0.0
    %2679 = vmatprep.subr.mxu0 0.0
    %2680 = vmatpush2.msra.mxu0 0.0
    %2681 = vmatprep.subr.mxu0 0.0
    %2682 = vmatpush2.msra.mxu0 0.0
    %2683 = vmatprep.subr.mxu0 0.0
    %2684 = vmatpush2.msra.mxu0 0.0
    %2685 = vmatprep.subr.mxu0 0.0
    %2686 = vmatpush2.msra.mxu0 0.0
    %2687 = vmatprep.subr.mxu0 0.0
    %2688 = vmatpush2.msra.mxu0 0.0
    %2689 = vmatprep.subr.mxu0 0.0
    %2690 = vmatpush2.msra.mxu0 0.0
    %2691 = vmatprep.subr.mxu0 0.0
    %2692 = vmatpush2.msra.mxu0 0.0
    %2693 = vmatprep.subr.mxu0 0.0
    %2694 = vmatpush2.msra.mxu0 0.0
    %2695 = vmatprep.subr.mxu0 0.0
    %2696 = vmatpush2.msra.mxu0 0.0
    %2697 = vmatprep.subr.mxu0 0.0
    %2698 = vmatpush2.msra.mxu0 0.0
    %2699 = vmatprep.subr.mxu0 0.0
    %2700 = vmatpush2.msra.mxu0 0.0
    %2701 = vmatprep.subr.mxu0 0.0
    %2702 = vmatpush2.msra.mxu0 0.0
    %2703 = vmatprep.subr.mxu0 0.0
    %2704 = vmatpush2.msra.mxu0 0.0
    %2705 = vmatprep.subr.mxu0 0.0
    %2706 = vmatpush2.msra.mxu0 0.0
    %2707 = vmatprep.mubr.f32.mxu0 0.0
    %2708 = vmatmul.mubr.f32.gmra.mxu0 %v2641
    %v2709 = vpop.f32.mrf.mxu0
    %v2710 = vadd.f32 0.0, %v2709
    %v2711 = vpop.f32.mrf.mxu0
    %v2712 = vadd.f32 0.0, %v2711
    %2713 = vdwg.mxu0
    %v2715 = vrot.slane %v2710, 4
    %v2717 = vadd.f32 %v185, %v2715
    %v2719 = vrot.slane %v2712, 6
    %v2721 = vadd.f32 %v169, %v2719
    %v2722 = vxor.u32 %v2717, 2147483648
    %v2723 = vmul.f32 %v2722, 1.442695
    %v2724 = vpow.pop %v2723
    %v2725 = vadd.f32 %v2724, 1.0
    %v2726 = vrcp.pop %v2725
    %v2727 = vmul.f32 1.0, %v2726
    %v2728 = vxor.u32 %v2721, 2147483648
    %v2729 = vmul.f32 %v2728, 1.442695
    %v2730 = vpow.pop %v2729
    %v2731 = vadd.f32 %v2730, 1.0
    %v2732 = vrcp.pop %v2731
    %v2733 = vmul.f32 1.0, %v2732
    %v2734 = vtanh.pop %v2717
    %v2735 = vtanh.pop %v2721
    %v2737 = vrot.slane %v2614, 4
    %2738 = vrot.lane.b32.xlu0 %v2737, 32
    %v2739 = vpop.permute.xlu0 %2738
    %v2741 = vmul.f32 %v2727, %v2739
    %2743 = vrot.lane.b32.xlu0 %v2734, 64
    %v2744 = vpop.permute.xlu0 %2743
    %v2746 = vmul.f32 %v2727, %v2744
    %2748 = vrot.lane.b32.xlu0 %v2746, 32
    %v2749 = vpop.permute.xlu0 %2748
    %v2751 = vadd.f32 %v2741, %v2749
    %v2752 = vtanh.pop %v2751
    %2754 = vrot.lane.b32.xlu0 %v2752, 64
    %v2755 = vpop.permute.xlu0 %2754
    %v2757 = vmul.f32 %v2727, %v2755
    %v2759 = vrot.slane %v2626, 6
    %2760 = vrot.lane.b32.xlu0 %v2759, 32
    %v2761 = vpop.permute.xlu0 %2760
    %v2763 = vmul.f32 %v2733, %v2761
    %2765 = vrot.lane.b32.xlu0 %v2735, 64
    %v2766 = vpop.permute.xlu0 %2765
    %v2768 = vmul.f32 %v2733, %v2766
    %2770 = vrot.lane.b32.xlu0 %v2768, 32
    %v2771 = vpop.permute.xlu0 %2770
    %v2773 = vadd.f32 %v2763, %v2771
    %v2774 = vtanh.pop %v2773
    %2776 = vrot.lane.b32.xlu0 %v2774, 64
    %v2777 = vpop.permute.xlu0 %2776
    %v2779 = vmul.f32 %v2733, %v2777
    %v2781 = vrot.slane %v2751, 4
    %2782 = vrot.lane.b32.xlu0 %v2781, 96
    %v2783 = vpop.permute.xlu0 %2782
    %v2785 = vsel %vm532, %v2783, %v2614
    %v2787 = vrot.slane %v2757, 4
    %2788 = vrot.lane.b32.xlu0 %v2787, 32
    %v2789 = vpop.permute.xlu0 %2788
    %v2791 = vsel %vm532, %v2789, %v2620
    %v2793 = vrot.slane %v2773, 2
    %2794 = vrot.lane.b32.xlu0 %v2793, 96
    %v2795 = vpop.permute.xlu0 %2794
    %v2797 = vsel %vm512, %v2795, %v2626
    %v2799 = vrot.slane %v2779, 2
    %2800 = vrot.lane.b32.xlu0 %v2799, 32
    %v2801 = vpop.permute.xlu0 %2800
    %v2803 = vsel %vm512, %v2801, %v2632
    %v2804 = vsel %vm532, %v2789, 0.0
    %v2805 = vsel %vm512, %v2801, 0.0
    %2807 = vrot.lane.b32.xlu0 %v2803, 32
    %v2808 = vpop.permute.xlu0 %2807
    %v2810 = vsel %vm87, %v2791, %v2808
    %v2812 = vsel %vm205, %v2810, 0
    %2814 = vmatprep.subr.mxu0 0.0
    %2815 = vmatpush1.msra.mxu0 0.0
    %2816 = vmatprep.subr.mxu0 0.0
    %2817 = vmatpush1.msra.mxu0 0.0
    %2818 = vmatprep.subr.mxu0 0.0
    %2819 = vmatpush1.msra.mxu0 0.0
    %2820 = vmatprep.subr.mxu0 0.0
    %2821 = vmatpush1.msra.mxu0 0.0
    %2822 = vmatprep.subr.mxu0 0.0
    %2823 = vmatpush1.msra.mxu0 0.0
    %2824 = vmatprep.subr.mxu0 0.0
    %2825 = vmatpush1.msra.mxu0 0.0
    %2826 = vmatprep.subr.mxu0 0.0
    %2827 = vmatpush1.msra.mxu0 0.0
    %2828 = vmatprep.subr.mxu0 0.0
    %2829 = vmatpush1.msra.mxu0 0.0
    %2830 = vmatprep.subr.mxu0 %v204
    %2831 = vmatpush1.msra.mxu0 %v203
    %2832 = vmatprep.subr.mxu0 %v202
    %2833 = vmatpush1.msra.mxu0 %v201
    %2834 = vmatprep.subr.mxu0 %v200
    %2835 = vmatpush1.msra.mxu0 %v199
    %2836 = vmatprep.subr.mxu0 %v198
    %2837 = vmatpush1.msra.mxu0 %v197
    %2838 = vmatprep.subr.mxu0 %v196
    %2839 = vmatpush1.msra.mxu0 %v195
    %2840 = vmatprep.subr.mxu0 %v194
    %2841 = vmatpush1.msra.mxu0 %v193
    %2842 = vmatprep.subr.mxu0 %v192
    %2843 = vmatpush1.msra.mxu0 %v191
    %2844 = vmatprep.subr.mxu0 %v190
    %2845 = vmatpush1.msra.mxu0 %v189
    %2846 = vmatprep.subr.mxu0 0.0
    %2847 = vmatpush2.msra.mxu0 0.0
    %2848 = vmatprep.subr.mxu0 0.0
    %2849 = vmatpush2.msra.mxu0 0.0
    %2850 = vmatprep.subr.mxu0 0.0
    %2851 = vmatpush2.msra.mxu0 0.0
    %2852 = vmatprep.subr.mxu0 0.0
    %2853 = vmatpush2.msra.mxu0 0.0
    %2854 = vmatprep.subr.mxu0 0.0
    %2855 = vmatpush2.msra.mxu0 0.0
    %2856 = vmatprep.subr.mxu0 0.0
    %2857 = vmatpush2.msra.mxu0 0.0
    %2858 = vmatprep.subr.mxu0 0.0
    %2859 = vmatpush2.msra.mxu0 0.0
    %2860 = vmatprep.subr.mxu0 0.0
    %2861 = vmatpush2.msra.mxu0 0.0
    %2862 = vmatprep.subr.mxu0 0.0
    %2863 = vmatpush2.msra.mxu0 0.0
    %2864 = vmatprep.subr.mxu0 0.0
    %2865 = vmatpush2.msra.mxu0 0.0
    %2866 = vmatprep.subr.mxu0 0.0
    %2867 = vmatpush2.msra.mxu0 0.0
    %2868 = vmatprep.subr.mxu0 0.0
    %2869 = vmatpush2.msra.mxu0 0.0
    %2870 = vmatprep.subr.mxu0 0.0
    %2871 = vmatpush2.msra.mxu0 0.0
    %2872 = vmatprep.subr.mxu0 0.0
    %2873 = vmatpush2.msra.mxu0 0.0
    %2874 = vmatprep.subr.mxu0 0.0
    %2875 = vmatpush2.msra.mxu0 0.0
    %2876 = vmatprep.subr.mxu0 0.0
    %2877 = vmatpush2.msra.mxu0 0.0
    %2878 = vmatprep.mubr.f32.mxu0 0.0
    %2879 = vmatmul.mubr.f32.gmra.mxu0 %v2812
    %v2880 = vpop.f32.mrf.mxu0
    %v2881 = vadd.f32 0.0, %v2880
    %v2882 = vpop.f32.mrf.mxu0
    %v2883 = vadd.f32 0.0, %v2882
    %2884 = vdwg.mxu0
    %v2886 = vrot.slane %v2881, 2
    %v2888 = vadd.f32 %v185, %v2886
    %v2889 = vadd.f32 %v169, %v2883
    %v2890 = vxor.u32 %v2888, 2147483648
    %v2891 = vmul.f32 %v2890, 1.442695
    %v2892 = vpow.pop %v2891
    %v2893 = vadd.f32 %v2892, 1.0
    %v2894 = vrcp.pop %v2893
    %v2895 = vmul.f32 1.0, %v2894
    %v2896 = vxor.u32 %v2889, 2147483648
    %v2897 = vmul.f32 %v2896, 1.442695
    %v2898 = vpow.pop %v2897
    %v2899 = vadd.f32 %v2898, 1.0
    %v2900 = vrcp.pop %v2899
    %v2901 = vmul.f32 1.0, %v2900
    %v2902 = vtanh.pop %v2888
    %v2903 = vtanh.pop %v2889
    %v2905 = vrot.slane %v2785, 2
    %2906 = vrot.lane.b32.xlu0 %v2905, 32
    %v2907 = vpop.permute.xlu0 %2906
    %v2909 = vmul.f32 %v2895, %v2907
    %2911 = vrot.lane.b32.xlu0 %v2902, 64
    %v2912 = vpop.permute.xlu0 %2911
    %v2914 = vmul.f32 %v2895, %v2912
    %2916 = vrot.lane.b32.xlu0 %v2914, 32
    %v2917 = vpop.permute.xlu0 %2916
    %v2919 = vadd.f32 %v2909, %v2917
    %v2920 = vtanh.pop %v2919
    %2922 = vrot.lane.b32.xlu0 %v2920, 64
    %v2923 = vpop.permute.xlu0 %2922
    %v2925 = vmul.f32 %v2895, %v2923
    %2927 = vrot.lane.b32.xlu0 %v2797, 32
    %v2928 = vpop.permute.xlu0 %2927
    %v2930 = vmul.f32 %v2901, %v2928
    %2932 = vrot.lane.b32.xlu0 %v2903, 64
    %v2933 = vpop.permute.xlu0 %2932
    %v2935 = vmul.f32 %v2901, %v2933
    %2937 = vrot.lane.b32.xlu0 %v2935, 32
    %v2938 = vpop.permute.xlu0 %2937
    %v2940 = vadd.f32 %v2930, %v2938
    %v2941 = vtanh.pop %v2940
    %2943 = vrot.lane.b32.xlu0 %v2941, 64
    %v2944 = vpop.permute.xlu0 %2943
    %v2946 = vmul.f32 %v2901, %v2944
    %v2948 = vrot.slane %v2925, 6
    %2949 = vrot.lane.b32.xlu0 %v2948, 32
    %v2950 = vpop.permute.xlu0 %2949
    %v2952 = vsel %vm346, %v2950, 0.0
    %v2953 = vsel %vm339, %v2946, 0.0
    %2955 = vrot.lane.b32.xlu0 %v2953, 64
    %v2956 = vpop.permute.xlu0 %2955
    %2959 = vrot.lane.b32.xlu0 %v545, 64
    %v2960 = vpop.permute.xlu0 %2959
    %2963 = vrot.lane.b32.xlu0 %v2805, 96
    %v2964 = vpop.permute.xlu0 %2963
    %v2966 = vsel %vm87, %v361, %v2956
    %v2967 = vsel %vm205, %v2966, %v2960
    %vm2968 = vcmask 785408
    %v2969 = vsel %vm2968, %v2967, %v2964
    %2971 = vrot.lane.b32.xlu0 %v2634, 32
    %v2972 = vpop.permute.xlu0 %2971
    %2975 = vrot.lane.b32.xlu0 %v900, 64
    %v2976 = vpop.permute.xlu0 %2975
    %2979 = vrot.lane.b32.xlu0 %v2458, 96
    %v2980 = vpop.permute.xlu0 %2979
    %v2982 = vsel %vm87, %v728, %v2972
    %v2983 = vsel %vm205, %v2982, %v2976
    %v2984 = vsel %vm2968, %v2983, %v2980
    %2986 = vrot.lane.b32.xlu0 %v1077, 32
    %v2987 = vpop.permute.xlu0 %2986
    %2990 = vrot.lane.b32.xlu0 %v2293, 64
    %v2991 = vpop.permute.xlu0 %2990
    %2994 = vrot.lane.b32.xlu0 %v1265, 64
    %v2995 = vpop.permute.xlu0 %2994
    %2998 = vrot.lane.b32.xlu0 %v2133, 96
    %v2999 = vpop.permute.xlu0 %2998
    %v3001 = vsel %vm87, %v2987, %v2991
    %v3002 = vsel %vm205, %v3001, %v2995
    %v3003 = vsel %vm2968, %v3002, %v2999
    %3005 = vrot.lane.b32.xlu0 %v1962, 32
    %v3006 = vpop.permute.xlu0 %3005
    %3009 = vrot.lane.b32.xlu0 %v1620, 64
    %v3010 = vpop.permute.xlu0 %3009
    %3013 = vrot.lane.b32.xlu0 %v1786, 96
    %v3014 = vpop.permute.xlu0 %3013
    %v3016 = vsel %vm87, %v1448, %v3006
    %v3017 = vsel %vm205, %v3016, %v3010
    %v3018 = vsel %vm2968, %v3017, %v3014
    %3020 = vrot.lane.b32.xlu0 %v1785, 32
    %v3021 = vpop.permute.xlu0 %3020
    %3024 = vrot.lane.b32.xlu0 %v1621, 64
    %v3025 = vpop.permute.xlu0 %3024
    %3028 = vrot.lane.b32.xlu0 %v1961, 64
    %v3029 = vpop.permute.xlu0 %3028
    %3032 = vrot.lane.b32.xlu0 %v1449, 96
    %v3033 = vpop.permute.xlu0 %3032
    %v3035 = vsel %vm87, %v3021, %v3025
    %v3036 = vsel %vm205, %v3035, %v3029
    %v3037 = vsel %vm2968, %v3036, %v3033
    %3039 = vrot.lane.b32.xlu0 %v1266, 32
    %v3040 = vpop.permute.xlu0 %3039
    %3043 = vrot.lane.b32.xlu0 %v2292, 64
    %v3044 = vpop.permute.xlu0 %3043
    %3047 = vrot.lane.b32.xlu0 %v1078, 96
    %v3048 = vpop.permute.xlu0 %3047
    %v3050 = vsel %vm87, %v2132, %v3040
    %v3051 = vsel %vm205, %v3050, %v3044
    %v3052 = vsel %vm2968, %v3051, %v3048
    %3054 = vrot.lane.b32.xlu0 %v2457, 32
    %v3055 = vpop.permute.xlu0 %3054
    %3058 = vrot.lane.b32.xlu0 %v901, 64
    %v3059 = vpop.permute.xlu0 %3058
    %3062 = vrot.lane.b32.xlu0 %v2633, 64
    %v3063 = vpop.permute.xlu0 %3062
    %3066 = vrot.lane.b32.xlu0 %v729, 96
    %v3067 = vpop.permute.xlu0 %3066
    %v3069 = vsel %vm87, %v3055, %v3059
    %v3070 = vsel %vm205, %v3069, %v3063
    %v3071 = vsel %vm2968, %v3070, %v3067
    %3073 = vrot.lane.b32.xlu0 %v546, 32
    %v3074 = vpop.permute.xlu0 %3073
    %3077 = vrot.lane.b32.xlu0 %v2952, 64
    %v3078 = vpop.permute.xlu0 %3077
    %3080 = vrot.lane.b32.xlu0 %v358, 96
    %v3081 = vpop.permute.xlu0 %3080
    %v3083 = vsel %vm87, %v2804, %v3074
    %v3084 = vsel %vm205, %v3083, %v3078
    %v3085 = vsel %vm2968, %v3084, %v3081
    %3086 = vst [vmem:[#allocation8] sm:$0x3] %v2969
    %3087 = vst [vmem:[#allocation8 + $0x2] sm:$0x3] %v2984
    %3088 = vst [vmem:[#allocation8 + $0x4] sm:$0x3] %v3003
    %3089 = vst [vmem:[#allocation8 + $0x6] sm:$0x3] %v3018
    %3090 = vst [vmem:[#allocation8 + $0x8] sm:$0x3] %v3037
    %3091 = vst [vmem:[#allocation8 + $0xa] sm:$0x3] %v3052
    %3092 = vst [vmem:[#allocation8 + $0xc] sm:$0x3] %v3071
    %3093 = vst [vmem:[#allocation8 + $0xe] sm:$0x3] %v3085
    // Predicated region
    $region34: #{tpu_custom_call.1} parent=1 // pred_check
      _
    $region35: #{tpu_custom_call.1} parent=1 // pred_check_branch
      %3095 = sbr.rel (0) target = $region37
    $region36: #{tpu_custom_call.1} parent=1 // pred_region
      %s3097 = ssub.s32 256, 256
      %3098 = vsyncadd [#allocation4], %s3097
      %s3099 = sshll.u32 [#allocation8], 4
      %s3100 = int_to_ptr.vmem [resolvable:$true] %s3099
      %3105 = dma.vmem_to_hbm [thread:$0]  %s3100, 256, %s5, [#allocation4], 32, 32, 2
    $region37: #{tpu_custom_call.1} parent=1 // pred_fallthru
      _
    // Predicated region
    $region38: #{tpu_custom_call.1} parent=1 // pred_check
      _
    $region39: #{tpu_custom_call.1} parent=1 // pred_check_branch
      %3107 = sbr.rel (0) target = $region41
    $region40: #{tpu_custom_call.1} parent=1 // pred_region
      %3108 = dma.done [#allocation4], 256
    $region41: #{tpu_custom_call.1} parent=1 // pred_fallthru
      _
    %3109 = vsyncpa [#allocation3], 1
    %3110 = vsyncpa [#allocation6], 1
    %3111 = vsyncpa [#allocation4], 1

</llo_original>
